<compile_context>
chip_gen: v6e
topology: v6e:2x2x1
jax: 0.10.0
libtpu: 0.0.40
codegen_flags: <defaults>
</compile_context>

<pallas_src>
import jax
import jax.numpy as jnp
from jax.experimental import pallas as pl
from jax.experimental.pallas import tpu as pltpu

HIDDEN = 512
N_LAYERS = 4
EPS = 1e-5


def _domain_classifier_kernel(h_ref, w_ref, bn_ref, head_ref, o_ref):
    """Single-step kernel: whole MLP stack fused, layers unrolled in-kernel.

    h_ref   : (B, 512) f32          input activations
    w_ref   : (4, 512, 512) bf16    all 4 hidden-layer weights (one VMEM block)
    bn_ref  : (4, 2, 512) f32       per-layer [gamma; beta]
    head_ref: (2, 512) f32          row 0 = w5, row 1[0] = b5
    o_ref   : (B, 1) f32            final logits
    """
    b = h_ref.shape[0]
    inv_b = 1.0 / b

    # Activation carried in registers as bf16 (MXU input dtype).
    x = h_ref[...].astype(jnp.bfloat16)

    for i in range(N_LAYERS):  # fully unrolled; static ref slices
        # Linear on the MXU: bf16 inputs, f32 accumulation.  The PyTorch Linear
        # bias is omitted: train-mode BN mean subtraction cancels it exactly.
        y = jnp.dot(x, w_ref[i], preferred_element_type=jnp.float32)  # (B, 512)

        # BatchNorm1d (training mode), one-pass batch statistics in f32.
        s1 = jnp.sum(y, axis=0, keepdims=True)
        s2 = jnp.sum(y * y, axis=0, keepdims=True)
        mean = s1 * inv_b
        var = s2 * inv_b - mean * mean
        gamma = bn_ref[i, 0:1, :]                 # (1, 512)
        beta = bn_ref[i, 1:2, :]                  # (1, 512)
        y = (y - mean) * jax.lax.rsqrt(var + EPS) * gamma + beta

        # ReLU, carry to next layer as bf16.
        x = jnp.maximum(y, 0.0).astype(jnp.bfloat16)

    # Final Linear(512, 1): VPU multiply + lane-sum (avoids a lane-sparse N=1
    # MXU matmul on the kernel tail).
    head = head_ref[...]                          # (2, 512)
    w5 = head[0:1, :]                             # (1, 512)
    b5 = head[1:2, 0:1]                           # (1, 1)
    out = jnp.sum(x.astype(jnp.float32) * w5, axis=-1, keepdims=True) + b5
    o_ref[...] = out.astype(o_ref.dtype)


def domain_classifier(h, params):
    """h: (B, 512) f32. params: dict with packed weights (see init_params)."""
    B = h.shape[0]
    assert B > 1, "train-mode BatchNorm needs batch size > 1"
    w_stack = params["w_stack"]    # (4, 512, 512) bf16
    bn_stack = params["bn_stack"]  # (4, 2, 512) f32
    head = params["head"]          # (2, 512) f32

    return pl.pallas_call(
        _domain_classifier_kernel,
        out_shape=jax.ShapeDtypeStruct((B, 1), jnp.float32),
        grid_spec=pltpu.PrefetchScalarGridSpec(
            num_scalar_prefetch=0,
            grid=(1,),  # single step: one 2 MiB weight DMA, no per-layer grid overhead
            in_specs=[
                pl.BlockSpec((B, HIDDEN), lambda k: (0, 0)),                      # h
                pl.BlockSpec((N_LAYERS, HIDDEN, HIDDEN), lambda k: (0, 0, 0)),     # all W
                pl.BlockSpec((N_LAYERS, 2, HIDDEN), lambda k: (0, 0, 0)),          # all BN
                pl.BlockSpec((2, HIDDEN), lambda k: (0, 0)),                       # w5/b5
            ],
            out_specs=pl.BlockSpec((B, 1), lambda k: (0, 0)),
        ),
        compiler_params=pltpu.CompilerParams(
            dimension_semantics=("arbitrary",),
            vmem_limit_bytes=32 * 1024 * 1024,  # actual footprint ~3 MiB; safe on v5e/v6e/v7x
        ),
    )(h, w_stack, bn_stack, head)


def init_params(key):
    """Deterministic synthetic parameters (shapes match the PyTorch module)."""
    keys = jax.random.split(key, 16)
    scale = 1.0 / jnp.sqrt(jnp.float32(HIDDEN))
    w_f32, b_f32, g_f32, be_f32 = [], [], [], []
    for i in range(N_LAYERS):
        w_f32.append(jax.random.normal(keys[3 * i], (HIDDEN, HIDDEN), jnp.float32) * scale)
        b_f32.append(jax.random.normal(keys[3 * i + 1], (HIDDEN,), jnp.float32) * scale)
        gb = jax.random.normal(keys[3 * i + 2], (2, HIDDEN), jnp.float32) * 0.1
        g_f32.append(1.0 + gb[0])   # gamma ~ 1
        be_f32.append(gb[1])        # beta  ~ 0
    w5 = jax.random.normal(keys[12], (HIDDEN,), jnp.float32) * scale
    b5 = jax.random.normal(keys[13], (), jnp.float32) * scale

    head = jnp.zeros((2, HIDDEN), jnp.float32)
    head = head.at[0, :].set(w5).at[1, 0].set(b5)

    params = {
        # packed tensors consumed by the kernel
        "w_stack": jnp.stack(w_f32).astype(jnp.bfloat16),                              # (4,512,512) bf16
        "bn_stack": jnp.stack([jnp.stack([g, be]) for g, be in zip(g_f32, be_f32)]),   # (4,2,512) f32
        "head": head,                                                                  # (2,512) f32
        # f32 originals kept only for the references below
        "w_f32": w_f32, "b_f32": b_f32, "g_f32": g_f32, "be_f32": be_f32,
        "w5_f32": w5, "b5_f32": b5,
    }
    return params


def reference_matched(h, p):
    """Plain-JAX reference mirroring the kernel numerics (bf16 matmul inputs,
    f32 BN). Linear biases b1..b4 are included to demonstrate that the BN
    mean subtraction cancels them exactly."""
    x = h
    for i in range(N_LAYERS):
        y = jnp.dot(x.astype(jnp.bfloat16), p["w_stack"][i],
                    preferred_element_type=jnp.float32) + p["b_f32"][i]
        mean = jnp.mean(y, axis=0, keepdims=True)
        var = jnp.mean((y - mean) ** 2, axis=0, keepdims=True)
        y = (y - mean) * jax.lax.rsqrt(var + EPS) * p["g_f32"][i] + p["be_f32"][i]
        x = jnp.maximum(y, 0.0)
    return jnp.sum(x * p["w5_f32"][None, :], axis=-1, keepdims=True) + p["b5_f32"]


def reference_f32(h, p):
    """Faithful f32 rendition of the original PyTorch module (training-mode BN)."""
    x = h
    for i in range(N_LAYERS):
        y = x @ p["w_f32"][i] + p["b_f32"][i]
        mean = jnp.mean(y, axis=0, keepdims=True)
        var = jnp.mean((y - mean) ** 2, axis=0, keepdims=True)
        y = (y - mean) / jnp.sqrt(var + EPS) * p["g_f32"][i] + p["be_f32"][i]
        x = jnp.maximum(y, 0.0)
    return x @ p["w5_f32"][:, None] + p["b5_f32"]


if __name__ == "__main__":
    key = jax.random.PRNGKey(0)
    k_param, k_x = jax.random.split(key)
    params = init_params(k_param)

    B = 8  # small batch (>1 required for batch statistics)
    h = jax.random.normal(k_x, (B, HIDDEN), jnp.float32)

    out = jax.block_until_ready(domain_classifier(h, params))
    assert out.shape == (B, 1) and out.dtype == jnp.float32

    ref_m = reference_matched(h, params)   # same numerics as the kernel
    ref_f = reference_f32(h, params)       # original f32 module semantics

    assert jnp.allclose(out, ref_m, atol=2e-3, rtol=2e-3), (
        f"mismatch vs matched reference: max|diff|={jnp.max(jnp.abs(out - ref_m))}")
    assert jnp.allclose(out, ref_f, atol=1e-1, rtol=1e-1), (
        f"mismatch vs f32 reference: max|diff|={jnp.max(jnp.abs(out - ref_f))}")

    print("KERNEL_OK")
</pallas_src>

<mosaic_0001>
module attributes {stable_mosaic.version = 11 : i64} {
  func.func @_domain_classifier_kernel(%arg0: i32, %arg1: memref<8x512xf32, #tpu.memory_space<vmem>>, %arg2: memref<4x512x512xbf16, #tpu.memory_space<vmem>>, %arg3: memref<4x2x512xf32, #tpu.memory_space<vmem>>, %arg4: memref<2x512xf32, #tpu.memory_space<vmem>>, %arg5: memref<8x1xf32, #tpu.memory_space<vmem>>) attributes {dimension_semantics = [#tpu.dimension_semantics<arbitrary>], iteration_bounds = array<i64: 1>, scalar_prefetch = 0 : i64, scratch_operands = 0 : i64, tpu.core_type = #tpu.core_type<tc>, window_params = [{pipeline_mode = #tpu.pipeline_mode<synchronous>, transform_indices = @transform_0, window_bounds = array<i64: 8, 512>}, {pipeline_mode = #tpu.pipeline_mode<synchronous>, transform_indices = @transform_1, window_bounds = array<i64: 4, 512, 512>}, {pipeline_mode = #tpu.pipeline_mode<synchronous>, transform_indices = @transform_2, window_bounds = array<i64: 4, 2, 512>}, {pipeline_mode = #tpu.pipeline_mode<synchronous>, transform_indices = @transform_3, window_bounds = array<i64: 2, 512>}, {pipeline_mode = #tpu.pipeline_mode<synchronous>, transform_indices = @transform_4, window_bounds = array<i64: 8, 1>}]} {
    %c0 = arith.constant 0 : index
    %c0_0 = arith.constant 0 : index
    %0 = vector.load %arg1[%c0, %c0_0] : memref<8x512xf32, #tpu.memory_space<vmem>>, vector<8x512xf32>
    %1 = arith.truncf %0 : vector<8x512xf32> to vector<8x512xbf16>
    %c0_1 = arith.constant 0 : index
    %c0_2 = arith.constant 0 : index
    %c0_3 = arith.constant 0 : index
    %2 = vector.load %arg2[%c0_1, %c0_2, %c0_3] : memref<4x512x512xbf16, #tpu.memory_space<vmem>>, vector<1x512x512xbf16>
    %3 = vector.shape_cast %2 : vector<1x512x512xbf16> to vector<512x512xbf16>
    %cst = arith.constant dense<0.000000e+00> : vector<8x512xf32>
    %4 = tpu.matmul %1, %3, %cst {dimension_numbers = #tpu.dot_dimension_numbers<[1], [0], [0], [1], [0, 0, 1, 1], [], []>} : vector<8x512xbf16>, vector<512x512xbf16>, vector<8x512xf32> -> vector<8x512xf32>
    %cst_4 = arith.constant dense<0.000000e+00> : vector<512xf32>
    %5 = vector.multi_reduction <add>, %4, %cst_4 [0] : vector<8x512xf32> to vector<512xf32>
    %6 = vector.shape_cast %5 : vector<512xf32> to vector<1x512xf32>
    %7 = arith.mulf %4, %4 : vector<8x512xf32>
    %cst_5 = arith.constant dense<0.000000e+00> : vector<512xf32>
    %8 = vector.multi_reduction <add>, %7, %cst_5 [0] : vector<8x512xf32> to vector<512xf32>
    %9 = vector.shape_cast %8 : vector<512xf32> to vector<1x512xf32>
    %cst_6 = arith.constant 1.250000e-01 : f32
    %10 = vector.broadcast %cst_6 : f32 to vector<1x512xf32>
    %11 = arith.mulf %6, %10 : vector<1x512xf32>
    %cst_7 = arith.constant 1.250000e-01 : f32
    %12 = vector.broadcast %cst_7 : f32 to vector<1x512xf32>
    %13 = arith.mulf %9, %12 : vector<1x512xf32>
    %14 = arith.mulf %11, %11 : vector<1x512xf32>
    %15 = arith.subf %13, %14 : vector<1x512xf32>
    %c0_8 = arith.constant 0 : index
    %c0_9 = arith.constant 0 : index
    %c0_10 = arith.constant 0 : index
    %16 = vector.load %arg3[%c0_8, %c0_9, %c0_10] : memref<4x2x512xf32, #tpu.memory_space<vmem>>, vector<1x1x512xf32>
    %17 = vector.shape_cast %16 : vector<1x1x512xf32> to vector<1x512xf32>
    %c0_11 = arith.constant 0 : index
    %c1 = arith.constant 1 : index
    %c0_12 = arith.constant 0 : index
    %18 = vector.load %arg3[%c0_11, %c1, %c0_12] : memref<4x2x512xf32, #tpu.memory_space<vmem>>, vector<1x1x512xf32>
    %19 = vector.shape_cast %18 : vector<1x1x512xf32> to vector<1x512xf32>
    %20 = vector.broadcast %11 : vector<1x512xf32> to vector<8x512xf32>
    %21 = arith.subf %4, %20 : vector<8x512xf32>
    %cst_13 = arith.constant 9.99999974E-6 : f32
    %22 = vector.broadcast %cst_13 : f32 to vector<1x512xf32>
    %23 = arith.addf %15, %22 : vector<1x512xf32>
    %24 = math.rsqrt %23 : vector<1x512xf32>
    %25 = vector.broadcast %24 : vector<1x512xf32> to vector<8x512xf32>
    %26 = arith.mulf %21, %25 : vector<8x512xf32>
    %27 = vector.broadcast %17 : vector<1x512xf32> to vector<8x512xf32>
    %28 = arith.mulf %26, %27 : vector<8x512xf32>
    %29 = vector.broadcast %19 : vector<1x512xf32> to vector<8x512xf32>
    %30 = arith.addf %28, %29 : vector<8x512xf32>
    %cst_14 = arith.constant 0.000000e+00 : f32
    %31 = vector.broadcast %cst_14 : f32 to vector<8x512xf32>
    %32 = arith.maximumf %30, %31 : vector<8x512xf32>
    %33 = arith.truncf %32 : vector<8x512xf32> to vector<8x512xbf16>
    %c1_15 = arith.constant 1 : index
    %c0_16 = arith.constant 0 : index
    %c0_17 = arith.constant 0 : index
    %34 = vector.load %arg2[%c1_15, %c0_16, %c0_17] : memref<4x512x512xbf16, #tpu.memory_space<vmem>>, vector<1x512x512xbf16>
    %35 = vector.shape_cast %34 : vector<1x512x512xbf16> to vector<512x512xbf16>
    %cst_18 = arith.constant dense<0.000000e+00> : vector<8x512xf32>
    %36 = tpu.matmul %33, %35, %cst_18 {dimension_numbers = #tpu.dot_dimension_numbers<[1], [0], [0], [1], [0, 0, 1, 1], [], []>} : vector<8x512xbf16>, vector<512x512xbf16>, vector<8x512xf32> -> vector<8x512xf32>
    %cst_19 = arith.constant dense<0.000000e+00> : vector<512xf32>
    %37 = vector.multi_reduction <add>, %36, %cst_19 [0] : vector<8x512xf32> to vector<512xf32>
    %38 = vector.shape_cast %37 : vector<512xf32> to vector<1x512xf32>
    %39 = arith.mulf %36, %36 : vector<8x512xf32>
    %cst_20 = arith.constant dense<0.000000e+00> : vector<512xf32>
    %40 = vector.multi_reduction <add>, %39, %cst_20 [0] : vector<8x512xf32> to vector<512xf32>
    %41 = vector.shape_cast %40 : vector<512xf32> to vector<1x512xf32>
    %cst_21 = arith.constant 1.250000e-01 : f32
    %42 = vector.broadcast %cst_21 : f32 to vector<1x512xf32>
    %43 = arith.mulf %38, %42 : vector<1x512xf32>
    %cst_22 = arith.constant 1.250000e-01 : f32
    %44 = vector.broadcast %cst_22 : f32 to vector<1x512xf32>
    %45 = arith.mulf %41, %44 : vector<1x512xf32>
    %46 = arith.mulf %43, %43 : vector<1x512xf32>
    %47 = arith.subf %45, %46 : vector<1x512xf32>
    %c1_23 = arith.constant 1 : index
    %c0_24 = arith.constant 0 : index
    %c0_25 = arith.constant 0 : index
    %48 = vector.load %arg3[%c1_23, %c0_24, %c0_25] : memref<4x2x512xf32, #tpu.memory_space<vmem>>, vector<1x1x512xf32>
    %49 = vector.shape_cast %48 : vector<1x1x512xf32> to vector<1x512xf32>
    %c1_26 = arith.constant 1 : index
    %c1_27 = arith.constant 1 : index
    %c0_28 = arith.constant 0 : index
    %50 = vector.load %arg3[%c1_26, %c1_27, %c0_28] : memref<4x2x512xf32, #tpu.memory_space<vmem>>, vector<1x1x512xf32>
    %51 = vector.shape_cast %50 : vector<1x1x512xf32> to vector<1x512xf32>
    %52 = vector.broadcast %43 : vector<1x512xf32> to vector<8x512xf32>
    %53 = arith.subf %36, %52 : vector<8x512xf32>
    %cst_29 = arith.constant 9.99999974E-6 : f32
    %54 = vector.broadcast %cst_29 : f32 to vector<1x512xf32>
    %55 = arith.addf %47, %54 : vector<1x512xf32>
    %56 = math.rsqrt %55 : vector<1x512xf32>
    %57 = vector.broadcast %56 : vector<1x512xf32> to vector<8x512xf32>
    %58 = arith.mulf %53, %57 : vector<8x512xf32>
    %59 = vector.broadcast %49 : vector<1x512xf32> to vector<8x512xf32>
    %60 = arith.mulf %58, %59 : vector<8x512xf32>
    %61 = vector.broadcast %51 : vector<1x512xf32> to vector<8x512xf32>
    %62 = arith.addf %60, %61 : vector<8x512xf32>
    %cst_30 = arith.constant 0.000000e+00 : f32
    %63 = vector.broadcast %cst_30 : f32 to vector<8x512xf32>
    %64 = arith.maximumf %62, %63 : vector<8x512xf32>
    %65 = arith.truncf %64 : vector<8x512xf32> to vector<8x512xbf16>
    %c2 = arith.constant 2 : index
    %c0_31 = arith.constant 0 : index
    %c0_32 = arith.constant 0 : index
    %66 = vector.load %arg2[%c2, %c0_31, %c0_32] : memref<4x512x512xbf16, #tpu.memory_space<vmem>>, vector<1x512x512xbf16>
    %67 = vector.shape_cast %66 : vector<1x512x512xbf16> to vector<512x512xbf16>
    %cst_33 = arith.constant dense<0.000000e+00> : vector<8x512xf32>
    %68 = tpu.matmul %65, %67, %cst_33 {dimension_numbers = #tpu.dot_dimension_numbers<[1], [0], [0], [1], [0, 0, 1, 1], [], []>} : vector<8x512xbf16>, vector<512x512xbf16>, vector<8x512xf32> -> vector<8x512xf32>
    %cst_34 = arith.constant dense<0.000000e+00> : vector<512xf32>
    %69 = vector.multi_reduction <add>, %68, %cst_34 [0] : vector<8x512xf32> to vector<512xf32>
    %70 = vector.shape_cast %69 : vector<512xf32> to vector<1x512xf32>
    %71 = arith.mulf %68, %68 : vector<8x512xf32>
    %cst_35 = arith.constant dense<0.000000e+00> : vector<512xf32>
    %72 = vector.multi_reduction <add>, %71, %cst_35 [0] : vector<8x512xf32> to vector<512xf32>
    %73 = vector.shape_cast %72 : vector<512xf32> to vector<1x512xf32>
    %cst_36 = arith.constant 1.250000e-01 : f32
    %74 = vector.broadcast %cst_36 : f32 to vector<1x512xf32>
    %75 = arith.mulf %70, %74 : vector<1x512xf32>
    %cst_37 = arith.constant 1.250000e-01 : f32
    %76 = vector.broadcast %cst_37 : f32 to vector<1x512xf32>
    %77 = arith.mulf %73, %76 : vector<1x512xf32>
    %78 = arith.mulf %75, %75 : vector<1x512xf32>
    %79 = arith.subf %77, %78 : vector<1x512xf32>
    %c2_38 = arith.constant 2 : index
    %c0_39 = arith.constant 0 : index
    %c0_40 = arith.constant 0 : index
    %80 = vector.load %arg3[%c2_38, %c0_39, %c0_40] : memref<4x2x512xf32, #tpu.memory_space<vmem>>, vector<1x1x512xf32>
    %81 = vector.shape_cast %80 : vector<1x1x512xf32> to vector<1x512xf32>
    %c2_41 = arith.constant 2 : index
    %c1_42 = arith.constant 1 : index
    %c0_43 = arith.constant 0 : index
    %82 = vector.load %arg3[%c2_41, %c1_42, %c0_43] : memref<4x2x512xf32, #tpu.memory_space<vmem>>, vector<1x1x512xf32>
    %83 = vector.shape_cast %82 : vector<1x1x512xf32> to vector<1x512xf32>
    %84 = vector.broadcast %75 : vector<1x512xf32> to vector<8x512xf32>
    %85 = arith.subf %68, %84 : vector<8x512xf32>
    %cst_44 = arith.constant 9.99999974E-6 : f32
    %86 = vector.broadcast %cst_44 : f32 to vector<1x512xf32>
    %87 = arith.addf %79, %86 : vector<1x512xf32>
    %88 = math.rsqrt %87 : vector<1x512xf32>
    %89 = vector.broadcast %88 : vector<1x512xf32> to vector<8x512xf32>
    %90 = arith.mulf %85, %89 : vector<8x512xf32>
    %91 = vector.broadcast %81 : vector<1x512xf32> to vector<8x512xf32>
    %92 = arith.mulf %90, %91 : vector<8x512xf32>
    %93 = vector.broadcast %83 : vector<1x512xf32> to vector<8x512xf32>
    %94 = arith.addf %92, %93 : vector<8x512xf32>
    %cst_45 = arith.constant 0.000000e+00 : f32
    %95 = vector.broadcast %cst_45 : f32 to vector<8x512xf32>
    %96 = arith.maximumf %94, %95 : vector<8x512xf32>
    %97 = arith.truncf %96 : vector<8x512xf32> to vector<8x512xbf16>
    %c3 = arith.constant 3 : index
    %c0_46 = arith.constant 0 : index
    %c0_47 = arith.constant 0 : index
    %98 = vector.load %arg2[%c3, %c0_46, %c0_47] : memref<4x512x512xbf16, #tpu.memory_space<vmem>>, vector<1x512x512xbf16>
    %99 = vector.shape_cast %98 : vector<1x512x512xbf16> to vector<512x512xbf16>
    %cst_48 = arith.constant dense<0.000000e+00> : vector<8x512xf32>
    %100 = tpu.matmul %97, %99, %cst_48 {dimension_numbers = #tpu.dot_dimension_numbers<[1], [0], [0], [1], [0, 0, 1, 1], [], []>} : vector<8x512xbf16>, vector<512x512xbf16>, vector<8x512xf32> -> vector<8x512xf32>
    %cst_49 = arith.constant dense<0.000000e+00> : vector<512xf32>
    %101 = vector.multi_reduction <add>, %100, %cst_49 [0] : vector<8x512xf32> to vector<512xf32>
    %102 = vector.shape_cast %101 : vector<512xf32> to vector<1x512xf32>
    %103 = arith.mulf %100, %100 : vector<8x512xf32>
    %cst_50 = arith.constant dense<0.000000e+00> : vector<512xf32>
    %104 = vector.multi_reduction <add>, %103, %cst_50 [0] : vector<8x512xf32> to vector<512xf32>
    %105 = vector.shape_cast %104 : vector<512xf32> to vector<1x512xf32>
    %cst_51 = arith.constant 1.250000e-01 : f32
    %106 = vector.broadcast %cst_51 : f32 to vector<1x512xf32>
    %107 = arith.mulf %102, %106 : vector<1x512xf32>
    %cst_52 = arith.constant 1.250000e-01 : f32
    %108 = vector.broadcast %cst_52 : f32 to vector<1x512xf32>
    %109 = arith.mulf %105, %108 : vector<1x512xf32>
    %110 = arith.mulf %107, %107 : vector<1x512xf32>
    %111 = arith.subf %109, %110 : vector<1x512xf32>
    %c3_53 = arith.constant 3 : index
    %c0_54 = arith.constant 0 : index
    %c0_55 = arith.constant 0 : index
    %112 = vector.load %arg3[%c3_53, %c0_54, %c0_55] : memref<4x2x512xf32, #tpu.memory_space<vmem>>, vector<1x1x512xf32>
    %113 = vector.shape_cast %112 : vector<1x1x512xf32> to vector<1x512xf32>
    %c3_56 = arith.constant 3 : index
    %c1_57 = arith.constant 1 : index
    %c0_58 = arith.constant 0 : index
    %114 = vector.load %arg3[%c3_56, %c1_57, %c0_58] : memref<4x2x512xf32, #tpu.memory_space<vmem>>, vector<1x1x512xf32>
    %115 = vector.shape_cast %114 : vector<1x1x512xf32> to vector<1x512xf32>
    %116 = vector.broadcast %107 : vector<1x512xf32> to vector<8x512xf32>
    %117 = arith.subf %100, %116 : vector<8x512xf32>
    %cst_59 = arith.constant 9.99999974E-6 : f32
    %118 = vector.broadcast %cst_59 : f32 to vector<1x512xf32>
    %119 = arith.addf %111, %118 : vector<1x512xf32>
    %120 = math.rsqrt %119 : vector<1x512xf32>
    %121 = vector.broadcast %120 : vector<1x512xf32> to vector<8x512xf32>
    %122 = arith.mulf %117, %121 : vector<8x512xf32>
    %123 = vector.broadcast %113 : vector<1x512xf32> to vector<8x512xf32>
    %124 = arith.mulf %122, %123 : vector<8x512xf32>
    %125 = vector.broadcast %115 : vector<1x512xf32> to vector<8x512xf32>
    %126 = arith.addf %124, %125 : vector<8x512xf32>
    %cst_60 = arith.constant 0.000000e+00 : f32
    %127 = vector.broadcast %cst_60 : f32 to vector<8x512xf32>
    %128 = arith.maximumf %126, %127 : vector<8x512xf32>
    %129 = arith.truncf %128 : vector<8x512xf32> to vector<8x512xbf16>
    %c0_61 = arith.constant 0 : index
    %c0_62 = arith.constant 0 : index
    %130 = vector.load %arg4[%c0_61, %c0_62] : memref<2x512xf32, #tpu.memory_space<vmem>>, vector<2x512xf32>
    %131 = vector.extract_strided_slice %130 {offsets = [0, 0], sizes = [1, 512], strides = [1, 1]} : vector<2x512xf32> to vector<1x512xf32>
    %132 = vector.extract_strided_slice %130 {offsets = [1, 0], sizes = [1, 1], strides = [1, 1]} : vector<2x512xf32> to vector<1x1xf32>
    %133 = arith.extf %129 : vector<8x512xbf16> to vector<8x512xf32>
    %134 = vector.broadcast %131 : vector<1x512xf32> to vector<8x512xf32>
    %135 = arith.mulf %133, %134 : vector<8x512xf32>
    %cst_63 = arith.constant dense<0.000000e+00> : vector<8xf32>
    %136 = vector.multi_reduction <add>, %135, %cst_63 [1] : vector<8x512xf32> to vector<8xf32>
    %137 = vector.shape_cast %136 : vector<8xf32> to vector<8x1xf32>
    %138 = vector.broadcast %132 : vector<1x1xf32> to vector<8x1xf32>
    %139 = arith.addf %137, %138 : vector<8x1xf32>
    %c0_64 = arith.constant 0 : index
    %c0_65 = arith.constant 0 : index
    %140 = vector.load %arg5[%c0_64, %c0_65] : memref<8x1xf32, #tpu.memory_space<vmem>>, vector<8x1xf32>
    tpu.vector_store %arg5[%c0_64, %c0_65], %139 {strides = array<i32>} : memref<8x1xf32, #tpu.memory_space<vmem>>, vector<8x1xf32>,
    return
  }
  func.func @transform_0(%arg0: i32) -> (i32, i32) {
    %c0_i32 = arith.constant 0 : i32
    %c0_i32_0 = arith.constant 0 : i32
    %c0_i32_1 = arith.constant 0 : i32
    return %c0_i32, %c0_i32_0 : i32, i32
  }
  func.func @transform_1(%arg0: i32) -> (i32, i32, i32) {
    %c0_i32 = arith.constant 0 : i32
    %c0_i32_0 = arith.constant 0 : i32
    %c0_i32_1 = arith.constant 0 : i32
    %c0_i32_2 = arith.constant 0 : i32
    return %c0_i32, %c0_i32_0, %c0_i32_1 : i32, i32, i32
  }
  func.func @transform_2(%arg0: i32) -> (i32, i32, i32) {
    %c0_i32 = arith.constant 0 : i32
    %c0_i32_0 = arith.constant 0 : i32
    %c0_i32_1 = arith.constant 0 : i32
    %c0_i32_2 = arith.constant 0 : i32
    return %c0_i32, %c0_i32_0, %c0_i32_1 : i32, i32, i32
  }
  func.func @transform_3(%arg0: i32) -> (i32, i32) {
    %c0_i32 = arith.constant 0 : i32
    %c0_i32_0 = arith.constant 0 : i32
    %c0_i32_1 = arith.constant 0 : i32
    return %c0_i32, %c0_i32_0 : i32, i32
  }
  func.func @transform_4(%arg0: i32) -> (i32, i32) {
    %c0_i32 = arith.constant 0 : i32
    %c0_i32_0 = arith.constant 0 : i32
    %c0_i32_1 = arith.constant 0 : i32
    return %c0_i32, %c0_i32_0 : i32, i32
  }
}

</mosaic_0001>

<llo_original>
// kernel: tpu_custom_call.1
$region0: #{tpu_custom_call.1}
  #allocation0 [shape = 'u32[]', space=smem, size = 0x4, offset = 0x4, fixed_abs, tag = 'smem constant byte address 0x4 - core index']
  #allocation1 [shape = 'u32[144,128]{1,0:T(1,128)}', space=vmem, size = 0x12000, scoped, tag = 'internal scratch']
  %s0 = inlined_call_operand.hbm [shape: f32[8,512], index: 0, kind: input, shape index: {}]
  %s1 = inlined_call_operand.hbm [shape: bf16[4,512,512], index: 1, kind: input, shape index: {}]
  %s2 = inlined_call_operand.hbm [shape: f32[4,2,512], index: 2, kind: input, shape index: {}]
  %s3 = inlined_call_operand.hbm [shape: f32[2,512], index: 3, kind: input, shape index: {}]
  %s4 = inlined_call_operand.vmem [shape: f32[8,1], index: 4, kind: output, shape index: {}]
  %s5 = sld [smem:[#allocation0]]
  $region42: #{tpu_custom_call.1} parent=0
    _
  %s7 = ssub.s32 1, %s5
  %s8 = scalar_select 0, %s7, %s5
  $region1: #{tpu_custom_call.1} parent=0
    #allocation2 [shape = 'u8[16384]{0}', space=vmem, size = 0x4000, scoped, tag = 'input window, operand 0, single buffered']
    #allocation3 [shape = 's32[1]{0}', space=sflag, size = 0x4, scoped, tag = 'scoped memory for tpu_custom_call.1']
    #allocation4 [shape = 'u8[2097152]{0}', space=vmem, size = 0x200000, scoped, tag = 'input window, operand 1, single buffered']
    #allocation5 [shape = 's32[1]{0}', space=sflag, size = 0x4, scoped, tag = 'scoped memory for tpu_custom_call.1']
    #allocation6 [shape = 'u8[16384]{0}', space=vmem, size = 0x4000, scoped, tag = 'input window, operand 2, single buffered']
    #allocation7 [shape = 'u8[4096]{0}', space=vmem, size = 0x1000, scoped, tag = 'input window, operand 3, single buffered']
    #allocation8 [shape = 's32[1]{0}', space=sflag, size = 0x4, scoped, tag = 'scoped memory for tpu_custom_call.1']
    %9 = vsyncpa [#allocation3], 0
    %10 = vsyncpa [#allocation5], 0
    %11 = vsyncpa [#allocation8], 0
    // Predicated region
    $region2: #{tpu_custom_call.1} parent=1 // pred_check
      _
    $region3: #{tpu_custom_call.1} parent=1 // pred_check_branch
      %13 = sbr.rel (0) target = $region5
    $region4: #{tpu_custom_call.1} parent=1 // pred_region
      %s15 = ssub.s32 512, 512
      %16 = vsyncadd [#allocation3], %s15
      %s18 = sshll.u32 [#allocation2], 4
      %s19 = int_to_ptr.vmem [resolvable:$true] %s18
      %21 = dma.hbm_to_vmem [thread:$0]  %s0, 512, %s19, [#allocation3]
    $region5: #{tpu_custom_call.1} parent=1 // pred_fallthru
      _
    // Predicated region
    $region6: #{tpu_custom_call.1} parent=1 // pred_check
      _
    $region7: #{tpu_custom_call.1} parent=1 // pred_check_branch
      %23 = sbr.rel (0) target = $region9
    $region8: #{tpu_custom_call.1} parent=1 // pred_region
      %s25 = ssub.s32 65536, 65536
      %26 = vsyncadd [#allocation5], %s25
      %s27 = sshll.u32 [#allocation4], 4
      %s28 = int_to_ptr.vmem [resolvable:$true] %s27
      %33 = dma.hbm_to_vmem [thread:$0]  %s1, 65536, %s28, [#allocation5], 256, 256, 16
    $region9: #{tpu_custom_call.1} parent=1 // pred_fallthru
      _
    // Predicated region
    $region10: #{tpu_custom_call.1} parent=1 // pred_check
      _
    $region11: #{tpu_custom_call.1} parent=1 // pred_check_branch
      %35 = sbr.rel (0) target = $region13
    $region12: #{tpu_custom_call.1} parent=1 // pred_region
      %s37 = ssub.s32 512, 512
      %38 = vsyncadd [#allocation5], %s37
      %s39 = sshll.u32 [#allocation6], 4
      %s40 = int_to_ptr.vmem [resolvable:$true] %s39
      %45 = dma.hbm_to_vmem [thread:$0]  %s2, 512, %s40, [#allocation5], 128, 128, 8
    $region13: #{tpu_custom_call.1} parent=1 // pred_fallthru
      _
    // Predicated region
    $region14: #{tpu_custom_call.1} parent=1 // pred_check
      _
    $region15: #{tpu_custom_call.1} parent=1 // pred_check_branch
      %47 = sbr.rel (0) target = $region17
    $region16: #{tpu_custom_call.1} parent=1 // pred_region
      %s49 = ssub.s32 128, 128
      %50 = vsyncadd [#allocation8], %s49
      %s52 = sshll.u32 [#allocation7], 4
      %s53 = int_to_ptr.vmem [resolvable:$true] %s52
      %55 = dma.hbm_to_vmem [thread:$0]  %s3, 128, %s53, [#allocation8]
    $region17: #{tpu_custom_call.1} parent=1 // pred_fallthru
      _
    // Predicated region
    $region18: #{tpu_custom_call.1} parent=1 // pred_check
      _
    $region19: #{tpu_custom_call.1} parent=1 // pred_check_branch
      %57 = sbr.rel (0) target = $region21
    $region20: #{tpu_custom_call.1} parent=1 // pred_region
      %58 = dma.done [#allocation3], 512
    $region21: #{tpu_custom_call.1} parent=1 // pred_fallthru
      _
    // Predicated region
    $region22: #{tpu_custom_call.1} parent=1 // pred_check
      _
    $region23: #{tpu_custom_call.1} parent=1 // pred_check_branch
      %60 = sbr.rel (0) target = $region25
    $region24: #{tpu_custom_call.1} parent=1 // pred_region
      %61 = dma.done [#allocation5], 65536
    $region25: #{tpu_custom_call.1} parent=1 // pred_fallthru
      _
    // Predicated region
    $region26: #{tpu_custom_call.1} parent=1 // pred_check
      _
    $region27: #{tpu_custom_call.1} parent=1 // pred_check_branch
      %63 = sbr.rel (0) target = $region29
    $region28: #{tpu_custom_call.1} parent=1 // pred_region
      %64 = dma.done [#allocation5], 512
    $region29: #{tpu_custom_call.1} parent=1 // pred_fallthru
      _
    // Predicated region
    $region30: #{tpu_custom_call.1} parent=1 // pred_check
      _
    $region31: #{tpu_custom_call.1} parent=1 // pred_check_branch
      %66 = sbr.rel (0) target = $region33
    $region32: #{tpu_custom_call.1} parent=1 // pred_region
      %67 = dma.done [#allocation8], 128
    $region33: #{tpu_custom_call.1} parent=1 // pred_fallthru
      _
    %v68 = vld [vmem:[#allocation2] sm:$0xff]
    %v69 = vld [vmem:[#allocation2 + $0x8] sm:$0xff]
    %v70 = vld [vmem:[#allocation2 + $0x10] sm:$0xff]
    %v71 = vld [vmem:[#allocation2 + $0x18] sm:$0xff]
    %v72 = vpack.c.bf16 %v68, %v68
    %v73 = vpack.c.bf16 %v69, %v69
    %v74 = vpack.c.bf16 %v70, %v70
    %v75 = vpack.c.bf16 %v71, %v71
    %v76 = vld [vmem:[#allocation4] sm:$0xff]
    %v77 = vld [vmem:[#allocation4 + $0x8] sm:$0xff]
    %v78 = vld [vmem:[#allocation4 + $0x10] sm:$0xff]
    %v79 = vld [vmem:[#allocation4 + $0x18] sm:$0xff]
    %v80 = vld [vmem:[#allocation4 + $0x20] sm:$0xff]
    %v81 = vld [vmem:[#allocation4 + $0x28] sm:$0xff]
    %v82 = vld [vmem:[#allocation4 + $0x30] sm:$0xff]
    %v83 = vld [vmem:[#allocation4 + $0x38] sm:$0xff]
    %v84 = vld [vmem:[#allocation4 + $0x40] sm:$0xff]
    %v85 = vld [vmem:[#allocation4 + $0x48] sm:$0xff]
    %v86 = vld [vmem:[#allocation4 + $0x50] sm:$0xff]
    %v87 = vld [vmem:[#allocation4 + $0x58] sm:$0xff]
    %v88 = vld [vmem:[#allocation4 + $0x60] sm:$0xff]
    %v89 = vld [vmem:[#allocation4 + $0x68] sm:$0xff]
    %v90 = vld [vmem:[#allocation4 + $0x70] sm:$0xff]
    %v91 = vld [vmem:[#allocation4 + $0x78] sm:$0xff]
    %v92 = vld [vmem:[#allocation4 + $0x80] sm:$0xff]
    %v93 = vld [vmem:[#allocation4 + $0x88] sm:$0xff]
    %v94 = vld [vmem:[#allocation4 + $0x90] sm:$0xff]
    %v95 = vld [vmem:[#allocation4 + $0x98] sm:$0xff]
    %v96 = vld [vmem:[#allocation4 + $0xa0] sm:$0xff]
    %v97 = vld [vmem:[#allocation4 + $0xa8] sm:$0xff]
    %v98 = vld [vmem:[#allocation4 + $0xb0] sm:$0xff]
    %v99 = vld [vmem:[#allocation4 + $0xb8] sm:$0xff]
    %v100 = vld [vmem:[#allocation4 + $0xc0] sm:$0xff]
    %v101 = vld [vmem:[#allocation4 + $0xc8] sm:$0xff]
    %v102 = vld [vmem:[#allocation4 + $0xd0] sm:$0xff]
    %v103 = vld [vmem:[#allocation4 + $0xd8] sm:$0xff]
    %v104 = vld [vmem:[#allocation4 + $0xe0] sm:$0xff]
    %v105 = vld [vmem:[#allocation4 + $0xe8] sm:$0xff]
    %v106 = vld [vmem:[#allocation4 + $0xf0] sm:$0xff]
    %v107 = vld [vmem:[#allocation4 + $0xf8] sm:$0xff]
    %v108 = vld [vmem:[#allocation4 + $0x100] sm:$0xff]
    %v109 = vld [vmem:[#allocation4 + $0x108] sm:$0xff]
    %v110 = vld [vmem:[#allocation4 + $0x110] sm:$0xff]
    %v111 = vld [vmem:[#allocation4 + $0x118] sm:$0xff]
    %v112 = vld [vmem:[#allocation4 + $0x120] sm:$0xff]
    %v113 = vld [vmem:[#allocation4 + $0x128] sm:$0xff]
    %v114 = vld [vmem:[#allocation4 + $0x130] sm:$0xff]
    %v115 = vld [vmem:[#allocation4 + $0x138] sm:$0xff]
    %v116 = vld [vmem:[#allocation4 + $0x140] sm:$0xff]
    %v117 = vld [vmem:[#allocation4 + $0x148] sm:$0xff]
    %v118 = vld [vmem:[#allocation4 + $0x150] sm:$0xff]
    %v119 = vld [vmem:[#allocation4 + $0x158] sm:$0xff]
    %v120 = vld [vmem:[#allocation4 + $0x160] sm:$0xff]
    %v121 = vld [vmem:[#allocation4 + $0x168] sm:$0xff]
    %v122 = vld [vmem:[#allocation4 + $0x170] sm:$0xff]
    %v123 = vld [vmem:[#allocation4 + $0x178] sm:$0xff]
    %v124 = vld [vmem:[#allocation4 + $0x180] sm:$0xff]
    %v125 = vld [vmem:[#allocation4 + $0x188] sm:$0xff]
    %v126 = vld [vmem:[#allocation4 + $0x190] sm:$0xff]
    %v127 = vld [vmem:[#allocation4 + $0x198] sm:$0xff]
    %v128 = vld [vmem:[#allocation4 + $0x1a0] sm:$0xff]
    %v129 = vld [vmem:[#allocation4 + $0x1a8] sm:$0xff]
    %v130 = vld [vmem:[#allocation4 + $0x1b0] sm:$0xff]
    %v131 = vld [vmem:[#allocation4 + $0x1b8] sm:$0xff]
    %v132 = vld [vmem:[#allocation4 + $0x1c0] sm:$0xff]
    %v133 = vld [vmem:[#allocation4 + $0x1c8] sm:$0xff]
    %v134 = vld [vmem:[#allocation4 + $0x1d0] sm:$0xff]
    %v135 = vld [vmem:[#allocation4 + $0x1d8] sm:$0xff]
    %v136 = vld [vmem:[#allocation4 + $0x1e0] sm:$0xff]
    %v137 = vld [vmem:[#allocation4 + $0x1e8] sm:$0xff]
    %v138 = vld [vmem:[#allocation4 + $0x1f0] sm:$0xff]
    %v139 = vld [vmem:[#allocation4 + $0x1f8] sm:$0xff]
    %v140 = vld [vmem:[#allocation4 + $0x200] sm:$0xff]
    %v141 = vld [vmem:[#allocation4 + $0x208] sm:$0xff]
    %v142 = vld [vmem:[#allocation4 + $0x210] sm:$0xff]
    %v143 = vld [vmem:[#allocation4 + $0x218] sm:$0xff]
    %v144 = vld [vmem:[#allocation4 + $0x220] sm:$0xff]
    %v145 = vld [vmem:[#allocation4 + $0x228] sm:$0xff]
    %v146 = vld [vmem:[#allocation4 + $0x230] sm:$0xff]
    %v147 = vld [vmem:[#allocation4 + $0x238] sm:$0xff]
    %v148 = vld [vmem:[#allocation4 + $0x240] sm:$0xff]
    %v149 = vld [vmem:[#allocation4 + $0x248] sm:$0xff]
    %v150 = vld [vmem:[#allocation4 + $0x250] sm:$0xff]
    %v151 = vld [vmem:[#allocation4 + $0x258] sm:$0xff]
    %v152 = vld [vmem:[#allocation4 + $0x260] sm:$0xff]
    %v153 = vld [vmem:[#allocation4 + $0x268] sm:$0xff]
    %v154 = vld [vmem:[#allocation4 + $0x270] sm:$0xff]
    %v155 = vld [vmem:[#allocation4 + $0x278] sm:$0xff]
    %v156 = vld [vmem:[#allocation4 + $0x280] sm:$0xff]
    %v157 = vld [vmem:[#allocation4 + $0x288] sm:$0xff]
    %v158 = vld [vmem:[#allocation4 + $0x290] sm:$0xff]
    %v159 = vld [vmem:[#allocation4 + $0x298] sm:$0xff]
    %v160 = vld [vmem:[#allocation4 + $0x2a0] sm:$0xff]
    %v161 = vld [vmem:[#allocation4 + $0x2a8] sm:$0xff]
    %v162 = vld [vmem:[#allocation4 + $0x2b0] sm:$0xff]
    %v163 = vld [vmem:[#allocation4 + $0x2b8] sm:$0xff]
    %v164 = vld [vmem:[#allocation4 + $0x2c0] sm:$0xff]
    %v165 = vld [vmem:[#allocation4 + $0x2c8] sm:$0xff]
    %v166 = vld [vmem:[#allocation4 + $0x2d0] sm:$0xff]
    %v167 = vld [vmem:[#allocation4 + $0x2d8] sm:$0xff]
    %v168 = vld [vmem:[#allocation4 + $0x2e0] sm:$0xff]
    %v169 = vld [vmem:[#allocation4 + $0x2e8] sm:$0xff]
    %v170 = vld [vmem:[#allocation4 + $0x2f0] sm:$0xff]
    %v171 = vld [vmem:[#allocation4 + $0x2f8] sm:$0xff]
    %v172 = vld [vmem:[#allocation4 + $0x300] sm:$0xff]
    %v173 = vld [vmem:[#allocation4 + $0x308] sm:$0xff]
    %v174 = vld [vmem:[#allocation4 + $0x310] sm:$0xff]
    %v175 = vld [vmem:[#allocation4 + $0x318] sm:$0xff]
    %v176 = vld [vmem:[#allocation4 + $0x320] sm:$0xff]
    %v177 = vld [vmem:[#allocation4 + $0x328] sm:$0xff]
    %v178 = vld [vmem:[#allocation4 + $0x330] sm:$0xff]
    %v179 = vld [vmem:[#allocation4 + $0x338] sm:$0xff]
    %v180 = vld [vmem:[#allocation4 + $0x340] sm:$0xff]
    %v181 = vld [vmem:[#allocation4 + $0x348] sm:$0xff]
    %v182 = vld [vmem:[#allocation4 + $0x350] sm:$0xff]
    %v183 = vld [vmem:[#allocation4 + $0x358] sm:$0xff]
    %v184 = vld [vmem:[#allocation4 + $0x360] sm:$0xff]
    %v185 = vld [vmem:[#allocation4 + $0x368] sm:$0xff]
    %v186 = vld [vmem:[#allocation4 + $0x370] sm:$0xff]
    %v187 = vld [vmem:[#allocation4 + $0x378] sm:$0xff]
    %v188 = vld [vmem:[#allocation4 + $0x380] sm:$0xff]
    %v189 = vld [vmem:[#allocation4 + $0x388] sm:$0xff]
    %v190 = vld [vmem:[#allocation4 + $0x390] sm:$0xff]
    %v191 = vld [vmem:[#allocation4 + $0x398] sm:$0xff]
    %v192 = vld [vmem:[#allocation4 + $0x3a0] sm:$0xff]
    %v193 = vld [vmem:[#allocation4 + $0x3a8] sm:$0xff]
    %v194 = vld [vmem:[#allocation4 + $0x3b0] sm:$0xff]
    %v195 = vld [vmem:[#allocation4 + $0x3b8] sm:$0xff]
    %v196 = vld [vmem:[#allocation4 + $0x3c0] sm:$0xff]
    %v197 = vld [vmem:[#allocation4 + $0x3c8] sm:$0xff]
    %v198 = vld [vmem:[#allocation4 + $0x3d0] sm:$0xff]
    %v199 = vld [vmem:[#allocation4 + $0x3d8] sm:$0xff]
    %v200 = vld [vmem:[#allocation4 + $0x3e0] sm:$0xff]
    %v201 = vld [vmem:[#allocation4 + $0x3e8] sm:$0xff]
    %v202 = vld [vmem:[#allocation4 + $0x3f0] sm:$0xff]
    %v203 = vld [vmem:[#allocation4 + $0x3f8] sm:$0xff]
    %v332 = vunpack.c.l.b16 %v76
    %v333 = vunpack.c.h.b16 %v76
    %v334 = vunpack.c.l.b16 %v77
    %v335 = vunpack.c.h.b16 %v77
    %v336 = vunpack.c.l.b16 %v78
    %v337 = vunpack.c.h.b16 %v78
    %v338 = vunpack.c.l.b16 %v79
    %v339 = vunpack.c.h.b16 %v79
    %v340 = vunpack.c.l.b16 %v80
    %v341 = vunpack.c.h.b16 %v80
    %v342 = vunpack.c.l.b16 %v81
    %v343 = vunpack.c.h.b16 %v81
    %v344 = vunpack.c.l.b16 %v82
    %v345 = vunpack.c.h.b16 %v82
    %v346 = vunpack.c.l.b16 %v83
    %v347 = vunpack.c.h.b16 %v83
    %v348 = vunpack.c.l.b16 %v84
    %v349 = vunpack.c.h.b16 %v84
    %v350 = vunpack.c.l.b16 %v85
    %v351 = vunpack.c.h.b16 %v85
    %v352 = vunpack.c.l.b16 %v86
    %v353 = vunpack.c.h.b16 %v86
    %v354 = vunpack.c.l.b16 %v87
    %v355 = vunpack.c.h.b16 %v87
    %v356 = vunpack.c.l.b16 %v88
    %v357 = vunpack.c.h.b16 %v88
    %v358 = vunpack.c.l.b16 %v89
    %v359 = vunpack.c.h.b16 %v89
    %v360 = vunpack.c.l.b16 %v90
    %v361 = vunpack.c.h.b16 %v90
    %v362 = vunpack.c.l.b16 %v91
    %v363 = vunpack.c.h.b16 %v91
    %v364 = vunpack.c.l.b16 %v92
    %v365 = vunpack.c.h.b16 %v92
    %v366 = vunpack.c.l.b16 %v93
    %v367 = vunpack.c.h.b16 %v93
    %v368 = vunpack.c.l.b16 %v94
    %v369 = vunpack.c.h.b16 %v94
    %v370 = vunpack.c.l.b16 %v95
    %v371 = vunpack.c.h.b16 %v95
    %v372 = vunpack.c.l.b16 %v96
    %v373 = vunpack.c.h.b16 %v96
    %v374 = vunpack.c.l.b16 %v97
    %v375 = vunpack.c.h.b16 %v97
    %v376 = vunpack.c.l.b16 %v98
    %v377 = vunpack.c.h.b16 %v98
    %v378 = vunpack.c.l.b16 %v99
    %v379 = vunpack.c.h.b16 %v99
    %v380 = vunpack.c.l.b16 %v100
    %v381 = vunpack.c.h.b16 %v100
    %v382 = vunpack.c.l.b16 %v101
    %v383 = vunpack.c.h.b16 %v101
    %v384 = vunpack.c.l.b16 %v102
    %v385 = vunpack.c.h.b16 %v102
    %v386 = vunpack.c.l.b16 %v103
    %v387 = vunpack.c.h.b16 %v103
    %v388 = vunpack.c.l.b16 %v104
    %v389 = vunpack.c.h.b16 %v104
    %v390 = vunpack.c.l.b16 %v105
    %v391 = vunpack.c.h.b16 %v105
    %v392 = vunpack.c.l.b16 %v106
    %v393 = vunpack.c.h.b16 %v106
    %v394 = vunpack.c.l.b16 %v107
    %v395 = vunpack.c.h.b16 %v107
    %v396 = vunpack.c.l.b16 %v108
    %v397 = vunpack.c.h.b16 %v108
    %v398 = vunpack.c.l.b16 %v109
    %v399 = vunpack.c.h.b16 %v109
    %v400 = vunpack.c.l.b16 %v110
    %v401 = vunpack.c.h.b16 %v110
    %v402 = vunpack.c.l.b16 %v111
    %v403 = vunpack.c.h.b16 %v111
    %v404 = vunpack.c.l.b16 %v112
    %v405 = vunpack.c.h.b16 %v112
    %v406 = vunpack.c.l.b16 %v113
    %v407 = vunpack.c.h.b16 %v113
    %v408 = vunpack.c.l.b16 %v114
    %v409 = vunpack.c.h.b16 %v114
    %v410 = vunpack.c.l.b16 %v115
    %v411 = vunpack.c.h.b16 %v115
    %v412 = vunpack.c.l.b16 %v116
    %v413 = vunpack.c.h.b16 %v116
    %v414 = vunpack.c.l.b16 %v117
    %v415 = vunpack.c.h.b16 %v117
    %v416 = vunpack.c.l.b16 %v118
    %v417 = vunpack.c.h.b16 %v118
    %v418 = vunpack.c.l.b16 %v119
    %v419 = vunpack.c.h.b16 %v119
    %v420 = vunpack.c.l.b16 %v120
    %v421 = vunpack.c.h.b16 %v120
    %v422 = vunpack.c.l.b16 %v121
    %v423 = vunpack.c.h.b16 %v121
    %v424 = vunpack.c.l.b16 %v122
    %v425 = vunpack.c.h.b16 %v122
    %v426 = vunpack.c.l.b16 %v123
    %v427 = vunpack.c.h.b16 %v123
    %v428 = vunpack.c.l.b16 %v124
    %v429 = vunpack.c.h.b16 %v124
    %v430 = vunpack.c.l.b16 %v125
    %v431 = vunpack.c.h.b16 %v125
    %v432 = vunpack.c.l.b16 %v126
    %v433 = vunpack.c.h.b16 %v126
    %v434 = vunpack.c.l.b16 %v127
    %v435 = vunpack.c.h.b16 %v127
    %v436 = vunpack.c.l.b16 %v128
    %v437 = vunpack.c.h.b16 %v128
    %v438 = vunpack.c.l.b16 %v129
    %v439 = vunpack.c.h.b16 %v129
    %v440 = vunpack.c.l.b16 %v130
    %v441 = vunpack.c.h.b16 %v130
    %v442 = vunpack.c.l.b16 %v131
    %v443 = vunpack.c.h.b16 %v131
    %v444 = vunpack.c.l.b16 %v132
    %v445 = vunpack.c.h.b16 %v132
    %v446 = vunpack.c.l.b16 %v133
    %v447 = vunpack.c.h.b16 %v133
    %v448 = vunpack.c.l.b16 %v134
    %v449 = vunpack.c.h.b16 %v134
    %v450 = vunpack.c.l.b16 %v135
    %v451 = vunpack.c.h.b16 %v135
    %v452 = vunpack.c.l.b16 %v136
    %v453 = vunpack.c.h.b16 %v136
    %v454 = vunpack.c.l.b16 %v137
    %v455 = vunpack.c.h.b16 %v137
    %v456 = vunpack.c.l.b16 %v138
    %v457 = vunpack.c.h.b16 %v138
    %v458 = vunpack.c.l.b16 %v139
    %v459 = vunpack.c.h.b16 %v139
    %v460 = vunpack.c.l.b16 %v140
    %v461 = vunpack.c.h.b16 %v140
    %v462 = vunpack.c.l.b16 %v141
    %v463 = vunpack.c.h.b16 %v141
    %v464 = vunpack.c.l.b16 %v142
    %v465 = vunpack.c.h.b16 %v142
    %v466 = vunpack.c.l.b16 %v143
    %v467 = vunpack.c.h.b16 %v143
    %v468 = vunpack.c.l.b16 %v144
    %v469 = vunpack.c.h.b16 %v144
    %v470 = vunpack.c.l.b16 %v145
    %v471 = vunpack.c.h.b16 %v145
    %v472 = vunpack.c.l.b16 %v146
    %v473 = vunpack.c.h.b16 %v146
    %v474 = vunpack.c.l.b16 %v147
    %v475 = vunpack.c.h.b16 %v147
    %v476 = vunpack.c.l.b16 %v148
    %v477 = vunpack.c.h.b16 %v148
    %v478 = vunpack.c.l.b16 %v149
    %v479 = vunpack.c.h.b16 %v149
    %v480 = vunpack.c.l.b16 %v150
    %v481 = vunpack.c.h.b16 %v150
    %v482 = vunpack.c.l.b16 %v151
    %v483 = vunpack.c.h.b16 %v151
    %v484 = vunpack.c.l.b16 %v152
    %v485 = vunpack.c.h.b16 %v152
    %v486 = vunpack.c.l.b16 %v153
    %v487 = vunpack.c.h.b16 %v153
    %v488 = vunpack.c.l.b16 %v154
    %v489 = vunpack.c.h.b16 %v154
    %v490 = vunpack.c.l.b16 %v155
    %v491 = vunpack.c.h.b16 %v155
    %v492 = vunpack.c.l.b16 %v156
    %v493 = vunpack.c.h.b16 %v156
    %v494 = vunpack.c.l.b16 %v157
    %v495 = vunpack.c.h.b16 %v157
    %v496 = vunpack.c.l.b16 %v158
    %v497 = vunpack.c.h.b16 %v158
    %v498 = vunpack.c.l.b16 %v159
    %v499 = vunpack.c.h.b16 %v159
    %v500 = vunpack.c.l.b16 %v160
    %v501 = vunpack.c.h.b16 %v160
    %v502 = vunpack.c.l.b16 %v161
    %v503 = vunpack.c.h.b16 %v161
    %v504 = vunpack.c.l.b16 %v162
    %v505 = vunpack.c.h.b16 %v162
    %v506 = vunpack.c.l.b16 %v163
    %v507 = vunpack.c.h.b16 %v163
    %v508 = vunpack.c.l.b16 %v164
    %v509 = vunpack.c.h.b16 %v164
    %v510 = vunpack.c.l.b16 %v165
    %v511 = vunpack.c.h.b16 %v165
    %v512 = vunpack.c.l.b16 %v166
    %v513 = vunpack.c.h.b16 %v166
    %v514 = vunpack.c.l.b16 %v167
    %v515 = vunpack.c.h.b16 %v167
    %v516 = vunpack.c.l.b16 %v168
    %v517 = vunpack.c.h.b16 %v168
    %v518 = vunpack.c.l.b16 %v169
    %v519 = vunpack.c.h.b16 %v169
    %v520 = vunpack.c.l.b16 %v170
    %v521 = vunpack.c.h.b16 %v170
    %v522 = vunpack.c.l.b16 %v171
    %v523 = vunpack.c.h.b16 %v171
    %v524 = vunpack.c.l.b16 %v172
    %v525 = vunpack.c.h.b16 %v172
    %v526 = vunpack.c.l.b16 %v173
    %v527 = vunpack.c.h.b16 %v173
    %v528 = vunpack.c.l.b16 %v174
    %v529 = vunpack.c.h.b16 %v174
    %v530 = vunpack.c.l.b16 %v175
    %v531 = vunpack.c.h.b16 %v175
    %v532 = vunpack.c.l.b16 %v176
    %v533 = vunpack.c.h.b16 %v176
    %v534 = vunpack.c.l.b16 %v177
    %v535 = vunpack.c.h.b16 %v177
    %v536 = vunpack.c.l.b16 %v178
    %v537 = vunpack.c.h.b16 %v178
    %v538 = vunpack.c.l.b16 %v179
    %v539 = vunpack.c.h.b16 %v179
    %v540 = vunpack.c.l.b16 %v180
    %v541 = vunpack.c.h.b16 %v180
    %v542 = vunpack.c.l.b16 %v181
    %v543 = vunpack.c.h.b16 %v181
    %v544 = vunpack.c.l.b16 %v182
    %v545 = vunpack.c.h.b16 %v182
    %v546 = vunpack.c.l.b16 %v183
    %v547 = vunpack.c.h.b16 %v183
    %v548 = vunpack.c.l.b16 %v184
    %v549 = vunpack.c.h.b16 %v184
    %v550 = vunpack.c.l.b16 %v185
    %v551 = vunpack.c.h.b16 %v185
    %v552 = vunpack.c.l.b16 %v186
    %v553 = vunpack.c.h.b16 %v186
    %v554 = vunpack.c.l.b16 %v187
    %v555 = vunpack.c.h.b16 %v187
    %v556 = vunpack.c.l.b16 %v188
    %v557 = vunpack.c.h.b16 %v188
    %v558 = vunpack.c.l.b16 %v189
    %v559 = vunpack.c.h.b16 %v189
    %v560 = vunpack.c.l.b16 %v190
    %v561 = vunpack.c.h.b16 %v190
    %v562 = vunpack.c.l.b16 %v191
    %v563 = vunpack.c.h.b16 %v191
    %v564 = vunpack.c.l.b16 %v192
    %v565 = vunpack.c.h.b16 %v192
    %v566 = vunpack.c.l.b16 %v193
    %v567 = vunpack.c.h.b16 %v193
    %v568 = vunpack.c.l.b16 %v194
    %v569 = vunpack.c.h.b16 %v194
    %v570 = vunpack.c.l.b16 %v195
    %v571 = vunpack.c.h.b16 %v195
    %v572 = vunpack.c.l.b16 %v196
    %v573 = vunpack.c.h.b16 %v196
    %v574 = vunpack.c.l.b16 %v197
    %v575 = vunpack.c.h.b16 %v197
    %v576 = vunpack.c.l.b16 %v198
    %v577 = vunpack.c.h.b16 %v198
    %v578 = vunpack.c.l.b16 %v199
    %v579 = vunpack.c.h.b16 %v199
    %v580 = vunpack.c.l.b16 %v200
    %v581 = vunpack.c.h.b16 %v200
    %v582 = vunpack.c.l.b16 %v201
    %v583 = vunpack.c.h.b16 %v201
    %v584 = vunpack.c.l.b16 %v202
    %v585 = vunpack.c.h.b16 %v202
    %v586 = vunpack.c.l.b16 %v203
    %v587 = vunpack.c.h.b16 %v203
    %v588 = vpack.c.b16 %v336, %v332
    %v589 = vpack.c.b16 %v337, %v333
    %v590 = vpack.c.b16 %v338, %v334
    %v591 = vpack.c.b16 %v339, %v335
    %v592 = vpack.c.b16 %v344, %v340
    %v593 = vpack.c.b16 %v345, %v341
    %v594 = vpack.c.b16 %v346, %v342
    %v595 = vpack.c.b16 %v347, %v343
    %v596 = vpack.c.b16 %v352, %v348
    %v597 = vpack.c.b16 %v353, %v349
    %v598 = vpack.c.b16 %v354, %v350
    %v599 = vpack.c.b16 %v355, %v351
    %v600 = vpack.c.b16 %v360, %v356
    %v601 = vpack.c.b16 %v361, %v357
    %v602 = vpack.c.b16 %v362, %v358
    %v603 = vpack.c.b16 %v363, %v359
    %v604 = vpack.c.b16 %v368, %v364
    %v605 = vpack.c.b16 %v369, %v365
    %v606 = vpack.c.b16 %v370, %v366
    %v607 = vpack.c.b16 %v371, %v367
    %v608 = vpack.c.b16 %v376, %v372
    %v609 = vpack.c.b16 %v377, %v373
    %v610 = vpack.c.b16 %v378, %v374
    %v611 = vpack.c.b16 %v379, %v375
    %v612 = vpack.c.b16 %v384, %v380
    %v613 = vpack.c.b16 %v385, %v381
    %v614 = vpack.c.b16 %v386, %v382
    %v615 = vpack.c.b16 %v387, %v383
    %v616 = vpack.c.b16 %v392, %v388
    %v617 = vpack.c.b16 %v393, %v389
    %v618 = vpack.c.b16 %v394, %v390
    %v619 = vpack.c.b16 %v395, %v391
    %v620 = vpack.c.b16 %v400, %v396
    %v621 = vpack.c.b16 %v401, %v397
    %v622 = vpack.c.b16 %v402, %v398
    %v623 = vpack.c.b16 %v403, %v399
    %v624 = vpack.c.b16 %v408, %v404
    %v625 = vpack.c.b16 %v409, %v405
    %v626 = vpack.c.b16 %v410, %v406
    %v627 = vpack.c.b16 %v411, %v407
    %v628 = vpack.c.b16 %v416, %v412
    %v629 = vpack.c.b16 %v417, %v413
    %v630 = vpack.c.b16 %v418, %v414
    %v631 = vpack.c.b16 %v419, %v415
    %v632 = vpack.c.b16 %v424, %v420
    %v633 = vpack.c.b16 %v425, %v421
    %v634 = vpack.c.b16 %v426, %v422
    %v635 = vpack.c.b16 %v427, %v423
    %v636 = vpack.c.b16 %v432, %v428
    %v637 = vpack.c.b16 %v433, %v429
    %v638 = vpack.c.b16 %v434, %v430
    %v639 = vpack.c.b16 %v435, %v431
    %v640 = vpack.c.b16 %v440, %v436
    %v641 = vpack.c.b16 %v441, %v437
    %v642 = vpack.c.b16 %v442, %v438
    %v643 = vpack.c.b16 %v443, %v439
    %v644 = vpack.c.b16 %v448, %v444
    %v645 = vpack.c.b16 %v449, %v445
    %v646 = vpack.c.b16 %v450, %v446
    %v647 = vpack.c.b16 %v451, %v447
    %v648 = vpack.c.b16 %v456, %v452
    %v649 = vpack.c.b16 %v457, %v453
    %v650 = vpack.c.b16 %v458, %v454
    %v651 = vpack.c.b16 %v459, %v455
    %v652 = vpack.c.b16 %v464, %v460
    %v653 = vpack.c.b16 %v465, %v461
    %v654 = vpack.c.b16 %v466, %v462
    %v655 = vpack.c.b16 %v467, %v463
    %v656 = vpack.c.b16 %v472, %v468
    %v657 = vpack.c.b16 %v473, %v469
    %v658 = vpack.c.b16 %v474, %v470
    %v659 = vpack.c.b16 %v475, %v471
    %v660 = vpack.c.b16 %v480, %v476
    %v661 = vpack.c.b16 %v481, %v477
    %v662 = vpack.c.b16 %v482, %v478
    %v663 = vpack.c.b16 %v483, %v479
    %v664 = vpack.c.b16 %v488, %v484
    %v665 = vpack.c.b16 %v489, %v485
    %v666 = vpack.c.b16 %v490, %v486
    %v667 = vpack.c.b16 %v491, %v487
    %v668 = vpack.c.b16 %v496, %v492
    %v669 = vpack.c.b16 %v497, %v493
    %v670 = vpack.c.b16 %v498, %v494
    %v671 = vpack.c.b16 %v499, %v495
    %v672 = vpack.c.b16 %v504, %v500
    %v673 = vpack.c.b16 %v505, %v501
    %v674 = vpack.c.b16 %v506, %v502
    %v675 = vpack.c.b16 %v507, %v503
    %v676 = vpack.c.b16 %v512, %v508
    %v677 = vpack.c.b16 %v513, %v509
    %v678 = vpack.c.b16 %v514, %v510
    %v679 = vpack.c.b16 %v515, %v511
    %v680 = vpack.c.b16 %v520, %v516
    %v681 = vpack.c.b16 %v521, %v517
    %v682 = vpack.c.b16 %v522, %v518
    %v683 = vpack.c.b16 %v523, %v519
    %v684 = vpack.c.b16 %v528, %v524
    %v685 = vpack.c.b16 %v529, %v525
    %v686 = vpack.c.b16 %v530, %v526
    %v687 = vpack.c.b16 %v531, %v527
    %v688 = vpack.c.b16 %v536, %v532
    %v689 = vpack.c.b16 %v537, %v533
    %v690 = vpack.c.b16 %v538, %v534
    %v691 = vpack.c.b16 %v539, %v535
    %v692 = vpack.c.b16 %v544, %v540
    %v693 = vpack.c.b16 %v545, %v541
    %v694 = vpack.c.b16 %v546, %v542
    %v695 = vpack.c.b16 %v547, %v543
    %v696 = vpack.c.b16 %v552, %v548
    %v697 = vpack.c.b16 %v553, %v549
    %v698 = vpack.c.b16 %v554, %v550
    %v699 = vpack.c.b16 %v555, %v551
    %v700 = vpack.c.b16 %v560, %v556
    %v701 = vpack.c.b16 %v561, %v557
    %v702 = vpack.c.b16 %v562, %v558
    %v703 = vpack.c.b16 %v563, %v559
    %v704 = vpack.c.b16 %v568, %v564
    %v705 = vpack.c.b16 %v569, %v565
    %v706 = vpack.c.b16 %v570, %v566
    %v707 = vpack.c.b16 %v571, %v567
    %v708 = vpack.c.b16 %v576, %v572
    %v709 = vpack.c.b16 %v577, %v573
    %v710 = vpack.c.b16 %v578, %v574
    %v711 = vpack.c.b16 %v579, %v575
    %v712 = vpack.c.b16 %v584, %v580
    %v713 = vpack.c.b16 %v585, %v581
    %v714 = vpack.c.b16 %v586, %v582
    %v715 = vpack.c.b16 %v587, %v583
    %844 = vmatprep.subr.bf16.mxu0 %v617
    %845 = vmatpush1.bf16.msra.mxu0 %v616
    %846 = vmatprep.subr.bf16.mxu0 %v613
    %847 = vmatpush1.bf16.msra.mxu0 %v612
    %848 = vmatprep.subr.bf16.mxu0 %v609
    %849 = vmatpush1.bf16.msra.mxu0 %v608
    %850 = vmatprep.subr.bf16.mxu0 %v605
    %851 = vmatpush1.bf16.msra.mxu0 %v604
    %852 = vmatprep.subr.bf16.mxu0 %v601
    %853 = vmatpush1.bf16.msra.mxu0 %v600
    %854 = vmatprep.subr.bf16.mxu0 %v597
    %855 = vmatpush1.bf16.msra.mxu0 %v596
    %856 = vmatprep.subr.bf16.mxu0 %v593
    %857 = vmatpush1.bf16.msra.mxu0 %v592
    %858 = vmatprep.subr.bf16.mxu0 %v589
    %859 = vmatpush1.bf16.msra.mxu0 %v588
    %860 = vmatprep.subr.bf16.mxu0 %v649
    %861 = vmatpush2.bf16.msra.mxu0 %v648
    %862 = vmatprep.subr.bf16.mxu0 %v645
    %863 = vmatpush2.bf16.msra.mxu0 %v644
    %864 = vmatprep.subr.bf16.mxu0 %v641
    %865 = vmatpush2.bf16.msra.mxu0 %v640
    %866 = vmatprep.subr.bf16.mxu0 %v637
    %867 = vmatpush2.bf16.msra.mxu0 %v636
    %868 = vmatprep.subr.bf16.mxu0 %v633
    %869 = vmatpush2.bf16.msra.mxu0 %v632
    %870 = vmatprep.subr.bf16.mxu0 %v629
    %871 = vmatpush2.bf16.msra.mxu0 %v628
    %872 = vmatprep.subr.bf16.mxu0 %v625
    %873 = vmatpush2.bf16.msra.mxu0 %v624
    %874 = vmatprep.subr.bf16.mxu0 %v621
    %875 = vmatpush2.bf16.msra.mxu0 %v620
    %876 = vmatprep.mubr.bf16.mxu0 %v73
    %877 = vmatmul.mubr.bf16.gmra.mxu0 %v72
    %v878 = vpop.f32.mrf.mxu0
    %v879 = vadd.f32 0.0, %v878
    %v880 = vpop.f32.mrf.mxu0
    %v881 = vadd.f32 0.0, %v880
    %v882 = vpop.f32.mrf.mxu0
    %v883 = vpop.f32.mrf.mxu0
    %884 = vdwg.mxu0
    %885 = vmatprep.subr.bf16.mxu0 %v681
    %886 = vmatpush1.bf16.msra.mxu0 %v680
    %887 = vmatprep.subr.bf16.mxu0 %v677
    %888 = vmatpush1.bf16.msra.mxu0 %v676
    %889 = vmatprep.subr.bf16.mxu0 %v673
    %890 = vmatpush1.bf16.msra.mxu0 %v672
    %891 = vmatprep.subr.bf16.mxu0 %v669
    %892 = vmatpush1.bf16.msra.mxu0 %v668
    %893 = vmatprep.subr.bf16.mxu0 %v665
    %894 = vmatpush1.bf16.msra.mxu0 %v664
    %895 = vmatprep.subr.bf16.mxu0 %v661
    %896 = vmatpush1.bf16.msra.mxu0 %v660
    %897 = vmatprep.subr.bf16.mxu0 %v657
    %898 = vmatpush1.bf16.msra.mxu0 %v656
    %899 = vmatprep.subr.bf16.mxu0 %v653
    %900 = vmatpush1.bf16.msra.mxu0 %v652
    %901 = vmatprep.subr.bf16.mxu0 %v713
    %902 = vmatpush2.bf16.msra.mxu0 %v712
    %903 = vmatprep.subr.bf16.mxu0 %v709
    %904 = vmatpush2.bf16.msra.mxu0 %v708
    %905 = vmatprep.subr.bf16.mxu0 %v705
    %906 = vmatpush2.bf16.msra.mxu0 %v704
    %907 = vmatprep.subr.bf16.mxu0 %v701
    %908 = vmatpush2.bf16.msra.mxu0 %v700
    %909 = vmatprep.subr.bf16.mxu0 %v697
    %910 = vmatpush2.bf16.msra.mxu0 %v696
    %911 = vmatprep.subr.bf16.mxu0 %v693
    %912 = vmatpush2.bf16.msra.mxu0 %v692
    %913 = vmatprep.subr.bf16.mxu0 %v689
    %914 = vmatpush2.bf16.msra.mxu0 %v688
    %915 = vmatprep.subr.bf16.mxu0 %v685
    %916 = vmatpush2.bf16.msra.mxu0 %v684
    %917 = vmatprep.mubr.bf16.mxu0 %v75
    %918 = vmatmul.mubr.bf16.gmra.mxu0 %v74
    %v919 = vpop.f32.mrf.mxu0
    %v920 = vadd.f32 %v879, %v919
    %v921 = vpop.f32.mrf.mxu0
    %v922 = vadd.f32 %v881, %v921
    %v923 = vpop.f32.mrf.mxu0
    %v924 = vpop.f32.mrf.mxu0
    %925 = vdwg.mxu0
    %926 = vmatprep.subr.bf16.mxu0 %v619
    %927 = vmatpush1.bf16.msra.mxu0 %v618
    %928 = vmatprep.subr.bf16.mxu0 %v615
    %929 = vmatpush1.bf16.msra.mxu0 %v614
    %930 = vmatprep.subr.bf16.mxu0 %v611
    %931 = vmatpush1.bf16.msra.mxu0 %v610
    %932 = vmatprep.subr.bf16.mxu0 %v607
    %933 = vmatpush1.bf16.msra.mxu0 %v606
    %934 = vmatprep.subr.bf16.mxu0 %v603
    %935 = vmatpush1.bf16.msra.mxu0 %v602
    %936 = vmatprep.subr.bf16.mxu0 %v599
    %937 = vmatpush1.bf16.msra.mxu0 %v598
    %938 = vmatprep.subr.bf16.mxu0 %v595
    %939 = vmatpush1.bf16.msra.mxu0 %v594
    %940 = vmatprep.subr.bf16.mxu0 %v591
    %941 = vmatpush1.bf16.msra.mxu0 %v590
    %942 = vmatprep.subr.bf16.mxu0 %v651
    %943 = vmatpush2.bf16.msra.mxu0 %v650
    %944 = vmatprep.subr.bf16.mxu0 %v647
    %945 = vmatpush2.bf16.msra.mxu0 %v646
    %946 = vmatprep.subr.bf16.mxu0 %v643
    %947 = vmatpush2.bf16.msra.mxu0 %v642
    %948 = vmatprep.subr.bf16.mxu0 %v639
    %949 = vmatpush2.bf16.msra.mxu0 %v638
    %950 = vmatprep.subr.bf16.mxu0 %v635
    %951 = vmatpush2.bf16.msra.mxu0 %v634
    %952 = vmatprep.subr.bf16.mxu0 %v631
    %953 = vmatpush2.bf16.msra.mxu0 %v630
    %954 = vmatprep.subr.bf16.mxu0 %v627
    %955 = vmatpush2.bf16.msra.mxu0 %v626
    %956 = vmatprep.subr.bf16.mxu0 %v623
    %957 = vmatpush2.bf16.msra.mxu0 %v622
    %958 = vmatprep.mubr.bf16.mxu0 %v73
    %959 = vmatmul.mubr.bf16.gmra.mxu0 %v72
    %v960 = vpop.f32.mrf.mxu0
    %v961 = vadd.f32 0.0, %v960
    %v962 = vpop.f32.mrf.mxu0
    %v963 = vadd.f32 0.0, %v962
    %v964 = vpop.f32.mrf.mxu0
    %v965 = vpop.f32.mrf.mxu0
    %966 = vdwg.mxu0
    %967 = vmatprep.subr.bf16.mxu0 %v683
    %968 = vmatpush1.bf16.msra.mxu0 %v682
    %969 = vmatprep.subr.bf16.mxu0 %v679
    %970 = vmatpush1.bf16.msra.mxu0 %v678
    %971 = vmatprep.subr.bf16.mxu0 %v675
    %972 = vmatpush1.bf16.msra.mxu0 %v674
    %973 = vmatprep.subr.bf16.mxu0 %v671
    %974 = vmatpush1.bf16.msra.mxu0 %v670
    %975 = vmatprep.subr.bf16.mxu0 %v667
    %976 = vmatpush1.bf16.msra.mxu0 %v666
    %977 = vmatprep.subr.bf16.mxu0 %v663
    %978 = vmatpush1.bf16.msra.mxu0 %v662
    %979 = vmatprep.subr.bf16.mxu0 %v659
    %980 = vmatpush1.bf16.msra.mxu0 %v658
    %981 = vmatprep.subr.bf16.mxu0 %v655
    %982 = vmatpush1.bf16.msra.mxu0 %v654
    %983 = vmatprep.subr.bf16.mxu0 %v715
    %984 = vmatpush2.bf16.msra.mxu0 %v714
    %985 = vmatprep.subr.bf16.mxu0 %v711
    %986 = vmatpush2.bf16.msra.mxu0 %v710
    %987 = vmatprep.subr.bf16.mxu0 %v707
    %988 = vmatpush2.bf16.msra.mxu0 %v706
    %989 = vmatprep.subr.bf16.mxu0 %v703
    %990 = vmatpush2.bf16.msra.mxu0 %v702
    %991 = vmatprep.subr.bf16.mxu0 %v699
    %992 = vmatpush2.bf16.msra.mxu0 %v698
    %993 = vmatprep.subr.bf16.mxu0 %v695
    %994 = vmatpush2.bf16.msra.mxu0 %v694
    %995 = vmatprep.subr.bf16.mxu0 %v691
    %996 = vmatpush2.bf16.msra.mxu0 %v690
    %997 = vmatprep.subr.bf16.mxu0 %v687
    %998 = vmatpush2.bf16.msra.mxu0 %v686
    %999 = vmatprep.mubr.bf16.mxu0 %v75
    %1000 = vmatmul.mubr.bf16.gmra.mxu0 %v74
    %v1001 = vpop.f32.mrf.mxu0
    %v1002 = vadd.f32 %v961, %v1001
    %v1003 = vpop.f32.mrf.mxu0
    %v1004 = vadd.f32 %v963, %v1003
    %v1005 = vpop.f32.mrf.mxu0
    %v1006 = vpop.f32.mrf.mxu0
    %1007 = vdwg.mxu0
    %v1008 = vrot.slane %v920, 4
    %v1009 = vadd.f32 %v920, %v1008
    %v1010 = vrot.slane %v1009, 2
    %v1011 = vadd.f32 %v1009, %v1010
    %v1012 = vrot.slane %v1011, 1
    %v1013 = vadd.f32 %v1011, %v1012
    %v1014 = vrot.slane %v922, 4
    %v1015 = vadd.f32 %v922, %v1014
    %v1016 = vrot.slane %v1015, 2
    %v1017 = vadd.f32 %v1015, %v1016
    %v1018 = vrot.slane %v1017, 1
    %v1019 = vadd.f32 %v1017, %v1018
    %v1020 = vrot.slane %v1002, 4
    %v1021 = vadd.f32 %v1002, %v1020
    %v1022 = vrot.slane %v1021, 2
    %v1023 = vadd.f32 %v1021, %v1022
    %v1024 = vrot.slane %v1023, 1
    %v1025 = vadd.f32 %v1023, %v1024
    %v1026 = vrot.slane %v1004, 4
    %v1027 = vadd.f32 %v1004, %v1026
    %v1028 = vrot.slane %v1027, 2
    %v1029 = vadd.f32 %v1027, %v1028
    %v1030 = vrot.slane %v1029, 1
    %v1031 = vadd.f32 %v1029, %v1030
    %v1032 = vmul.f32 %v920, %v920
    %v1033 = vmul.f32 %v922, %v922
    %v1034 = vmul.f32 %v1002, %v1002
    %v1035 = vmul.f32 %v1004, %v1004
    %v1036 = vrot.slane %v1032, 4
    %v1037 = vadd.f32 %v1032, %v1036
    %v1038 = vrot.slane %v1037, 2
    %v1039 = vadd.f32 %v1037, %v1038
    %v1040 = vrot.slane %v1039, 1
    %v1041 = vadd.f32 %v1039, %v1040
    %v1042 = vrot.slane %v1033, 4
    %v1043 = vadd.f32 %v1033, %v1042
    %v1044 = vrot.slane %v1043, 2
    %v1045 = vadd.f32 %v1043, %v1044
    %v1046 = vrot.slane %v1045, 1
    %v1047 = vadd.f32 %v1045, %v1046
    %v1048 = vrot.slane %v1034, 4
    %v1049 = vadd.f32 %v1034, %v1048
    %v1050 = vrot.slane %v1049, 2
    %v1051 = vadd.f32 %v1049, %v1050
    %v1052 = vrot.slane %v1051, 1
    %v1053 = vadd.f32 %v1051, %v1052
    %v1054 = vrot.slane %v1035, 4
    %v1055 = vadd.f32 %v1035, %v1054
    %v1056 = vrot.slane %v1055, 2
    %v1057 = vadd.f32 %v1055, %v1056
    %v1058 = vrot.slane %v1057, 1
    %v1059 = vadd.f32 %v1057, %v1058
    %v1060 = vmul.f32 %v1013, 0.125
    %v1061 = vmul.f32 %v1019, 0.125
    %v1062 = vmul.f32 %v1025, 0.125
    %v1063 = vmul.f32 %v1031, 0.125
    %v1064 = vmul.f32 %v1041, 0.125
    %v1065 = vmul.f32 %v1047, 0.125
    %v1066 = vmul.f32 %v1053, 0.125
    %v1067 = vmul.f32 %v1059, 0.125
    %v1068 = vmul.f32 %v1060, %v1060
    %v1069 = vmul.f32 %v1061, %v1061
    %v1070 = vmul.f32 %v1062, %v1062
    %v1071 = vmul.f32 %v1063, %v1063
    %v1072 = vsub.f32 %v1064, %v1068
    %v1073 = vsub.f32 %v1065, %v1069
    %v1074 = vsub.f32 %v1066, %v1070
    %v1075 = vsub.f32 %v1067, %v1071
    %v1076 = vld [vmem:[#allocation6] ss:$2 sm:$0xf]
    %s1077 = scalar_lea.vmem [#allocation6], 1
    %v1078 = vld [vmem:[%s1077] ss:$2 sm:$0xf]
    %v1079 = vsub.f32 %v920, %v1060
    %v1080 = vsub.f32 %v922, %v1061
    %v1081 = vsub.f32 %v1002, %v1062
    %v1082 = vsub.f32 %v1004, %v1063
    %v1083 = vadd.f32 %v1072, 1e-05
    %v1084 = vadd.f32 %v1073, 1e-05
    %v1085 = vadd.f32 %v1074, 1e-05
    %v1086 = vadd.f32 %v1075, 1e-05
    %v1087 = vrsqrt.pop %v1083
    %v1088 = vrsqrt.pop %v1084
    %v1089 = vrsqrt.pop %v1085
    %v1090 = vrsqrt.pop %v1086
    %v1091 = vmul.f32 %v1079, %v1087
    %v1092 = vmul.f32 %v1080, %v1088
    %v1093 = vmul.f32 %v1081, %v1089
    %v1094 = vmul.f32 %v1082, %v1090
    %v1096 = vlaneseq
    %v1097 = vshrl.u32 %v1096, 7
    %v1098 = vsub.s32 0, %v1097
    %v1099 = vrot.slane %v1076, %v1098
    %v1100 = vlaneseq
    %v1101 = vshrl.u32 %v1100, 7
    %v1102 = vsub.s32 1, %v1101
    %v1103 = vrot.slane %v1076, %v1102
    %v1104 = vlaneseq
    %v1105 = vshrl.u32 %v1104, 7
    %v1106 = vsub.s32 2, %v1105
    %v1107 = vrot.slane %v1076, %v1106
    %v1108 = vlaneseq
    %v1109 = vshrl.u32 %v1108, 7
    %v1110 = vsub.s32 3, %v1109
    %v1111 = vrot.slane %v1076, %v1110
    %v1116 = vmul.f32 %v1091, %v1099
    %v1117 = vmul.f32 %v1092, %v1103
    %v1118 = vmul.f32 %v1093, %v1107
    %v1119 = vmul.f32 %v1094, %v1111
    %v1121 = vlaneseq
    %v1122 = vshrl.u32 %v1121, 7
    %v1123 = vsub.s32 0, %v1122
    %v1124 = vrot.slane %v1078, %v1123
    %v1125 = vlaneseq
    %v1126 = vshrl.u32 %v1125, 7
    %v1127 = vsub.s32 1, %v1126
    %v1128 = vrot.slane %v1078, %v1127
    %v1129 = vlaneseq
    %v1130 = vshrl.u32 %v1129, 7
    %v1131 = vsub.s32 2, %v1130
    %v1132 = vrot.slane %v1078, %v1131
    %v1133 = vlaneseq
    %v1134 = vshrl.u32 %v1133, 7
    %v1135 = vsub.s32 3, %v1134
    %v1136 = vrot.slane %v1078, %v1135
    %v1141 = vadd.f32 %v1116, %v1124
    %v1142 = vadd.f32 %v1117, %v1128
    %v1143 = vadd.f32 %v1118, %v1132
    %v1144 = vadd.f32 %v1119, %v1136
    %v1145 = vmax.f32 %v1141, 0.0
    %v1146 = vmax.f32 %v1142, 0.0
    %v1147 = vmax.f32 %v1143, 0.0
    %v1148 = vmax.f32 %v1144, 0.0
    %v1149 = vpack.c.bf16 %v1145, %v1145
    %v1150 = vpack.c.bf16 %v1146, %v1146
    %v1151 = vpack.c.bf16 %v1147, %v1147
    %v1152 = vpack.c.bf16 %v1148, %v1148
    %s1153 = scalar_lea.vmem [#allocation4], 1024
    %v1154 = vld [vmem:[%s1153] sm:$0xff]
    %v1155 = vld [vmem:[%s1153 + $0x8] sm:$0xff]
    %v1156 = vld [vmem:[%s1153 + $0x10] sm:$0xff]
    %v1157 = vld [vmem:[%s1153 + $0x18] sm:$0xff]
    %v1158 = vld [vmem:[%s1153 + $0x20] sm:$0xff]
    %v1159 = vld [vmem:[%s1153 + $0x28] sm:$0xff]
    %v1160 = vld [vmem:[%s1153 + $0x30] sm:$0xff]
    %v1161 = vld [vmem:[%s1153 + $0x38] sm:$0xff]
    %v1162 = vld [vmem:[%s1153 + $0x40] sm:$0xff]
    %v1163 = vld [vmem:[%s1153 + $0x48] sm:$0xff]
    %v1164 = vld [vmem:[%s1153 + $0x50] sm:$0xff]
    %v1165 = vld [vmem:[%s1153 + $0x58] sm:$0xff]
    %v1166 = vld [vmem:[%s1153 + $0x60] sm:$0xff]
    %v1167 = vld [vmem:[%s1153 + $0x68] sm:$0xff]
    %v1168 = vld [vmem:[%s1153 + $0x70] sm:$0xff]
    %v1169 = vld [vmem:[%s1153 + $0x78] sm:$0xff]
    %v1170 = vld [vmem:[%s1153 + $0x80] sm:$0xff]
    %v1171 = vld [vmem:[%s1153 + $0x88] sm:$0xff]
    %v1172 = vld [vmem:[%s1153 + $0x90] sm:$0xff]
    %v1173 = vld [vmem:[%s1153 + $0x98] sm:$0xff]
    %v1174 = vld [vmem:[%s1153 + $0xa0] sm:$0xff]
    %v1175 = vld [vmem:[%s1153 + $0xa8] sm:$0xff]
    %v1176 = vld [vmem:[%s1153 + $0xb0] sm:$0xff]
    %v1177 = vld [vmem:[%s1153 + $0xb8] sm:$0xff]
    %v1178 = vld [vmem:[%s1153 + $0xc0] sm:$0xff]
    %v1179 = vld [vmem:[%s1153 + $0xc8] sm:$0xff]
    %v1180 = vld [vmem:[%s1153 + $0xd0] sm:$0xff]
    %v1181 = vld [vmem:[%s1153 + $0xd8] sm:$0xff]
    %v1182 = vld [vmem:[%s1153 + $0xe0] sm:$0xff]
    %v1183 = vld [vmem:[%s1153 + $0xe8] sm:$0xff]
    %v1184 = vld [vmem:[%s1153 + $0xf0] sm:$0xff]
    %v1185 = vld [vmem:[%s1153 + $0xf8] sm:$0xff]
    %v1186 = vld [vmem:[%s1153 + $0x100] sm:$0xff]
    %v1187 = vld [vmem:[%s1153 + $0x108] sm:$0xff]
    %v1188 = vld [vmem:[%s1153 + $0x110] sm:$0xff]
    %v1189 = vld [vmem:[%s1153 + $0x118] sm:$0xff]
    %v1190 = vld [vmem:[%s1153 + $0x120] sm:$0xff]
    %v1191 = vld [vmem:[%s1153 + $0x128] sm:$0xff]
    %v1192 = vld [vmem:[%s1153 + $0x130] sm:$0xff]
    %v1193 = vld [vmem:[%s1153 + $0x138] sm:$0xff]
    %v1194 = vld [vmem:[%s1153 + $0x140] sm:$0xff]
    %v1195 = vld [vmem:[%s1153 + $0x148] sm:$0xff]
    %v1196 = vld [vmem:[%s1153 + $0x150] sm:$0xff]
    %v1197 = vld [vmem:[%s1153 + $0x158] sm:$0xff]
    %v1198 = vld [vmem:[%s1153 + $0x160] sm:$0xff]
    %v1199 = vld [vmem:[%s1153 + $0x168] sm:$0xff]
    %v1200 = vld [vmem:[%s1153 + $0x170] sm:$0xff]
    %v1201 = vld [vmem:[%s1153 + $0x178] sm:$0xff]
    %v1202 = vld [vmem:[%s1153 + $0x180] sm:$0xff]
    %v1203 = vld [vmem:[%s1153 + $0x188] sm:$0xff]
    %v1204 = vld [vmem:[%s1153 + $0x190] sm:$0xff]
    %v1205 = vld [vmem:[%s1153 + $0x198] sm:$0xff]
    %v1206 = vld [vmem:[%s1153 + $0x1a0] sm:$0xff]
    %v1207 = vld [vmem:[%s1153 + $0x1a8] sm:$0xff]
    %v1208 = vld [vmem:[%s1153 + $0x1b0] sm:$0xff]
    %v1209 = vld [vmem:[%s1153 + $0x1b8] sm:$0xff]
    %v1210 = vld [vmem:[%s1153 + $0x1c0] sm:$0xff]
    %v1211 = vld [vmem:[%s1153 + $0x1c8] sm:$0xff]
    %v1212 = vld [vmem:[%s1153 + $0x1d0] sm:$0xff]
    %v1213 = vld [vmem:[%s1153 + $0x1d8] sm:$0xff]
    %v1214 = vld [vmem:[%s1153 + $0x1e0] sm:$0xff]
    %v1215 = vld [vmem:[%s1153 + $0x1e8] sm:$0xff]
    %v1216 = vld [vmem:[%s1153 + $0x1f0] sm:$0xff]
    %v1217 = vld [vmem:[%s1153 + $0x1f8] sm:$0xff]
    %v1218 = vld [vmem:[%s1153 + $0x200] sm:$0xff]
    %v1219 = vld [vmem:[%s1153 + $0x208] sm:$0xff]
    %v1220 = vld [vmem:[%s1153 + $0x210] sm:$0xff]
    %v1221 = vld [vmem:[%s1153 + $0x218] sm:$0xff]
    %v1222 = vld [vmem:[%s1153 + $0x220] sm:$0xff]
    %v1223 = vld [vmem:[%s1153 + $0x228] sm:$0xff]
    %v1224 = vld [vmem:[%s1153 + $0x230] sm:$0xff]
    %v1225 = vld [vmem:[%s1153 + $0x238] sm:$0xff]
    %v1226 = vld [vmem:[%s1153 + $0x240] sm:$0xff]
    %v1227 = vld [vmem:[%s1153 + $0x248] sm:$0xff]
    %v1228 = vld [vmem:[%s1153 + $0x250] sm:$0xff]
    %v1229 = vld [vmem:[%s1153 + $0x258] sm:$0xff]
    %v1230 = vld [vmem:[%s1153 + $0x260] sm:$0xff]
    %v1231 = vld [vmem:[%s1153 + $0x268] sm:$0xff]
    %v1232 = vld [vmem:[%s1153 + $0x270] sm:$0xff]
    %v1233 = vld [vmem:[%s1153 + $0x278] sm:$0xff]
    %v1234 = vld [vmem:[%s1153 + $0x280] sm:$0xff]
    %v1235 = vld [vmem:[%s1153 + $0x288] sm:$0xff]
    %v1236 = vld [vmem:[%s1153 + $0x290] sm:$0xff]
    %v1237 = vld [vmem:[%s1153 + $0x298] sm:$0xff]
    %v1238 = vld [vmem:[%s1153 + $0x2a0] sm:$0xff]
    %v1239 = vld [vmem:[%s1153 + $0x2a8] sm:$0xff]
    %v1240 = vld [vmem:[%s1153 + $0x2b0] sm:$0xff]
    %v1241 = vld [vmem:[%s1153 + $0x2b8] sm:$0xff]
    %v1242 = vld [vmem:[%s1153 + $0x2c0] sm:$0xff]
    %v1243 = vld [vmem:[%s1153 + $0x2c8] sm:$0xff]
    %v1244 = vld [vmem:[%s1153 + $0x2d0] sm:$0xff]
    %v1245 = vld [vmem:[%s1153 + $0x2d8] sm:$0xff]
    %v1246 = vld [vmem:[%s1153 + $0x2e0] sm:$0xff]
    %v1247 = vld [vmem:[%s1153 + $0x2e8] sm:$0xff]
    %v1248 = vld [vmem:[%s1153 + $0x2f0] sm:$0xff]
    %v1249 = vld [vmem:[%s1153 + $0x2f8] sm:$0xff]
    %v1250 = vld [vmem:[%s1153 + $0x300] sm:$0xff]
    %v1251 = vld [vmem:[%s1153 + $0x308] sm:$0xff]
    %v1252 = vld [vmem:[%s1153 + $0x310] sm:$0xff]
    %v1253 = vld [vmem:[%s1153 + $0x318] sm:$0xff]
    %v1254 = vld [vmem:[%s1153 + $0x320] sm:$0xff]
    %v1255 = vld [vmem:[%s1153 + $0x328] sm:$0xff]
    %v1256 = vld [vmem:[%s1153 + $0x330] sm:$0xff]
    %v1257 = vld [vmem:[%s1153 + $0x338] sm:$0xff]
    %v1258 = vld [vmem:[%s1153 + $0x340] sm:$0xff]
    %v1259 = vld [vmem:[%s1153 + $0x348] sm:$0xff]
    %v1260 = vld [vmem:[%s1153 + $0x350] sm:$0xff]
    %v1261 = vld [vmem:[%s1153 + $0x358] sm:$0xff]
    %v1262 = vld [vmem:[%s1153 + $0x360] sm:$0xff]
    %v1263 = vld [vmem:[%s1153 + $0x368] sm:$0xff]
    %v1264 = vld [vmem:[%s1153 + $0x370] sm:$0xff]
    %v1265 = vld [vmem:[%s1153 + $0x378] sm:$0xff]
    %v1266 = vld [vmem:[%s1153 + $0x380] sm:$0xff]
    %v1267 = vld [vmem:[%s1153 + $0x388] sm:$0xff]
    %v1268 = vld [vmem:[%s1153 + $0x390] sm:$0xff]
    %v1269 = vld [vmem:[%s1153 + $0x398] sm:$0xff]
    %v1270 = vld [vmem:[%s1153 + $0x3a0] sm:$0xff]
    %v1271 = vld [vmem:[%s1153 + $0x3a8] sm:$0xff]
    %v1272 = vld [vmem:[%s1153 + $0x3b0] sm:$0xff]
    %v1273 = vld [vmem:[%s1153 + $0x3b8] sm:$0xff]
    %v1274 = vld [vmem:[%s1153 + $0x3c0] sm:$0xff]
    %v1275 = vld [vmem:[%s1153 + $0x3c8] sm:$0xff]
    %v1276 = vld [vmem:[%s1153 + $0x3d0] sm:$0xff]
    %v1277 = vld [vmem:[%s1153 + $0x3d8] sm:$0xff]
    %v1278 = vld [vmem:[%s1153 + $0x3e0] sm:$0xff]
    %v1279 = vld [vmem:[%s1153 + $0x3e8] sm:$0xff]
    %v1280 = vld [vmem:[%s1153 + $0x3f0] sm:$0xff]
    %v1281 = vld [vmem:[%s1153 + $0x3f8] sm:$0xff]
    %v1410 = vunpack.c.l.b16 %v1154
    %v1411 = vunpack.c.h.b16 %v1154
    %v1412 = vunpack.c.l.b16 %v1155
    %v1413 = vunpack.c.h.b16 %v1155
    %v1414 = vunpack.c.l.b16 %v1156
    %v1415 = vunpack.c.h.b16 %v1156
    %v1416 = vunpack.c.l.b16 %v1157
    %v1417 = vunpack.c.h.b16 %v1157
    %v1418 = vunpack.c.l.b16 %v1158
    %v1419 = vunpack.c.h.b16 %v1158
    %v1420 = vunpack.c.l.b16 %v1159
    %v1421 = vunpack.c.h.b16 %v1159
    %v1422 = vunpack.c.l.b16 %v1160
    %v1423 = vunpack.c.h.b16 %v1160
    %v1424 = vunpack.c.l.b16 %v1161
    %v1425 = vunpack.c.h.b16 %v1161
    %v1426 = vunpack.c.l.b16 %v1162
    %v1427 = vunpack.c.h.b16 %v1162
    %v1428 = vunpack.c.l.b16 %v1163
    %v1429 = vunpack.c.h.b16 %v1163
    %v1430 = vunpack.c.l.b16 %v1164
    %v1431 = vunpack.c.h.b16 %v1164
    %v1432 = vunpack.c.l.b16 %v1165
    %v1433 = vunpack.c.h.b16 %v1165
    %v1434 = vunpack.c.l.b16 %v1166
    %v1435 = vunpack.c.h.b16 %v1166
    %v1436 = vunpack.c.l.b16 %v1167
    %v1437 = vunpack.c.h.b16 %v1167
    %v1438 = vunpack.c.l.b16 %v1168
    %v1439 = vunpack.c.h.b16 %v1168
    %v1440 = vunpack.c.l.b16 %v1169
    %v1441 = vunpack.c.h.b16 %v1169
    %v1442 = vunpack.c.l.b16 %v1170
    %v1443 = vunpack.c.h.b16 %v1170
    %v1444 = vunpack.c.l.b16 %v1171
    %v1445 = vunpack.c.h.b16 %v1171
    %v1446 = vunpack.c.l.b16 %v1172
    %v1447 = vunpack.c.h.b16 %v1172
    %v1448 = vunpack.c.l.b16 %v1173
    %v1449 = vunpack.c.h.b16 %v1173
    %v1450 = vunpack.c.l.b16 %v1174
    %v1451 = vunpack.c.h.b16 %v1174
    %v1452 = vunpack.c.l.b16 %v1175
    %v1453 = vunpack.c.h.b16 %v1175
    %v1454 = vunpack.c.l.b16 %v1176
    %v1455 = vunpack.c.h.b16 %v1176
    %v1456 = vunpack.c.l.b16 %v1177
    %v1457 = vunpack.c.h.b16 %v1177
    %v1458 = vunpack.c.l.b16 %v1178
    %v1459 = vunpack.c.h.b16 %v1178
    %v1460 = vunpack.c.l.b16 %v1179
    %v1461 = vunpack.c.h.b16 %v1179
    %v1462 = vunpack.c.l.b16 %v1180
    %v1463 = vunpack.c.h.b16 %v1180
    %v1464 = vunpack.c.l.b16 %v1181
    %v1465 = vunpack.c.h.b16 %v1181
    %v1466 = vunpack.c.l.b16 %v1182
    %v1467 = vunpack.c.h.b16 %v1182
    %v1468 = vunpack.c.l.b16 %v1183
    %v1469 = vunpack.c.h.b16 %v1183
    %v1470 = vunpack.c.l.b16 %v1184
    %v1471 = vunpack.c.h.b16 %v1184
    %v1472 = vunpack.c.l.b16 %v1185
    %v1473 = vunpack.c.h.b16 %v1185
    %v1474 = vunpack.c.l.b16 %v1186
    %v1475 = vunpack.c.h.b16 %v1186
    %v1476 = vunpack.c.l.b16 %v1187
    %v1477 = vunpack.c.h.b16 %v1187
    %v1478 = vunpack.c.l.b16 %v1188
    %v1479 = vunpack.c.h.b16 %v1188
    %v1480 = vunpack.c.l.b16 %v1189
    %v1481 = vunpack.c.h.b16 %v1189
    %v1482 = vunpack.c.l.b16 %v1190
    %v1483 = vunpack.c.h.b16 %v1190
    %v1484 = vunpack.c.l.b16 %v1191
    %v1485 = vunpack.c.h.b16 %v1191
    %v1486 = vunpack.c.l.b16 %v1192
    %v1487 = vunpack.c.h.b16 %v1192
    %v1488 = vunpack.c.l.b16 %v1193
    %v1489 = vunpack.c.h.b16 %v1193
    %v1490 = vunpack.c.l.b16 %v1194
    %v1491 = vunpack.c.h.b16 %v1194
    %v1492 = vunpack.c.l.b16 %v1195
    %v1493 = vunpack.c.h.b16 %v1195
    %v1494 = vunpack.c.l.b16 %v1196
    %v1495 = vunpack.c.h.b16 %v1196
    %v1496 = vunpack.c.l.b16 %v1197
    %v1497 = vunpack.c.h.b16 %v1197
    %v1498 = vunpack.c.l.b16 %v1198
    %v1499 = vunpack.c.h.b16 %v1198
    %v1500 = vunpack.c.l.b16 %v1199
    %v1501 = vunpack.c.h.b16 %v1199
    %v1502 = vunpack.c.l.b16 %v1200
    %v1503 = vunpack.c.h.b16 %v1200
    %v1504 = vunpack.c.l.b16 %v1201
    %v1505 = vunpack.c.h.b16 %v1201
    %v1506 = vunpack.c.l.b16 %v1202
    %v1507 = vunpack.c.h.b16 %v1202
    %v1508 = vunpack.c.l.b16 %v1203
    %v1509 = vunpack.c.h.b16 %v1203
    %v1510 = vunpack.c.l.b16 %v1204
    %v1511 = vunpack.c.h.b16 %v1204
    %v1512 = vunpack.c.l.b16 %v1205
    %v1513 = vunpack.c.h.b16 %v1205
    %v1514 = vunpack.c.l.b16 %v1206
    %v1515 = vunpack.c.h.b16 %v1206
    %v1516 = vunpack.c.l.b16 %v1207
    %v1517 = vunpack.c.h.b16 %v1207
    %v1518 = vunpack.c.l.b16 %v1208
    %v1519 = vunpack.c.h.b16 %v1208
    %v1520 = vunpack.c.l.b16 %v1209
    %v1521 = vunpack.c.h.b16 %v1209
    %v1522 = vunpack.c.l.b16 %v1210
    %v1523 = vunpack.c.h.b16 %v1210
    %v1524 = vunpack.c.l.b16 %v1211
    %v1525 = vunpack.c.h.b16 %v1211
    %v1526 = vunpack.c.l.b16 %v1212
    %v1527 = vunpack.c.h.b16 %v1212
    %v1528 = vunpack.c.l.b16 %v1213
    %v1529 = vunpack.c.h.b16 %v1213
    %v1530 = vunpack.c.l.b16 %v1214
    %v1531 = vunpack.c.h.b16 %v1214
    %v1532 = vunpack.c.l.b16 %v1215
    %v1533 = vunpack.c.h.b16 %v1215
    %v1534 = vunpack.c.l.b16 %v1216
    %v1535 = vunpack.c.h.b16 %v1216
    %v1536 = vunpack.c.l.b16 %v1217
    %v1537 = vunpack.c.h.b16 %v1217
    %v1538 = vunpack.c.l.b16 %v1218
    %v1539 = vunpack.c.h.b16 %v1218
    %v1540 = vunpack.c.l.b16 %v1219
    %v1541 = vunpack.c.h.b16 %v1219
    %v1542 = vunpack.c.l.b16 %v1220
    %v1543 = vunpack.c.h.b16 %v1220
    %v1544 = vunpack.c.l.b16 %v1221
    %v1545 = vunpack.c.h.b16 %v1221
    %v1546 = vunpack.c.l.b16 %v1222
    %v1547 = vunpack.c.h.b16 %v1222
    %v1548 = vunpack.c.l.b16 %v1223
    %v1549 = vunpack.c.h.b16 %v1223
    %v1550 = vunpack.c.l.b16 %v1224
    %v1551 = vunpack.c.h.b16 %v1224
    %v1552 = vunpack.c.l.b16 %v1225
    %v1553 = vunpack.c.h.b16 %v1225
    %v1554 = vunpack.c.l.b16 %v1226
    %v1555 = vunpack.c.h.b16 %v1226
    %v1556 = vunpack.c.l.b16 %v1227
    %v1557 = vunpack.c.h.b16 %v1227
    %v1558 = vunpack.c.l.b16 %v1228
    %v1559 = vunpack.c.h.b16 %v1228
    %v1560 = vunpack.c.l.b16 %v1229
    %v1561 = vunpack.c.h.b16 %v1229
    %v1562 = vunpack.c.l.b16 %v1230
    %v1563 = vunpack.c.h.b16 %v1230
    %v1564 = vunpack.c.l.b16 %v1231
    %v1565 = vunpack.c.h.b16 %v1231
    %v1566 = vunpack.c.l.b16 %v1232
    %v1567 = vunpack.c.h.b16 %v1232
    %v1568 = vunpack.c.l.b16 %v1233
    %v1569 = vunpack.c.h.b16 %v1233
    %v1570 = vunpack.c.l.b16 %v1234
    %v1571 = vunpack.c.h.b16 %v1234
    %v1572 = vunpack.c.l.b16 %v1235
    %v1573 = vunpack.c.h.b16 %v1235
    %v1574 = vunpack.c.l.b16 %v1236
    %v1575 = vunpack.c.h.b16 %v1236
    %v1576 = vunpack.c.l.b16 %v1237
    %v1577 = vunpack.c.h.b16 %v1237
    %v1578 = vunpack.c.l.b16 %v1238
    %v1579 = vunpack.c.h.b16 %v1238
    %v1580 = vunpack.c.l.b16 %v1239
    %v1581 = vunpack.c.h.b16 %v1239
    %v1582 = vunpack.c.l.b16 %v1240
    %v1583 = vunpack.c.h.b16 %v1240
    %v1584 = vunpack.c.l.b16 %v1241
    %v1585 = vunpack.c.h.b16 %v1241
    %v1586 = vunpack.c.l.b16 %v1242
    %v1587 = vunpack.c.h.b16 %v1242
    %v1588 = vunpack.c.l.b16 %v1243
    %v1589 = vunpack.c.h.b16 %v1243
    %v1590 = vunpack.c.l.b16 %v1244
    %v1591 = vunpack.c.h.b16 %v1244
    %v1592 = vunpack.c.l.b16 %v1245
    %v1593 = vunpack.c.h.b16 %v1245
    %v1594 = vunpack.c.l.b16 %v1246
    %v1595 = vunpack.c.h.b16 %v1246
    %v1596 = vunpack.c.l.b16 %v1247
    %v1597 = vunpack.c.h.b16 %v1247
    %v1598 = vunpack.c.l.b16 %v1248
    %v1599 = vunpack.c.h.b16 %v1248
    %v1600 = vunpack.c.l.b16 %v1249
    %v1601 = vunpack.c.h.b16 %v1249
    %v1602 = vunpack.c.l.b16 %v1250
    %v1603 = vunpack.c.h.b16 %v1250
    %v1604 = vunpack.c.l.b16 %v1251
    %v1605 = vunpack.c.h.b16 %v1251
    %v1606 = vunpack.c.l.b16 %v1252
    %v1607 = vunpack.c.h.b16 %v1252
    %v1608 = vunpack.c.l.b16 %v1253
    %v1609 = vunpack.c.h.b16 %v1253
    %v1610 = vunpack.c.l.b16 %v1254
    %v1611 = vunpack.c.h.b16 %v1254
    %v1612 = vunpack.c.l.b16 %v1255
    %v1613 = vunpack.c.h.b16 %v1255
    %v1614 = vunpack.c.l.b16 %v1256
    %v1615 = vunpack.c.h.b16 %v1256
    %v1616 = vunpack.c.l.b16 %v1257
    %v1617 = vunpack.c.h.b16 %v1257
    %v1618 = vunpack.c.l.b16 %v1258
    %v1619 = vunpack.c.h.b16 %v1258
    %v1620 = vunpack.c.l.b16 %v1259
    %v1621 = vunpack.c.h.b16 %v1259
    %v1622 = vunpack.c.l.b16 %v1260
    %v1623 = vunpack.c.h.b16 %v1260
    %v1624 = vunpack.c.l.b16 %v1261
    %v1625 = vunpack.c.h.b16 %v1261
    %v1626 = vunpack.c.l.b16 %v1262
    %v1627 = vunpack.c.h.b16 %v1262
    %v1628 = vunpack.c.l.b16 %v1263
    %v1629 = vunpack.c.h.b16 %v1263
    %v1630 = vunpack.c.l.b16 %v1264
    %v1631 = vunpack.c.h.b16 %v1264
    %v1632 = vunpack.c.l.b16 %v1265
    %v1633 = vunpack.c.h.b16 %v1265
    %v1634 = vunpack.c.l.b16 %v1266
    %v1635 = vunpack.c.h.b16 %v1266
    %v1636 = vunpack.c.l.b16 %v1267
    %v1637 = vunpack.c.h.b16 %v1267
    %v1638 = vunpack.c.l.b16 %v1268
    %v1639 = vunpack.c.h.b16 %v1268
    %v1640 = vunpack.c.l.b16 %v1269
    %v1641 = vunpack.c.h.b16 %v1269
    %v1642 = vunpack.c.l.b16 %v1270
    %v1643 = vunpack.c.h.b16 %v1270
    %v1644 = vunpack.c.l.b16 %v1271
    %v1645 = vunpack.c.h.b16 %v1271
    %v1646 = vunpack.c.l.b16 %v1272
    %v1647 = vunpack.c.h.b16 %v1272
    %v1648 = vunpack.c.l.b16 %v1273
    %v1649 = vunpack.c.h.b16 %v1273
    %v1650 = vunpack.c.l.b16 %v1274
    %v1651 = vunpack.c.h.b16 %v1274
    %v1652 = vunpack.c.l.b16 %v1275
    %v1653 = vunpack.c.h.b16 %v1275
    %v1654 = vunpack.c.l.b16 %v1276
    %v1655 = vunpack.c.h.b16 %v1276
    %v1656 = vunpack.c.l.b16 %v1277
    %v1657 = vunpack.c.h.b16 %v1277
    %v1658 = vunpack.c.l.b16 %v1278
    %v1659 = vunpack.c.h.b16 %v1278
    %v1660 = vunpack.c.l.b16 %v1279
    %v1661 = vunpack.c.h.b16 %v1279
    %v1662 = vunpack.c.l.b16 %v1280
    %v1663 = vunpack.c.h.b16 %v1280
    %v1664 = vunpack.c.l.b16 %v1281
    %v1665 = vunpack.c.h.b16 %v1281
    %v1666 = vpack.c.b16 %v1414, %v1410
    %v1667 = vpack.c.b16 %v1415, %v1411
    %v1668 = vpack.c.b16 %v1416, %v1412
    %v1669 = vpack.c.b16 %v1417, %v1413
    %v1670 = vpack.c.b16 %v1422, %v1418
    %v1671 = vpack.c.b16 %v1423, %v1419
    %v1672 = vpack.c.b16 %v1424, %v1420
    %v1673 = vpack.c.b16 %v1425, %v1421
    %v1674 = vpack.c.b16 %v1430, %v1426
    %v1675 = vpack.c.b16 %v1431, %v1427
    %v1676 = vpack.c.b16 %v1432, %v1428
    %v1677 = vpack.c.b16 %v1433, %v1429
    %v1678 = vpack.c.b16 %v1438, %v1434
    %v1679 = vpack.c.b16 %v1439, %v1435
    %v1680 = vpack.c.b16 %v1440, %v1436
    %v1681 = vpack.c.b16 %v1441, %v1437
    %v1682 = vpack.c.b16 %v1446, %v1442
    %v1683 = vpack.c.b16 %v1447, %v1443
    %v1684 = vpack.c.b16 %v1448, %v1444
    %v1685 = vpack.c.b16 %v1449, %v1445
    %v1686 = vpack.c.b16 %v1454, %v1450
    %v1687 = vpack.c.b16 %v1455, %v1451
    %v1688 = vpack.c.b16 %v1456, %v1452
    %v1689 = vpack.c.b16 %v1457, %v1453
    %v1690 = vpack.c.b16 %v1462, %v1458
    %v1691 = vpack.c.b16 %v1463, %v1459
    %v1692 = vpack.c.b16 %v1464, %v1460
    %v1693 = vpack.c.b16 %v1465, %v1461
    %v1694 = vpack.c.b16 %v1470, %v1466
    %v1695 = vpack.c.b16 %v1471, %v1467
    %v1696 = vpack.c.b16 %v1472, %v1468
    %v1697 = vpack.c.b16 %v1473, %v1469
    %v1698 = vpack.c.b16 %v1478, %v1474
    %v1699 = vpack.c.b16 %v1479, %v1475
    %v1700 = vpack.c.b16 %v1480, %v1476
    %v1701 = vpack.c.b16 %v1481, %v1477
    %v1702 = vpack.c.b16 %v1486, %v1482
    %v1703 = vpack.c.b16 %v1487, %v1483
    %v1704 = vpack.c.b16 %v1488, %v1484
    %v1705 = vpack.c.b16 %v1489, %v1485
    %v1706 = vpack.c.b16 %v1494, %v1490
    %v1707 = vpack.c.b16 %v1495, %v1491
    %v1708 = vpack.c.b16 %v1496, %v1492
    %v1709 = vpack.c.b16 %v1497, %v1493
    %v1710 = vpack.c.b16 %v1502, %v1498
    %v1711 = vpack.c.b16 %v1503, %v1499
    %v1712 = vpack.c.b16 %v1504, %v1500
    %v1713 = vpack.c.b16 %v1505, %v1501
    %v1714 = vpack.c.b16 %v1510, %v1506
    %v1715 = vpack.c.b16 %v1511, %v1507
    %v1716 = vpack.c.b16 %v1512, %v1508
    %v1717 = vpack.c.b16 %v1513, %v1509
    %v1718 = vpack.c.b16 %v1518, %v1514
    %v1719 = vpack.c.b16 %v1519, %v1515
    %v1720 = vpack.c.b16 %v1520, %v1516
    %v1721 = vpack.c.b16 %v1521, %v1517
    %v1722 = vpack.c.b16 %v1526, %v1522
    %v1723 = vpack.c.b16 %v1527, %v1523
    %v1724 = vpack.c.b16 %v1528, %v1524
    %v1725 = vpack.c.b16 %v1529, %v1525
    %v1726 = vpack.c.b16 %v1534, %v1530
    %v1727 = vpack.c.b16 %v1535, %v1531
    %v1728 = vpack.c.b16 %v1536, %v1532
    %v1729 = vpack.c.b16 %v1537, %v1533
    %v1730 = vpack.c.b16 %v1542, %v1538
    %v1731 = vpack.c.b16 %v1543, %v1539
    %v1732 = vpack.c.b16 %v1544, %v1540
    %v1733 = vpack.c.b16 %v1545, %v1541
    %v1734 = vpack.c.b16 %v1550, %v1546
    %v1735 = vpack.c.b16 %v1551, %v1547
    %v1736 = vpack.c.b16 %v1552, %v1548
    %v1737 = vpack.c.b16 %v1553, %v1549
    %v1738 = vpack.c.b16 %v1558, %v1554
    %v1739 = vpack.c.b16 %v1559, %v1555
    %v1740 = vpack.c.b16 %v1560, %v1556
    %v1741 = vpack.c.b16 %v1561, %v1557
    %v1742 = vpack.c.b16 %v1566, %v1562
    %v1743 = vpack.c.b16 %v1567, %v1563
    %v1744 = vpack.c.b16 %v1568, %v1564
    %v1745 = vpack.c.b16 %v1569, %v1565
    %v1746 = vpack.c.b16 %v1574, %v1570
    %v1747 = vpack.c.b16 %v1575, %v1571
    %v1748 = vpack.c.b16 %v1576, %v1572
    %v1749 = vpack.c.b16 %v1577, %v1573
    %v1750 = vpack.c.b16 %v1582, %v1578
    %v1751 = vpack.c.b16 %v1583, %v1579
    %v1752 = vpack.c.b16 %v1584, %v1580
    %v1753 = vpack.c.b16 %v1585, %v1581
    %v1754 = vpack.c.b16 %v1590, %v1586
    %v1755 = vpack.c.b16 %v1591, %v1587
    %v1756 = vpack.c.b16 %v1592, %v1588
    %v1757 = vpack.c.b16 %v1593, %v1589
    %v1758 = vpack.c.b16 %v1598, %v1594
    %v1759 = vpack.c.b16 %v1599, %v1595
    %v1760 = vpack.c.b16 %v1600, %v1596
    %v1761 = vpack.c.b16 %v1601, %v1597
    %v1762 = vpack.c.b16 %v1606, %v1602
    %v1763 = vpack.c.b16 %v1607, %v1603
    %v1764 = vpack.c.b16 %v1608, %v1604
    %v1765 = vpack.c.b16 %v1609, %v1605
    %v1766 = vpack.c.b16 %v1614, %v1610
    %v1767 = vpack.c.b16 %v1615, %v1611
    %v1768 = vpack.c.b16 %v1616, %v1612
    %v1769 = vpack.c.b16 %v1617, %v1613
    %v1770 = vpack.c.b16 %v1622, %v1618
    %v1771 = vpack.c.b16 %v1623, %v1619
    %v1772 = vpack.c.b16 %v1624, %v1620
    %v1773 = vpack.c.b16 %v1625, %v1621
    %v1774 = vpack.c.b16 %v1630, %v1626
    %v1775 = vpack.c.b16 %v1631, %v1627
    %v1776 = vpack.c.b16 %v1632, %v1628
    %v1777 = vpack.c.b16 %v1633, %v1629
    %v1778 = vpack.c.b16 %v1638, %v1634
    %v1779 = vpack.c.b16 %v1639, %v1635
    %v1780 = vpack.c.b16 %v1640, %v1636
    %v1781 = vpack.c.b16 %v1641, %v1637
    %v1782 = vpack.c.b16 %v1646, %v1642
    %v1783 = vpack.c.b16 %v1647, %v1643
    %v1784 = vpack.c.b16 %v1648, %v1644
    %v1785 = vpack.c.b16 %v1649, %v1645
    %v1786 = vpack.c.b16 %v1654, %v1650
    %v1787 = vpack.c.b16 %v1655, %v1651
    %v1788 = vpack.c.b16 %v1656, %v1652
    %v1789 = vpack.c.b16 %v1657, %v1653
    %v1790 = vpack.c.b16 %v1662, %v1658
    %v1791 = vpack.c.b16 %v1663, %v1659
    %v1792 = vpack.c.b16 %v1664, %v1660
    %v1793 = vpack.c.b16 %v1665, %v1661
    %1922 = vmatprep.subr.bf16.mxu0 %v1695
    %1923 = vmatpush1.bf16.msra.mxu0 %v1694
    %1924 = vmatprep.subr.bf16.mxu0 %v1691
    %1925 = vmatpush1.bf16.msra.mxu0 %v1690
    %1926 = vmatprep.subr.bf16.mxu0 %v1687
    %1927 = vmatpush1.bf16.msra.mxu0 %v1686
    %1928 = vmatprep.subr.bf16.mxu0 %v1683
    %1929 = vmatpush1.bf16.msra.mxu0 %v1682
    %1930 = vmatprep.subr.bf16.mxu0 %v1679
    %1931 = vmatpush1.bf16.msra.mxu0 %v1678
    %1932 = vmatprep.subr.bf16.mxu0 %v1675
    %1933 = vmatpush1.bf16.msra.mxu0 %v1674
    %1934 = vmatprep.subr.bf16.mxu0 %v1671
    %1935 = vmatpush1.bf16.msra.mxu0 %v1670
    %1936 = vmatprep.subr.bf16.mxu0 %v1667
    %1937 = vmatpush1.bf16.msra.mxu0 %v1666
    %1938 = vmatprep.subr.bf16.mxu0 %v1727
    %1939 = vmatpush2.bf16.msra.mxu0 %v1726
    %1940 = vmatprep.subr.bf16.mxu0 %v1723
    %1941 = vmatpush2.bf16.msra.mxu0 %v1722
    %1942 = vmatprep.subr.bf16.mxu0 %v1719
    %1943 = vmatpush2.bf16.msra.mxu0 %v1718
    %1944 = vmatprep.subr.bf16.mxu0 %v1715
    %1945 = vmatpush2.bf16.msra.mxu0 %v1714
    %1946 = vmatprep.subr.bf16.mxu0 %v1711
    %1947 = vmatpush2.bf16.msra.mxu0 %v1710
    %1948 = vmatprep.subr.bf16.mxu0 %v1707
    %1949 = vmatpush2.bf16.msra.mxu0 %v1706
    %1950 = vmatprep.subr.bf16.mxu0 %v1703
    %1951 = vmatpush2.bf16.msra.mxu0 %v1702
    %1952 = vmatprep.subr.bf16.mxu0 %v1699
    %1953 = vmatpush2.bf16.msra.mxu0 %v1698
    %1954 = vmatprep.mubr.bf16.mxu0 %v1150
    %1955 = vmatmul.mubr.bf16.gmra.mxu0 %v1149
    %v1956 = vpop.f32.mrf.mxu0
    %v1957 = vadd.f32 0.0, %v1956
    %v1958 = vpop.f32.mrf.mxu0
    %v1959 = vadd.f32 0.0, %v1958
    %v1960 = vpop.f32.mrf.mxu0
    %v1961 = vpop.f32.mrf.mxu0
    %1962 = vdwg.mxu0
    %1963 = vmatprep.subr.bf16.mxu0 %v1759
    %1964 = vmatpush1.bf16.msra.mxu0 %v1758
    %1965 = vmatprep.subr.bf16.mxu0 %v1755
    %1966 = vmatpush1.bf16.msra.mxu0 %v1754
    %1967 = vmatprep.subr.bf16.mxu0 %v1751
    %1968 = vmatpush1.bf16.msra.mxu0 %v1750
    %1969 = vmatprep.subr.bf16.mxu0 %v1747
    %1970 = vmatpush1.bf16.msra.mxu0 %v1746
    %1971 = vmatprep.subr.bf16.mxu0 %v1743
    %1972 = vmatpush1.bf16.msra.mxu0 %v1742
    %1973 = vmatprep.subr.bf16.mxu0 %v1739
    %1974 = vmatpush1.bf16.msra.mxu0 %v1738
    %1975 = vmatprep.subr.bf16.mxu0 %v1735
    %1976 = vmatpush1.bf16.msra.mxu0 %v1734
    %1977 = vmatprep.subr.bf16.mxu0 %v1731
    %1978 = vmatpush1.bf16.msra.mxu0 %v1730
    %1979 = vmatprep.subr.bf16.mxu0 %v1791
    %1980 = vmatpush2.bf16.msra.mxu0 %v1790
    %1981 = vmatprep.subr.bf16.mxu0 %v1787
    %1982 = vmatpush2.bf16.msra.mxu0 %v1786
    %1983 = vmatprep.subr.bf16.mxu0 %v1783
    %1984 = vmatpush2.bf16.msra.mxu0 %v1782
    %1985 = vmatprep.subr.bf16.mxu0 %v1779
    %1986 = vmatpush2.bf16.msra.mxu0 %v1778
    %1987 = vmatprep.subr.bf16.mxu0 %v1775
    %1988 = vmatpush2.bf16.msra.mxu0 %v1774
    %1989 = vmatprep.subr.bf16.mxu0 %v1771
    %1990 = vmatpush2.bf16.msra.mxu0 %v1770
    %1991 = vmatprep.subr.bf16.mxu0 %v1767
    %1992 = vmatpush2.bf16.msra.mxu0 %v1766
    %1993 = vmatprep.subr.bf16.mxu0 %v1763
    %1994 = vmatpush2.bf16.msra.mxu0 %v1762
    %1995 = vmatprep.mubr.bf16.mxu0 %v1152
    %1996 = vmatmul.mubr.bf16.gmra.mxu0 %v1151
    %v1997 = vpop.f32.mrf.mxu0
    %v1998 = vadd.f32 %v1957, %v1997
    %v1999 = vpop.f32.mrf.mxu0
    %v2000 = vadd.f32 %v1959, %v1999
    %v2001 = vpop.f32.mrf.mxu0
    %v2002 = vpop.f32.mrf.mxu0
    %2003 = vdwg.mxu0
    %2004 = vmatprep.subr.bf16.mxu0 %v1697
    %2005 = vmatpush1.bf16.msra.mxu0 %v1696
    %2006 = vmatprep.subr.bf16.mxu0 %v1693
    %2007 = vmatpush1.bf16.msra.mxu0 %v1692
    %2008 = vmatprep.subr.bf16.mxu0 %v1689
    %2009 = vmatpush1.bf16.msra.mxu0 %v1688
    %2010 = vmatprep.subr.bf16.mxu0 %v1685
    %2011 = vmatpush1.bf16.msra.mxu0 %v1684
    %2012 = vmatprep.subr.bf16.mxu0 %v1681
    %2013 = vmatpush1.bf16.msra.mxu0 %v1680
    %2014 = vmatprep.subr.bf16.mxu0 %v1677
    %2015 = vmatpush1.bf16.msra.mxu0 %v1676
    %2016 = vmatprep.subr.bf16.mxu0 %v1673
    %2017 = vmatpush1.bf16.msra.mxu0 %v1672
    %2018 = vmatprep.subr.bf16.mxu0 %v1669
    %2019 = vmatpush1.bf16.msra.mxu0 %v1668
    %2020 = vmatprep.subr.bf16.mxu0 %v1729
    %2021 = vmatpush2.bf16.msra.mxu0 %v1728
    %2022 = vmatprep.subr.bf16.mxu0 %v1725
    %2023 = vmatpush2.bf16.msra.mxu0 %v1724
    %2024 = vmatprep.subr.bf16.mxu0 %v1721
    %2025 = vmatpush2.bf16.msra.mxu0 %v1720
    %2026 = vmatprep.subr.bf16.mxu0 %v1717
    %2027 = vmatpush2.bf16.msra.mxu0 %v1716
    %2028 = vmatprep.subr.bf16.mxu0 %v1713
    %2029 = vmatpush2.bf16.msra.mxu0 %v1712
    %2030 = vmatprep.subr.bf16.mxu0 %v1709
    %2031 = vmatpush2.bf16.msra.mxu0 %v1708
    %2032 = vmatprep.subr.bf16.mxu0 %v1705
    %2033 = vmatpush2.bf16.msra.mxu0 %v1704
    %2034 = vmatprep.subr.bf16.mxu0 %v1701
    %2035 = vmatpush2.bf16.msra.mxu0 %v1700
    %2036 = vmatprep.mubr.bf16.mxu0 %v1150
    %2037 = vmatmul.mubr.bf16.gmra.mxu0 %v1149
    %v2038 = vpop.f32.mrf.mxu0
    %v2039 = vadd.f32 0.0, %v2038
    %v2040 = vpop.f32.mrf.mxu0
    %v2041 = vadd.f32 0.0, %v2040
    %v2042 = vpop.f32.mrf.mxu0
    %v2043 = vpop.f32.mrf.mxu0
    %2044 = vdwg.mxu0
    %2045 = vmatprep.subr.bf16.mxu0 %v1761
    %2046 = vmatpush1.bf16.msra.mxu0 %v1760
    %2047 = vmatprep.subr.bf16.mxu0 %v1757
    %2048 = vmatpush1.bf16.msra.mxu0 %v1756
    %2049 = vmatprep.subr.bf16.mxu0 %v1753
    %2050 = vmatpush1.bf16.msra.mxu0 %v1752
    %2051 = vmatprep.subr.bf16.mxu0 %v1749
    %2052 = vmatpush1.bf16.msra.mxu0 %v1748
    %2053 = vmatprep.subr.bf16.mxu0 %v1745
    %2054 = vmatpush1.bf16.msra.mxu0 %v1744
    %2055 = vmatprep.subr.bf16.mxu0 %v1741
    %2056 = vmatpush1.bf16.msra.mxu0 %v1740
    %2057 = vmatprep.subr.bf16.mxu0 %v1737
    %2058 = vmatpush1.bf16.msra.mxu0 %v1736
    %2059 = vmatprep.subr.bf16.mxu0 %v1733
    %2060 = vmatpush1.bf16.msra.mxu0 %v1732
    %2061 = vmatprep.subr.bf16.mxu0 %v1793
    %2062 = vmatpush2.bf16.msra.mxu0 %v1792
    %2063 = vmatprep.subr.bf16.mxu0 %v1789
    %2064 = vmatpush2.bf16.msra.mxu0 %v1788
    %2065 = vmatprep.subr.bf16.mxu0 %v1785
    %2066 = vmatpush2.bf16.msra.mxu0 %v1784
    %2067 = vmatprep.subr.bf16.mxu0 %v1781
    %2068 = vmatpush2.bf16.msra.mxu0 %v1780
    %2069 = vmatprep.subr.bf16.mxu0 %v1777
    %2070 = vmatpush2.bf16.msra.mxu0 %v1776
    %2071 = vmatprep.subr.bf16.mxu0 %v1773
    %2072 = vmatpush2.bf16.msra.mxu0 %v1772
    %2073 = vmatprep.subr.bf16.mxu0 %v1769
    %2074 = vmatpush2.bf16.msra.mxu0 %v1768
    %2075 = vmatprep.subr.bf16.mxu0 %v1765
    %2076 = vmatpush2.bf16.msra.mxu0 %v1764
    %2077 = vmatprep.mubr.bf16.mxu0 %v1152
    %2078 = vmatmul.mubr.bf16.gmra.mxu0 %v1151
    %v2079 = vpop.f32.mrf.mxu0
    %v2080 = vadd.f32 %v2039, %v2079
    %v2081 = vpop.f32.mrf.mxu0
    %v2082 = vadd.f32 %v2041, %v2081
    %v2083 = vpop.f32.mrf.mxu0
    %v2084 = vpop.f32.mrf.mxu0
    %2085 = vdwg.mxu0
    %v2086 = vrot.slane %v1998, 4
    %v2087 = vadd.f32 %v1998, %v2086
    %v2088 = vrot.slane %v2087, 2
    %v2089 = vadd.f32 %v2087, %v2088
    %v2090 = vrot.slane %v2089, 1
    %v2091 = vadd.f32 %v2089, %v2090
    %v2092 = vrot.slane %v2000, 4
    %v2093 = vadd.f32 %v2000, %v2092
    %v2094 = vrot.slane %v2093, 2
    %v2095 = vadd.f32 %v2093, %v2094
    %v2096 = vrot.slane %v2095, 1
    %v2097 = vadd.f32 %v2095, %v2096
    %v2098 = vrot.slane %v2080, 4
    %v2099 = vadd.f32 %v2080, %v2098
    %v2100 = vrot.slane %v2099, 2
    %v2101 = vadd.f32 %v2099, %v2100
    %v2102 = vrot.slane %v2101, 1
    %v2103 = vadd.f32 %v2101, %v2102
    %v2104 = vrot.slane %v2082, 4
    %v2105 = vadd.f32 %v2082, %v2104
    %v2106 = vrot.slane %v2105, 2
    %v2107 = vadd.f32 %v2105, %v2106
    %v2108 = vrot.slane %v2107, 1
    %v2109 = vadd.f32 %v2107, %v2108
    %v2110 = vmul.f32 %v1998, %v1998
    %v2111 = vmul.f32 %v2000, %v2000
    %v2112 = vmul.f32 %v2080, %v2080
    %v2113 = vmul.f32 %v2082, %v2082
    %v2114 = vrot.slane %v2110, 4
    %v2115 = vadd.f32 %v2110, %v2114
    %v2116 = vrot.slane %v2115, 2
    %v2117 = vadd.f32 %v2115, %v2116
    %v2118 = vrot.slane %v2117, 1
    %v2119 = vadd.f32 %v2117, %v2118
    %v2120 = vrot.slane %v2111, 4
    %v2121 = vadd.f32 %v2111, %v2120
    %v2122 = vrot.slane %v2121, 2
    %v2123 = vadd.f32 %v2121, %v2122
    %v2124 = vrot.slane %v2123, 1
    %v2125 = vadd.f32 %v2123, %v2124
    %v2126 = vrot.slane %v2112, 4
    %v2127 = vadd.f32 %v2112, %v2126
    %v2128 = vrot.slane %v2127, 2
    %v2129 = vadd.f32 %v2127, %v2128
    %v2130 = vrot.slane %v2129, 1
    %v2131 = vadd.f32 %v2129, %v2130
    %v2132 = vrot.slane %v2113, 4
    %v2133 = vadd.f32 %v2113, %v2132
    %v2134 = vrot.slane %v2133, 2
    %v2135 = vadd.f32 %v2133, %v2134
    %v2136 = vrot.slane %v2135, 1
    %v2137 = vadd.f32 %v2135, %v2136
    %v2138 = vmul.f32 %v2091, 0.125
    %v2139 = vmul.f32 %v2097, 0.125
    %v2140 = vmul.f32 %v2103, 0.125
    %v2141 = vmul.f32 %v2109, 0.125
    %v2142 = vmul.f32 %v2119, 0.125
    %v2143 = vmul.f32 %v2125, 0.125
    %v2144 = vmul.f32 %v2131, 0.125
    %v2145 = vmul.f32 %v2137, 0.125
    %v2146 = vmul.f32 %v2138, %v2138
    %v2147 = vmul.f32 %v2139, %v2139
    %v2148 = vmul.f32 %v2140, %v2140
    %v2149 = vmul.f32 %v2141, %v2141
    %v2150 = vsub.f32 %v2142, %v2146
    %v2151 = vsub.f32 %v2143, %v2147
    %v2152 = vsub.f32 %v2144, %v2148
    %v2153 = vsub.f32 %v2145, %v2149
    %s2154 = scalar_lea.vmem [#allocation6], 8
    %v2155 = vld [vmem:[%s2154] ss:$2 sm:$0xf]
    %s2156 = scalar_lea.vmem %s2154, 1 [#allocation6]
    %v2157 = vld [vmem:[%s2156] ss:$2 sm:$0xf]
    %v2158 = vsub.f32 %v1998, %v2138
    %v2159 = vsub.f32 %v2000, %v2139
    %v2160 = vsub.f32 %v2080, %v2140
    %v2161 = vsub.f32 %v2082, %v2141
    %v2162 = vadd.f32 %v2150, 1e-05
    %v2163 = vadd.f32 %v2151, 1e-05
    %v2164 = vadd.f32 %v2152, 1e-05
    %v2165 = vadd.f32 %v2153, 1e-05
    %v2166 = vrsqrt.pop %v2162
    %v2167 = vrsqrt.pop %v2163
    %v2168 = vrsqrt.pop %v2164
    %v2169 = vrsqrt.pop %v2165
    %v2170 = vmul.f32 %v2158, %v2166
    %v2171 = vmul.f32 %v2159, %v2167
    %v2172 = vmul.f32 %v2160, %v2168
    %v2173 = vmul.f32 %v2161, %v2169
    %v2175 = vlaneseq
    %v2176 = vshrl.u32 %v2175, 7
    %v2177 = vsub.s32 0, %v2176
    %v2178 = vrot.slane %v2155, %v2177
    %v2179 = vlaneseq
    %v2180 = vshrl.u32 %v2179, 7
    %v2181 = vsub.s32 1, %v2180
    %v2182 = vrot.slane %v2155, %v2181
    %v2183 = vlaneseq
    %v2184 = vshrl.u32 %v2183, 7
    %v2185 = vsub.s32 2, %v2184
    %v2186 = vrot.slane %v2155, %v2185
    %v2187 = vlaneseq
    %v2188 = vshrl.u32 %v2187, 7
    %v2189 = vsub.s32 3, %v2188
    %v2190 = vrot.slane %v2155, %v2189
    %v2195 = vmul.f32 %v2170, %v2178
    %v2196 = vmul.f32 %v2171, %v2182
    %v2197 = vmul.f32 %v2172, %v2186
    %v2198 = vmul.f32 %v2173, %v2190
    %v2200 = vlaneseq
    %v2201 = vshrl.u32 %v2200, 7
    %v2202 = vsub.s32 0, %v2201
    %v2203 = vrot.slane %v2157, %v2202
    %v2204 = vlaneseq
    %v2205 = vshrl.u32 %v2204, 7
    %v2206 = vsub.s32 1, %v2205
    %v2207 = vrot.slane %v2157, %v2206
    %v2208 = vlaneseq
    %v2209 = vshrl.u32 %v2208, 7
    %v2210 = vsub.s32 2, %v2209
    %v2211 = vrot.slane %v2157, %v2210
    %v2212 = vlaneseq
    %v2213 = vshrl.u32 %v2212, 7
    %v2214 = vsub.s32 3, %v2213
    %v2215 = vrot.slane %v2157, %v2214
    %v2220 = vadd.f32 %v2195, %v2203
    %v2221 = vadd.f32 %v2196, %v2207
    %v2222 = vadd.f32 %v2197, %v2211
    %v2223 = vadd.f32 %v2198, %v2215
    %v2224 = vmax.f32 %v2220, 0.0
    %v2225 = vmax.f32 %v2221, 0.0
    %v2226 = vmax.f32 %v2222, 0.0
    %v2227 = vmax.f32 %v2223, 0.0
    %v2228 = vpack.c.bf16 %v2224, %v2224
    %v2229 = vpack.c.bf16 %v2225, %v2225
    %v2230 = vpack.c.bf16 %v2226, %v2226
    %v2231 = vpack.c.bf16 %v2227, %v2227
    %s2232 = scalar_lea.vmem [#allocation4], 2048
    %v2233 = vld [vmem:[%s2232] sm:$0xff]
    %v2234 = vld [vmem:[%s2232 + $0x8] sm:$0xff]
    %v2235 = vld [vmem:[%s2232 + $0x10] sm:$0xff]
    %v2236 = vld [vmem:[%s2232 + $0x18] sm:$0xff]
    %v2237 = vld [vmem:[%s2232 + $0x20] sm:$0xff]
    %v2238 = vld [vmem:[%s2232 + $0x28] sm:$0xff]
    %v2239 = vld [vmem:[%s2232 + $0x30] sm:$0xff]
    %v2240 = vld [vmem:[%s2232 + $0x38] sm:$0xff]
    %v2241 = vld [vmem:[%s2232 + $0x40] sm:$0xff]
    %v2242 = vld [vmem:[%s2232 + $0x48] sm:$0xff]
    %v2243 = vld [vmem:[%s2232 + $0x50] sm:$0xff]
    %v2244 = vld [vmem:[%s2232 + $0x58] sm:$0xff]
    %v2245 = vld [vmem:[%s2232 + $0x60] sm:$0xff]
    %v2246 = vld [vmem:[%s2232 + $0x68] sm:$0xff]
    %v2247 = vld [vmem:[%s2232 + $0x70] sm:$0xff]
    %v2248 = vld [vmem:[%s2232 + $0x78] sm:$0xff]
    %v2249 = vld [vmem:[%s2232 + $0x80] sm:$0xff]
    %v2250 = vld [vmem:[%s2232 + $0x88] sm:$0xff]
    %v2251 = vld [vmem:[%s2232 + $0x90] sm:$0xff]
    %v2252 = vld [vmem:[%s2232 + $0x98] sm:$0xff]
    %v2253 = vld [vmem:[%s2232 + $0xa0] sm:$0xff]
    %v2254 = vld [vmem:[%s2232 + $0xa8] sm:$0xff]
    %v2255 = vld [vmem:[%s2232 + $0xb0] sm:$0xff]
    %v2256 = vld [vmem:[%s2232 + $0xb8] sm:$0xff]
    %v2257 = vld [vmem:[%s2232 + $0xc0] sm:$0xff]
    %v2258 = vld [vmem:[%s2232 + $0xc8] sm:$0xff]
    %v2259 = vld [vmem:[%s2232 + $0xd0] sm:$0xff]
    %v2260 = vld [vmem:[%s2232 + $0xd8] sm:$0xff]
    %v2261 = vld [vmem:[%s2232 + $0xe0] sm:$0xff]
    %v2262 = vld [vmem:[%s2232 + $0xe8] sm:$0xff]
    %v2263 = vld [vmem:[%s2232 + $0xf0] sm:$0xff]
    %v2264 = vld [vmem:[%s2232 + $0xf8] sm:$0xff]
    %v2265 = vld [vmem:[%s2232 + $0x100] sm:$0xff]
    %v2266 = vld [vmem:[%s2232 + $0x108] sm:$0xff]
    %v2267 = vld [vmem:[%s2232 + $0x110] sm:$0xff]
    %v2268 = vld [vmem:[%s2232 + $0x118] sm:$0xff]
    %v2269 = vld [vmem:[%s2232 + $0x120] sm:$0xff]
    %v2270 = vld [vmem:[%s2232 + $0x128] sm:$0xff]
    %v2271 = vld [vmem:[%s2232 + $0x130] sm:$0xff]
    %v2272 = vld [vmem:[%s2232 + $0x138] sm:$0xff]
    %v2273 = vld [vmem:[%s2232 + $0x140] sm:$0xff]
    %v2274 = vld [vmem:[%s2232 + $0x148] sm:$0xff]
    %v2275 = vld [vmem:[%s2232 + $0x150] sm:$0xff]
    %v2276 = vld [vmem:[%s2232 + $0x158] sm:$0xff]
    %v2277 = vld [vmem:[%s2232 + $0x160] sm:$0xff]
    %v2278 = vld [vmem:[%s2232 + $0x168] sm:$0xff]
    %v2279 = vld [vmem:[%s2232 + $0x170] sm:$0xff]
    %v2280 = vld [vmem:[%s2232 + $0x178] sm:$0xff]
    %v2281 = vld [vmem:[%s2232 + $0x180] sm:$0xff]
    %v2282 = vld [vmem:[%s2232 + $0x188] sm:$0xff]
    %v2283 = vld [vmem:[%s2232 + $0x190] sm:$0xff]
    %v2284 = vld [vmem:[%s2232 + $0x198] sm:$0xff]
    %v2285 = vld [vmem:[%s2232 + $0x1a0] sm:$0xff]
    %v2286 = vld [vmem:[%s2232 + $0x1a8] sm:$0xff]
    %v2287 = vld [vmem:[%s2232 + $0x1b0] sm:$0xff]
    %v2288 = vld [vmem:[%s2232 + $0x1b8] sm:$0xff]
    %v2289 = vld [vmem:[%s2232 + $0x1c0] sm:$0xff]
    %v2290 = vld [vmem:[%s2232 + $0x1c8] sm:$0xff]
    %v2291 = vld [vmem:[%s2232 + $0x1d0] sm:$0xff]
    %v2292 = vld [vmem:[%s2232 + $0x1d8] sm:$0xff]
    %v2293 = vld [vmem:[%s2232 + $0x1e0] sm:$0xff]
    %v2294 = vld [vmem:[%s2232 + $0x1e8] sm:$0xff]
    %v2295 = vld [vmem:[%s2232 + $0x1f0] sm:$0xff]
    %v2296 = vld [vmem:[%s2232 + $0x1f8] sm:$0xff]
    %v2297 = vld [vmem:[%s2232 + $0x200] sm:$0xff]
    %v2298 = vld [vmem:[%s2232 + $0x208] sm:$0xff]
    %v2299 = vld [vmem:[%s2232 + $0x210] sm:$0xff]
    %v2300 = vld [vmem:[%s2232 + $0x218] sm:$0xff]
    %v2301 = vld [vmem:[%s2232 + $0x220] sm:$0xff]
    %v2302 = vld [vmem:[%s2232 + $0x228] sm:$0xff]
    %v2303 = vld [vmem:[%s2232 + $0x230] sm:$0xff]
    %v2304 = vld [vmem:[%s2232 + $0x238] sm:$0xff]
    %v2305 = vld [vmem:[%s2232 + $0x240] sm:$0xff]
    %v2306 = vld [vmem:[%s2232 + $0x248] sm:$0xff]
    %v2307 = vld [vmem:[%s2232 + $0x250] sm:$0xff]
    %v2308 = vld [vmem:[%s2232 + $0x258] sm:$0xff]
    %v2309 = vld [vmem:[%s2232 + $0x260] sm:$0xff]
    %v2310 = vld [vmem:[%s2232 + $0x268] sm:$0xff]
    %v2311 = vld [vmem:[%s2232 + $0x270] sm:$0xff]
    %v2312 = vld [vmem:[%s2232 + $0x278] sm:$0xff]
    %v2313 = vld [vmem:[%s2232 + $0x280] sm:$0xff]
    %v2314 = vld [vmem:[%s2232 + $0x288] sm:$0xff]
    %v2315 = vld [vmem:[%s2232 + $0x290] sm:$0xff]
    %v2316 = vld [vmem:[%s2232 + $0x298] sm:$0xff]
    %v2317 = vld [vmem:[%s2232 + $0x2a0] sm:$0xff]
    %v2318 = vld [vmem:[%s2232 + $0x2a8] sm:$0xff]
    %v2319 = vld [vmem:[%s2232 + $0x2b0] sm:$0xff]
    %v2320 = vld [vmem:[%s2232 + $0x2b8] sm:$0xff]
    %v2321 = vld [vmem:[%s2232 + $0x2c0] sm:$0xff]
    %v2322 = vld [vmem:[%s2232 + $0x2c8] sm:$0xff]
    %v2323 = vld [vmem:[%s2232 + $0x2d0] sm:$0xff]
    %v2324 = vld [vmem:[%s2232 + $0x2d8] sm:$0xff]
    %v2325 = vld [vmem:[%s2232 + $0x2e0] sm:$0xff]
    %v2326 = vld [vmem:[%s2232 + $0x2e8] sm:$0xff]
    %v2327 = vld [vmem:[%s2232 + $0x2f0] sm:$0xff]
    %v2328 = vld [vmem:[%s2232 + $0x2f8] sm:$0xff]
    %v2329 = vld [vmem:[%s2232 + $0x300] sm:$0xff]
    %v2330 = vld [vmem:[%s2232 + $0x308] sm:$0xff]
    %v2331 = vld [vmem:[%s2232 + $0x310] sm:$0xff]
    %v2332 = vld [vmem:[%s2232 + $0x318] sm:$0xff]
    %v2333 = vld [vmem:[%s2232 + $0x320] sm:$0xff]
    %v2334 = vld [vmem:[%s2232 + $0x328] sm:$0xff]
    %v2335 = vld [vmem:[%s2232 + $0x330] sm:$0xff]
    %v2336 = vld [vmem:[%s2232 + $0x338] sm:$0xff]
    %v2337 = vld [vmem:[%s2232 + $0x340] sm:$0xff]
    %v2338 = vld [vmem:[%s2232 + $0x348] sm:$0xff]
    %v2339 = vld [vmem:[%s2232 + $0x350] sm:$0xff]
    %v2340 = vld [vmem:[%s2232 + $0x358] sm:$0xff]
    %v2341 = vld [vmem:[%s2232 + $0x360] sm:$0xff]
    %v2342 = vld [vmem:[%s2232 + $0x368] sm:$0xff]
    %v2343 = vld [vmem:[%s2232 + $0x370] sm:$0xff]
    %v2344 = vld [vmem:[%s2232 + $0x378] sm:$0xff]
    %v2345 = vld [vmem:[%s2232 + $0x380] sm:$0xff]
    %v2346 = vld [vmem:[%s2232 + $0x388] sm:$0xff]
    %v2347 = vld [vmem:[%s2232 + $0x390] sm:$0xff]
    %v2348 = vld [vmem:[%s2232 + $0x398] sm:$0xff]
    %v2349 = vld [vmem:[%s2232 + $0x3a0] sm:$0xff]
    %v2350 = vld [vmem:[%s2232 + $0x3a8] sm:$0xff]
    %v2351 = vld [vmem:[%s2232 + $0x3b0] sm:$0xff]
    %v2352 = vld [vmem:[%s2232 + $0x3b8] sm:$0xff]
    %v2353 = vld [vmem:[%s2232 + $0x3c0] sm:$0xff]
    %v2354 = vld [vmem:[%s2232 + $0x3c8] sm:$0xff]
    %v2355 = vld [vmem:[%s2232 + $0x3d0] sm:$0xff]
    %v2356 = vld [vmem:[%s2232 + $0x3d8] sm:$0xff]
    %v2357 = vld [vmem:[%s2232 + $0x3e0] sm:$0xff]
    %v2358 = vld [vmem:[%s2232 + $0x3e8] sm:$0xff]
    %v2359 = vld [vmem:[%s2232 + $0x3f0] sm:$0xff]
    %v2360 = vld [vmem:[%s2232 + $0x3f8] sm:$0xff]
    %v2489 = vunpack.c.l.b16 %v2233
    %v2490 = vunpack.c.h.b16 %v2233
    %v2491 = vunpack.c.l.b16 %v2234
    %v2492 = vunpack.c.h.b16 %v2234
    %v2493 = vunpack.c.l.b16 %v2235
    %v2494 = vunpack.c.h.b16 %v2235
    %v2495 = vunpack.c.l.b16 %v2236
    %v2496 = vunpack.c.h.b16 %v2236
    %v2497 = vunpack.c.l.b16 %v2237
    %v2498 = vunpack.c.h.b16 %v2237
    %v2499 = vunpack.c.l.b16 %v2238
    %v2500 = vunpack.c.h.b16 %v2238
    %v2501 = vunpack.c.l.b16 %v2239
    %v2502 = vunpack.c.h.b16 %v2239
    %v2503 = vunpack.c.l.b16 %v2240
    %v2504 = vunpack.c.h.b16 %v2240
    %v2505 = vunpack.c.l.b16 %v2241
    %v2506 = vunpack.c.h.b16 %v2241
    %v2507 = vunpack.c.l.b16 %v2242
    %v2508 = vunpack.c.h.b16 %v2242
    %v2509 = vunpack.c.l.b16 %v2243
    %v2510 = vunpack.c.h.b16 %v2243
    %v2511 = vunpack.c.l.b16 %v2244
    %v2512 = vunpack.c.h.b16 %v2244
    %v2513 = vunpack.c.l.b16 %v2245
    %v2514 = vunpack.c.h.b16 %v2245
    %v2515 = vunpack.c.l.b16 %v2246
    %v2516 = vunpack.c.h.b16 %v2246
    %v2517 = vunpack.c.l.b16 %v2247
    %v2518 = vunpack.c.h.b16 %v2247
    %v2519 = vunpack.c.l.b16 %v2248
    %v2520 = vunpack.c.h.b16 %v2248
    %v2521 = vunpack.c.l.b16 %v2249
    %v2522 = vunpack.c.h.b16 %v2249
    %v2523 = vunpack.c.l.b16 %v2250
    %v2524 = vunpack.c.h.b16 %v2250
    %v2525 = vunpack.c.l.b16 %v2251
    %v2526 = vunpack.c.h.b16 %v2251
    %v2527 = vunpack.c.l.b16 %v2252
    %v2528 = vunpack.c.h.b16 %v2252
    %v2529 = vunpack.c.l.b16 %v2253
    %v2530 = vunpack.c.h.b16 %v2253
    %v2531 = vunpack.c.l.b16 %v2254
    %v2532 = vunpack.c.h.b16 %v2254
    %v2533 = vunpack.c.l.b16 %v2255
    %v2534 = vunpack.c.h.b16 %v2255
    %v2535 = vunpack.c.l.b16 %v2256
    %v2536 = vunpack.c.h.b16 %v2256
    %v2537 = vunpack.c.l.b16 %v2257
    %v2538 = vunpack.c.h.b16 %v2257
    %v2539 = vunpack.c.l.b16 %v2258
    %v2540 = vunpack.c.h.b16 %v2258
    %v2541 = vunpack.c.l.b16 %v2259
    %v2542 = vunpack.c.h.b16 %v2259
    %v2543 = vunpack.c.l.b16 %v2260
    %v2544 = vunpack.c.h.b16 %v2260
    %v2545 = vunpack.c.l.b16 %v2261
    %v2546 = vunpack.c.h.b16 %v2261
    %v2547 = vunpack.c.l.b16 %v2262
    %v2548 = vunpack.c.h.b16 %v2262
    %v2549 = vunpack.c.l.b16 %v2263
    %v2550 = vunpack.c.h.b16 %v2263
    %v2551 = vunpack.c.l.b16 %v2264
    %v2552 = vunpack.c.h.b16 %v2264
    %v2553 = vunpack.c.l.b16 %v2265
    %v2554 = vunpack.c.h.b16 %v2265
    %v2555 = vunpack.c.l.b16 %v2266
    %v2556 = vunpack.c.h.b16 %v2266
    %v2557 = vunpack.c.l.b16 %v2267
    %v2558 = vunpack.c.h.b16 %v2267
    %v2559 = vunpack.c.l.b16 %v2268
    %v2560 = vunpack.c.h.b16 %v2268
    %v2561 = vunpack.c.l.b16 %v2269
    %v2562 = vunpack.c.h.b16 %v2269
    %v2563 = vunpack.c.l.b16 %v2270
    %v2564 = vunpack.c.h.b16 %v2270
    %v2565 = vunpack.c.l.b16 %v2271
    %v2566 = vunpack.c.h.b16 %v2271
    %v2567 = vunpack.c.l.b16 %v2272
    %v2568 = vunpack.c.h.b16 %v2272
    %v2569 = vunpack.c.l.b16 %v2273
    %v2570 = vunpack.c.h.b16 %v2273
    %v2571 = vunpack.c.l.b16 %v2274
    %v2572 = vunpack.c.h.b16 %v2274
    %v2573 = vunpack.c.l.b16 %v2275
    %v2574 = vunpack.c.h.b16 %v2275
    %v2575 = vunpack.c.l.b16 %v2276
    %v2576 = vunpack.c.h.b16 %v2276
    %v2577 = vunpack.c.l.b16 %v2277
    %v2578 = vunpack.c.h.b16 %v2277
    %v2579 = vunpack.c.l.b16 %v2278
    %v2580 = vunpack.c.h.b16 %v2278
    %v2581 = vunpack.c.l.b16 %v2279
    %v2582 = vunpack.c.h.b16 %v2279
    %v2583 = vunpack.c.l.b16 %v2280
    %v2584 = vunpack.c.h.b16 %v2280
    %v2585 = vunpack.c.l.b16 %v2281
    %v2586 = vunpack.c.h.b16 %v2281
    %v2587 = vunpack.c.l.b16 %v2282
    %v2588 = vunpack.c.h.b16 %v2282
    %v2589 = vunpack.c.l.b16 %v2283
    %v2590 = vunpack.c.h.b16 %v2283
    %v2591 = vunpack.c.l.b16 %v2284
    %v2592 = vunpack.c.h.b16 %v2284
    %v2593 = vunpack.c.l.b16 %v2285
    %v2594 = vunpack.c.h.b16 %v2285
    %v2595 = vunpack.c.l.b16 %v2286
    %v2596 = vunpack.c.h.b16 %v2286
    %v2597 = vunpack.c.l.b16 %v2287
    %v2598 = vunpack.c.h.b16 %v2287
    %v2599 = vunpack.c.l.b16 %v2288
    %v2600 = vunpack.c.h.b16 %v2288
    %v2601 = vunpack.c.l.b16 %v2289
    %v2602 = vunpack.c.h.b16 %v2289
    %v2603 = vunpack.c.l.b16 %v2290
    %v2604 = vunpack.c.h.b16 %v2290
    %v2605 = vunpack.c.l.b16 %v2291
    %v2606 = vunpack.c.h.b16 %v2291
    %v2607 = vunpack.c.l.b16 %v2292
    %v2608 = vunpack.c.h.b16 %v2292
    %v2609 = vunpack.c.l.b16 %v2293
    %v2610 = vunpack.c.h.b16 %v2293
    %v2611 = vunpack.c.l.b16 %v2294
    %v2612 = vunpack.c.h.b16 %v2294
    %v2613 = vunpack.c.l.b16 %v2295
    %v2614 = vunpack.c.h.b16 %v2295
    %v2615 = vunpack.c.l.b16 %v2296
    %v2616 = vunpack.c.h.b16 %v2296
    %v2617 = vunpack.c.l.b16 %v2297
    %v2618 = vunpack.c.h.b16 %v2297
    %v2619 = vunpack.c.l.b16 %v2298
    %v2620 = vunpack.c.h.b16 %v2298
    %v2621 = vunpack.c.l.b16 %v2299
    %v2622 = vunpack.c.h.b16 %v2299
    %v2623 = vunpack.c.l.b16 %v2300
    %v2624 = vunpack.c.h.b16 %v2300
    %v2625 = vunpack.c.l.b16 %v2301
    %v2626 = vunpack.c.h.b16 %v2301
    %v2627 = vunpack.c.l.b16 %v2302
    %v2628 = vunpack.c.h.b16 %v2302
    %v2629 = vunpack.c.l.b16 %v2303
    %v2630 = vunpack.c.h.b16 %v2303
    %v2631 = vunpack.c.l.b16 %v2304
    %v2632 = vunpack.c.h.b16 %v2304
    %v2633 = vunpack.c.l.b16 %v2305
    %v2634 = vunpack.c.h.b16 %v2305
    %v2635 = vunpack.c.l.b16 %v2306
    %v2636 = vunpack.c.h.b16 %v2306
    %v2637 = vunpack.c.l.b16 %v2307
    %v2638 = vunpack.c.h.b16 %v2307
    %v2639 = vunpack.c.l.b16 %v2308
    %v2640 = vunpack.c.h.b16 %v2308
    %v2641 = vunpack.c.l.b16 %v2309
    %v2642 = vunpack.c.h.b16 %v2309
    %v2643 = vunpack.c.l.b16 %v2310
    %v2644 = vunpack.c.h.b16 %v2310
    %v2645 = vunpack.c.l.b16 %v2311
    %v2646 = vunpack.c.h.b16 %v2311
    %v2647 = vunpack.c.l.b16 %v2312
    %v2648 = vunpack.c.h.b16 %v2312
    %v2649 = vunpack.c.l.b16 %v2313
    %v2650 = vunpack.c.h.b16 %v2313
    %v2651 = vunpack.c.l.b16 %v2314
    %v2652 = vunpack.c.h.b16 %v2314
    %v2653 = vunpack.c.l.b16 %v2315
    %v2654 = vunpack.c.h.b16 %v2315
    %v2655 = vunpack.c.l.b16 %v2316
    %v2656 = vunpack.c.h.b16 %v2316
    %v2657 = vunpack.c.l.b16 %v2317
    %v2658 = vunpack.c.h.b16 %v2317
    %v2659 = vunpack.c.l.b16 %v2318
    %v2660 = vunpack.c.h.b16 %v2318
    %v2661 = vunpack.c.l.b16 %v2319
    %v2662 = vunpack.c.h.b16 %v2319
    %v2663 = vunpack.c.l.b16 %v2320
    %v2664 = vunpack.c.h.b16 %v2320
    %v2665 = vunpack.c.l.b16 %v2321
    %v2666 = vunpack.c.h.b16 %v2321
    %v2667 = vunpack.c.l.b16 %v2322
    %v2668 = vunpack.c.h.b16 %v2322
    %v2669 = vunpack.c.l.b16 %v2323
    %v2670 = vunpack.c.h.b16 %v2323
    %v2671 = vunpack.c.l.b16 %v2324
    %v2672 = vunpack.c.h.b16 %v2324
    %v2673 = vunpack.c.l.b16 %v2325
    %v2674 = vunpack.c.h.b16 %v2325
    %v2675 = vunpack.c.l.b16 %v2326
    %v2676 = vunpack.c.h.b16 %v2326
    %v2677 = vunpack.c.l.b16 %v2327
    %v2678 = vunpack.c.h.b16 %v2327
    %v2679 = vunpack.c.l.b16 %v2328
    %v2680 = vunpack.c.h.b16 %v2328
    %v2681 = vunpack.c.l.b16 %v2329
    %v2682 = vunpack.c.h.b16 %v2329
    %v2683 = vunpack.c.l.b16 %v2330
    %v2684 = vunpack.c.h.b16 %v2330
    %v2685 = vunpack.c.l.b16 %v2331
    %v2686 = vunpack.c.h.b16 %v2331
    %v2687 = vunpack.c.l.b16 %v2332
    %v2688 = vunpack.c.h.b16 %v2332
    %v2689 = vunpack.c.l.b16 %v2333
    %v2690 = vunpack.c.h.b16 %v2333
    %v2691 = vunpack.c.l.b16 %v2334
    %v2692 = vunpack.c.h.b16 %v2334
    %v2693 = vunpack.c.l.b16 %v2335
    %v2694 = vunpack.c.h.b16 %v2335
    %v2695 = vunpack.c.l.b16 %v2336
    %v2696 = vunpack.c.h.b16 %v2336
    %v2697 = vunpack.c.l.b16 %v2337
    %v2698 = vunpack.c.h.b16 %v2337
    %v2699 = vunpack.c.l.b16 %v2338
    %v2700 = vunpack.c.h.b16 %v2338
    %v2701 = vunpack.c.l.b16 %v2339
    %v2702 = vunpack.c.h.b16 %v2339
    %v2703 = vunpack.c.l.b16 %v2340
    %v2704 = vunpack.c.h.b16 %v2340
    %v2705 = vunpack.c.l.b16 %v2341
    %v2706 = vunpack.c.h.b16 %v2341
    %v2707 = vunpack.c.l.b16 %v2342
    %v2708 = vunpack.c.h.b16 %v2342
    %v2709 = vunpack.c.l.b16 %v2343
    %v2710 = vunpack.c.h.b16 %v2343
    %v2711 = vunpack.c.l.b16 %v2344
    %v2712 = vunpack.c.h.b16 %v2344
    %v2713 = vunpack.c.l.b16 %v2345
    %v2714 = vunpack.c.h.b16 %v2345
    %v2715 = vunpack.c.l.b16 %v2346
    %v2716 = vunpack.c.h.b16 %v2346
    %v2717 = vunpack.c.l.b16 %v2347
    %v2718 = vunpack.c.h.b16 %v2347
    %v2719 = vunpack.c.l.b16 %v2348
    %v2720 = vunpack.c.h.b16 %v2348
    %v2721 = vunpack.c.l.b16 %v2349
    %v2722 = vunpack.c.h.b16 %v2349
    %v2723 = vunpack.c.l.b16 %v2350
    %v2724 = vunpack.c.h.b16 %v2350
    %v2725 = vunpack.c.l.b16 %v2351
    %v2726 = vunpack.c.h.b16 %v2351
    %v2727 = vunpack.c.l.b16 %v2352
    %v2728 = vunpack.c.h.b16 %v2352
    %v2729 = vunpack.c.l.b16 %v2353
    %v2730 = vunpack.c.h.b16 %v2353
    %v2731 = vunpack.c.l.b16 %v2354
    %v2732 = vunpack.c.h.b16 %v2354
    %v2733 = vunpack.c.l.b16 %v2355
    %v2734 = vunpack.c.h.b16 %v2355
    %v2735 = vunpack.c.l.b16 %v2356
    %v2736 = vunpack.c.h.b16 %v2356
    %v2737 = vunpack.c.l.b16 %v2357
    %v2738 = vunpack.c.h.b16 %v2357
    %v2739 = vunpack.c.l.b16 %v2358
    %v2740 = vunpack.c.h.b16 %v2358
    %v2741 = vunpack.c.l.b16 %v2359
    %v2742 = vunpack.c.h.b16 %v2359
    %v2743 = vunpack.c.l.b16 %v2360
    %v2744 = vunpack.c.h.b16 %v2360
    %v2745 = vpack.c.b16 %v2493, %v2489
    %v2746 = vpack.c.b16 %v2494, %v2490
    %v2747 = vpack.c.b16 %v2495, %v2491
    %v2748 = vpack.c.b16 %v2496, %v2492
    %v2749 = vpack.c.b16 %v2501, %v2497
    %v2750 = vpack.c.b16 %v2502, %v2498
    %v2751 = vpack.c.b16 %v2503, %v2499
    %v2752 = vpack.c.b16 %v2504, %v2500
    %v2753 = vpack.c.b16 %v2509, %v2505
    %v2754 = vpack.c.b16 %v2510, %v2506
    %v2755 = vpack.c.b16 %v2511, %v2507
    %v2756 = vpack.c.b16 %v2512, %v2508
    %v2757 = vpack.c.b16 %v2517, %v2513
    %v2758 = vpack.c.b16 %v2518, %v2514
    %v2759 = vpack.c.b16 %v2519, %v2515
    %v2760 = vpack.c.b16 %v2520, %v2516
    %v2761 = vpack.c.b16 %v2525, %v2521
    %v2762 = vpack.c.b16 %v2526, %v2522
    %v2763 = vpack.c.b16 %v2527, %v2523
    %v2764 = vpack.c.b16 %v2528, %v2524
    %v2765 = vpack.c.b16 %v2533, %v2529
    %v2766 = vpack.c.b16 %v2534, %v2530
    %v2767 = vpack.c.b16 %v2535, %v2531
    %v2768 = vpack.c.b16 %v2536, %v2532
    %v2769 = vpack.c.b16 %v2541, %v2537
    %v2770 = vpack.c.b16 %v2542, %v2538
    %v2771 = vpack.c.b16 %v2543, %v2539
    %v2772 = vpack.c.b16 %v2544, %v2540
    %v2773 = vpack.c.b16 %v2549, %v2545
    %v2774 = vpack.c.b16 %v2550, %v2546
    %v2775 = vpack.c.b16 %v2551, %v2547
    %v2776 = vpack.c.b16 %v2552, %v2548
    %v2777 = vpack.c.b16 %v2557, %v2553
    %v2778 = vpack.c.b16 %v2558, %v2554
    %v2779 = vpack.c.b16 %v2559, %v2555
    %v2780 = vpack.c.b16 %v2560, %v2556
    %v2781 = vpack.c.b16 %v2565, %v2561
    %v2782 = vpack.c.b16 %v2566, %v2562
    %v2783 = vpack.c.b16 %v2567, %v2563
    %v2784 = vpack.c.b16 %v2568, %v2564
    %v2785 = vpack.c.b16 %v2573, %v2569
    %v2786 = vpack.c.b16 %v2574, %v2570
    %v2787 = vpack.c.b16 %v2575, %v2571
    %v2788 = vpack.c.b16 %v2576, %v2572
    %v2789 = vpack.c.b16 %v2581, %v2577
    %v2790 = vpack.c.b16 %v2582, %v2578
    %v2791 = vpack.c.b16 %v2583, %v2579
    %v2792 = vpack.c.b16 %v2584, %v2580
    %v2793 = vpack.c.b16 %v2589, %v2585
    %v2794 = vpack.c.b16 %v2590, %v2586
    %v2795 = vpack.c.b16 %v2591, %v2587
    %v2796 = vpack.c.b16 %v2592, %v2588
    %v2797 = vpack.c.b16 %v2597, %v2593
    %v2798 = vpack.c.b16 %v2598, %v2594
    %v2799 = vpack.c.b16 %v2599, %v2595
    %v2800 = vpack.c.b16 %v2600, %v2596
    %v2801 = vpack.c.b16 %v2605, %v2601
    %v2802 = vpack.c.b16 %v2606, %v2602
    %v2803 = vpack.c.b16 %v2607, %v2603
    %v2804 = vpack.c.b16 %v2608, %v2604
    %v2805 = vpack.c.b16 %v2613, %v2609
    %v2806 = vpack.c.b16 %v2614, %v2610
    %v2807 = vpack.c.b16 %v2615, %v2611
    %v2808 = vpack.c.b16 %v2616, %v2612
    %v2809 = vpack.c.b16 %v2621, %v2617
    %v2810 = vpack.c.b16 %v2622, %v2618
    %v2811 = vpack.c.b16 %v2623, %v2619
    %v2812 = vpack.c.b16 %v2624, %v2620
    %v2813 = vpack.c.b16 %v2629, %v2625
    %v2814 = vpack.c.b16 %v2630, %v2626
    %v2815 = vpack.c.b16 %v2631, %v2627
    %v2816 = vpack.c.b16 %v2632, %v2628
    %v2817 = vpack.c.b16 %v2637, %v2633
    %v2818 = vpack.c.b16 %v2638, %v2634
    %v2819 = vpack.c.b16 %v2639, %v2635
    %v2820 = vpack.c.b16 %v2640, %v2636
    %v2821 = vpack.c.b16 %v2645, %v2641
    %v2822 = vpack.c.b16 %v2646, %v2642
    %v2823 = vpack.c.b16 %v2647, %v2643
    %v2824 = vpack.c.b16 %v2648, %v2644
    %v2825 = vpack.c.b16 %v2653, %v2649
    %v2826 = vpack.c.b16 %v2654, %v2650
    %v2827 = vpack.c.b16 %v2655, %v2651
    %v2828 = vpack.c.b16 %v2656, %v2652
    %v2829 = vpack.c.b16 %v2661, %v2657
    %v2830 = vpack.c.b16 %v2662, %v2658
    %v2831 = vpack.c.b16 %v2663, %v2659
    %v2832 = vpack.c.b16 %v2664, %v2660
    %v2833 = vpack.c.b16 %v2669, %v2665
    %v2834 = vpack.c.b16 %v2670, %v2666
    %v2835 = vpack.c.b16 %v2671, %v2667
    %v2836 = vpack.c.b16 %v2672, %v2668
    %v2837 = vpack.c.b16 %v2677, %v2673
    %v2838 = vpack.c.b16 %v2678, %v2674
    %v2839 = vpack.c.b16 %v2679, %v2675
    %v2840 = vpack.c.b16 %v2680, %v2676
    %v2841 = vpack.c.b16 %v2685, %v2681
    %v2842 = vpack.c.b16 %v2686, %v2682
    %v2843 = vpack.c.b16 %v2687, %v2683
    %v2844 = vpack.c.b16 %v2688, %v2684
    %v2845 = vpack.c.b16 %v2693, %v2689
    %v2846 = vpack.c.b16 %v2694, %v2690
    %v2847 = vpack.c.b16 %v2695, %v2691
    %v2848 = vpack.c.b16 %v2696, %v2692
    %v2849 = vpack.c.b16 %v2701, %v2697
    %v2850 = vpack.c.b16 %v2702, %v2698
    %v2851 = vpack.c.b16 %v2703, %v2699
    %v2852 = vpack.c.b16 %v2704, %v2700
    %v2853 = vpack.c.b16 %v2709, %v2705
    %v2854 = vpack.c.b16 %v2710, %v2706
    %v2855 = vpack.c.b16 %v2711, %v2707
    %v2856 = vpack.c.b16 %v2712, %v2708
    %v2857 = vpack.c.b16 %v2717, %v2713
    %v2858 = vpack.c.b16 %v2718, %v2714
    %v2859 = vpack.c.b16 %v2719, %v2715
    %v2860 = vpack.c.b16 %v2720, %v2716
    %v2861 = vpack.c.b16 %v2725, %v2721
    %v2862 = vpack.c.b16 %v2726, %v2722
    %v2863 = vpack.c.b16 %v2727, %v2723
    %v2864 = vpack.c.b16 %v2728, %v2724
    %v2865 = vpack.c.b16 %v2733, %v2729
    %v2866 = vpack.c.b16 %v2734, %v2730
    %v2867 = vpack.c.b16 %v2735, %v2731
    %v2868 = vpack.c.b16 %v2736, %v2732
    %v2869 = vpack.c.b16 %v2741, %v2737
    %v2870 = vpack.c.b16 %v2742, %v2738
    %v2871 = vpack.c.b16 %v2743, %v2739
    %v2872 = vpack.c.b16 %v2744, %v2740
    %3001 = vmatprep.subr.bf16.mxu0 %v2774
    %3002 = vmatpush1.bf16.msra.mxu0 %v2773
    %3003 = vmatprep.subr.bf16.mxu0 %v2770
    %3004 = vmatpush1.bf16.msra.mxu0 %v2769
    %3005 = vmatprep.subr.bf16.mxu0 %v2766
    %3006 = vmatpush1.bf16.msra.mxu0 %v2765
    %3007 = vmatprep.subr.bf16.mxu0 %v2762
    %3008 = vmatpush1.bf16.msra.mxu0 %v2761
    %3009 = vmatprep.subr.bf16.mxu0 %v2758
    %3010 = vmatpush1.bf16.msra.mxu0 %v2757
    %3011 = vmatprep.subr.bf16.mxu0 %v2754
    %3012 = vmatpush1.bf16.msra.mxu0 %v2753
    %3013 = vmatprep.subr.bf16.mxu0 %v2750
    %3014 = vmatpush1.bf16.msra.mxu0 %v2749
    %3015 = vmatprep.subr.bf16.mxu0 %v2746
    %3016 = vmatpush1.bf16.msra.mxu0 %v2745
    %3017 = vmatprep.subr.bf16.mxu0 %v2806
    %3018 = vmatpush2.bf16.msra.mxu0 %v2805
    %3019 = vmatprep.subr.bf16.mxu0 %v2802
    %3020 = vmatpush2.bf16.msra.mxu0 %v2801
    %3021 = vmatprep.subr.bf16.mxu0 %v2798
    %3022 = vmatpush2.bf16.msra.mxu0 %v2797
    %3023 = vmatprep.subr.bf16.mxu0 %v2794
    %3024 = vmatpush2.bf16.msra.mxu0 %v2793
    %3025 = vmatprep.subr.bf16.mxu0 %v2790
    %3026 = vmatpush2.bf16.msra.mxu0 %v2789
    %3027 = vmatprep.subr.bf16.mxu0 %v2786
    %3028 = vmatpush2.bf16.msra.mxu0 %v2785
    %3029 = vmatprep.subr.bf16.mxu0 %v2782
    %3030 = vmatpush2.bf16.msra.mxu0 %v2781
    %3031 = vmatprep.subr.bf16.mxu0 %v2778
    %3032 = vmatpush2.bf16.msra.mxu0 %v2777
    %3033 = vmatprep.mubr.bf16.mxu0 %v2229
    %3034 = vmatmul.mubr.bf16.gmra.mxu0 %v2228
    %v3035 = vpop.f32.mrf.mxu0
    %v3036 = vadd.f32 0.0, %v3035
    %v3037 = vpop.f32.mrf.mxu0
    %v3038 = vadd.f32 0.0, %v3037
    %v3039 = vpop.f32.mrf.mxu0
    %v3040 = vpop.f32.mrf.mxu0
    %3041 = vdwg.mxu0
    %3042 = vmatprep.subr.bf16.mxu0 %v2838
    %3043 = vmatpush1.bf16.msra.mxu0 %v2837
    %3044 = vmatprep.subr.bf16.mxu0 %v2834
    %3045 = vmatpush1.bf16.msra.mxu0 %v2833
    %3046 = vmatprep.subr.bf16.mxu0 %v2830
    %3047 = vmatpush1.bf16.msra.mxu0 %v2829
    %3048 = vmatprep.subr.bf16.mxu0 %v2826
    %3049 = vmatpush1.bf16.msra.mxu0 %v2825
    %3050 = vmatprep.subr.bf16.mxu0 %v2822
    %3051 = vmatpush1.bf16.msra.mxu0 %v2821
    %3052 = vmatprep.subr.bf16.mxu0 %v2818
    %3053 = vmatpush1.bf16.msra.mxu0 %v2817
    %3054 = vmatprep.subr.bf16.mxu0 %v2814
    %3055 = vmatpush1.bf16.msra.mxu0 %v2813
    %3056 = vmatprep.subr.bf16.mxu0 %v2810
    %3057 = vmatpush1.bf16.msra.mxu0 %v2809
    %3058 = vmatprep.subr.bf16.mxu0 %v2870
    %3059 = vmatpush2.bf16.msra.mxu0 %v2869
    %3060 = vmatprep.subr.bf16.mxu0 %v2866
    %3061 = vmatpush2.bf16.msra.mxu0 %v2865
    %3062 = vmatprep.subr.bf16.mxu0 %v2862
    %3063 = vmatpush2.bf16.msra.mxu0 %v2861
    %3064 = vmatprep.subr.bf16.mxu0 %v2858
    %3065 = vmatpush2.bf16.msra.mxu0 %v2857
    %3066 = vmatprep.subr.bf16.mxu0 %v2854
    %3067 = vmatpush2.bf16.msra.mxu0 %v2853
    %3068 = vmatprep.subr.bf16.mxu0 %v2850
    %3069 = vmatpush2.bf16.msra.mxu0 %v2849
    %3070 = vmatprep.subr.bf16.mxu0 %v2846
    %3071 = vmatpush2.bf16.msra.mxu0 %v2845
    %3072 = vmatprep.subr.bf16.mxu0 %v2842
    %3073 = vmatpush2.bf16.msra.mxu0 %v2841
    %3074 = vmatprep.mubr.bf16.mxu0 %v2231
    %3075 = vmatmul.mubr.bf16.gmra.mxu0 %v2230
    %v3076 = vpop.f32.mrf.mxu0
    %v3077 = vadd.f32 %v3036, %v3076
    %v3078 = vpop.f32.mrf.mxu0
    %v3079 = vadd.f32 %v3038, %v3078
    %v3080 = vpop.f32.mrf.mxu0
    %v3081 = vpop.f32.mrf.mxu0
    %3082 = vdwg.mxu0
    %3083 = vmatprep.subr.bf16.mxu0 %v2776
    %3084 = vmatpush1.bf16.msra.mxu0 %v2775
    %3085 = vmatprep.subr.bf16.mxu0 %v2772
    %3086 = vmatpush1.bf16.msra.mxu0 %v2771
    %3087 = vmatprep.subr.bf16.mxu0 %v2768
    %3088 = vmatpush1.bf16.msra.mxu0 %v2767
    %3089 = vmatprep.subr.bf16.mxu0 %v2764
    %3090 = vmatpush1.bf16.msra.mxu0 %v2763
    %3091 = vmatprep.subr.bf16.mxu0 %v2760
    %3092 = vmatpush1.bf16.msra.mxu0 %v2759
    %3093 = vmatprep.subr.bf16.mxu0 %v2756
    %3094 = vmatpush1.bf16.msra.mxu0 %v2755
    %3095 = vmatprep.subr.bf16.mxu0 %v2752
    %3096 = vmatpush1.bf16.msra.mxu0 %v2751
    %3097 = vmatprep.subr.bf16.mxu0 %v2748
    %3098 = vmatpush1.bf16.msra.mxu0 %v2747
    %3099 = vmatprep.subr.bf16.mxu0 %v2808
    %3100 = vmatpush2.bf16.msra.mxu0 %v2807
    %3101 = vmatprep.subr.bf16.mxu0 %v2804
    %3102 = vmatpush2.bf16.msra.mxu0 %v2803
    %3103 = vmatprep.subr.bf16.mxu0 %v2800
    %3104 = vmatpush2.bf16.msra.mxu0 %v2799
    %3105 = vmatprep.subr.bf16.mxu0 %v2796
    %3106 = vmatpush2.bf16.msra.mxu0 %v2795
    %3107 = vmatprep.subr.bf16.mxu0 %v2792
    %3108 = vmatpush2.bf16.msra.mxu0 %v2791
    %3109 = vmatprep.subr.bf16.mxu0 %v2788
    %3110 = vmatpush2.bf16.msra.mxu0 %v2787
    %3111 = vmatprep.subr.bf16.mxu0 %v2784
    %3112 = vmatpush2.bf16.msra.mxu0 %v2783
    %3113 = vmatprep.subr.bf16.mxu0 %v2780
    %3114 = vmatpush2.bf16.msra.mxu0 %v2779
    %3115 = vmatprep.mubr.bf16.mxu0 %v2229
    %3116 = vmatmul.mubr.bf16.gmra.mxu0 %v2228
    %v3117 = vpop.f32.mrf.mxu0
    %v3118 = vadd.f32 0.0, %v3117
    %v3119 = vpop.f32.mrf.mxu0
    %v3120 = vadd.f32 0.0, %v3119
    %v3121 = vpop.f32.mrf.mxu0
    %v3122 = vpop.f32.mrf.mxu0
    %3123 = vdwg.mxu0
    %3124 = vmatprep.subr.bf16.mxu0 %v2840
    %3125 = vmatpush1.bf16.msra.mxu0 %v2839
    %3126 = vmatprep.subr.bf16.mxu0 %v2836
    %3127 = vmatpush1.bf16.msra.mxu0 %v2835
    %3128 = vmatprep.subr.bf16.mxu0 %v2832
    %3129 = vmatpush1.bf16.msra.mxu0 %v2831
    %3130 = vmatprep.subr.bf16.mxu0 %v2828
    %3131 = vmatpush1.bf16.msra.mxu0 %v2827
    %3132 = vmatprep.subr.bf16.mxu0 %v2824
    %3133 = vmatpush1.bf16.msra.mxu0 %v2823
    %3134 = vmatprep.subr.bf16.mxu0 %v2820
    %3135 = vmatpush1.bf16.msra.mxu0 %v2819
    %3136 = vmatprep.subr.bf16.mxu0 %v2816
    %3137 = vmatpush1.bf16.msra.mxu0 %v2815
    %3138 = vmatprep.subr.bf16.mxu0 %v2812
    %3139 = vmatpush1.bf16.msra.mxu0 %v2811
    %3140 = vmatprep.subr.bf16.mxu0 %v2872
    %3141 = vmatpush2.bf16.msra.mxu0 %v2871
    %3142 = vmatprep.subr.bf16.mxu0 %v2868
    %3143 = vmatpush2.bf16.msra.mxu0 %v2867
    %3144 = vmatprep.subr.bf16.mxu0 %v2864
    %3145 = vmatpush2.bf16.msra.mxu0 %v2863
    %3146 = vmatprep.subr.bf16.mxu0 %v2860
    %3147 = vmatpush2.bf16.msra.mxu0 %v2859
    %3148 = vmatprep.subr.bf16.mxu0 %v2856
    %3149 = vmatpush2.bf16.msra.mxu0 %v2855
    %3150 = vmatprep.subr.bf16.mxu0 %v2852
    %3151 = vmatpush2.bf16.msra.mxu0 %v2851
    %3152 = vmatprep.subr.bf16.mxu0 %v2848
    %3153 = vmatpush2.bf16.msra.mxu0 %v2847
    %3154 = vmatprep.subr.bf16.mxu0 %v2844
    %3155 = vmatpush2.bf16.msra.mxu0 %v2843
    %3156 = vmatprep.mubr.bf16.mxu0 %v2231
    %3157 = vmatmul.mubr.bf16.gmra.mxu0 %v2230
    %v3158 = vpop.f32.mrf.mxu0
    %v3159 = vadd.f32 %v3118, %v3158
    %v3160 = vpop.f32.mrf.mxu0
    %v3161 = vadd.f32 %v3120, %v3160
    %v3162 = vpop.f32.mrf.mxu0
    %v3163 = vpop.f32.mrf.mxu0
    %3164 = vdwg.mxu0
    %v3165 = vrot.slane %v3077, 4
    %v3166 = vadd.f32 %v3077, %v3165
    %v3167 = vrot.slane %v3166, 2
    %v3168 = vadd.f32 %v3166, %v3167
    %v3169 = vrot.slane %v3168, 1
    %v3170 = vadd.f32 %v3168, %v3169
    %v3171 = vrot.slane %v3079, 4
    %v3172 = vadd.f32 %v3079, %v3171
    %v3173 = vrot.slane %v3172, 2
    %v3174 = vadd.f32 %v3172, %v3173
    %v3175 = vrot.slane %v3174, 1
    %v3176 = vadd.f32 %v3174, %v3175
    %v3177 = vrot.slane %v3159, 4
    %v3178 = vadd.f32 %v3159, %v3177
    %v3179 = vrot.slane %v3178, 2
    %v3180 = vadd.f32 %v3178, %v3179
    %v3181 = vrot.slane %v3180, 1
    %v3182 = vadd.f32 %v3180, %v3181
    %v3183 = vrot.slane %v3161, 4
    %v3184 = vadd.f32 %v3161, %v3183
    %v3185 = vrot.slane %v3184, 2
    %v3186 = vadd.f32 %v3184, %v3185
    %v3187 = vrot.slane %v3186, 1
    %v3188 = vadd.f32 %v3186, %v3187
    %v3189 = vmul.f32 %v3077, %v3077
    %v3190 = vmul.f32 %v3079, %v3079
    %v3191 = vmul.f32 %v3159, %v3159
    %v3192 = vmul.f32 %v3161, %v3161
    %v3193 = vrot.slane %v3189, 4
    %v3194 = vadd.f32 %v3189, %v3193
    %v3195 = vrot.slane %v3194, 2
    %v3196 = vadd.f32 %v3194, %v3195
    %v3197 = vrot.slane %v3196, 1
    %v3198 = vadd.f32 %v3196, %v3197
    %v3199 = vrot.slane %v3190, 4
    %v3200 = vadd.f32 %v3190, %v3199
    %v3201 = vrot.slane %v3200, 2
    %v3202 = vadd.f32 %v3200, %v3201
    %v3203 = vrot.slane %v3202, 1
    %v3204 = vadd.f32 %v3202, %v3203
    %v3205 = vrot.slane %v3191, 4
    %v3206 = vadd.f32 %v3191, %v3205
    %v3207 = vrot.slane %v3206, 2
    %v3208 = vadd.f32 %v3206, %v3207
    %v3209 = vrot.slane %v3208, 1
    %v3210 = vadd.f32 %v3208, %v3209
    %v3211 = vrot.slane %v3192, 4
    %v3212 = vadd.f32 %v3192, %v3211
    %v3213 = vrot.slane %v3212, 2
    %v3214 = vadd.f32 %v3212, %v3213
    %v3215 = vrot.slane %v3214, 1
    %v3216 = vadd.f32 %v3214, %v3215
    %v3217 = vmul.f32 %v3170, 0.125
    %v3218 = vmul.f32 %v3176, 0.125
    %v3219 = vmul.f32 %v3182, 0.125
    %v3220 = vmul.f32 %v3188, 0.125
    %v3221 = vmul.f32 %v3198, 0.125
    %v3222 = vmul.f32 %v3204, 0.125
    %v3223 = vmul.f32 %v3210, 0.125
    %v3224 = vmul.f32 %v3216, 0.125
    %v3225 = vmul.f32 %v3217, %v3217
    %v3226 = vmul.f32 %v3218, %v3218
    %v3227 = vmul.f32 %v3219, %v3219
    %v3228 = vmul.f32 %v3220, %v3220
    %v3229 = vsub.f32 %v3221, %v3225
    %v3230 = vsub.f32 %v3222, %v3226
    %v3231 = vsub.f32 %v3223, %v3227
    %v3232 = vsub.f32 %v3224, %v3228
    %s3233 = scalar_lea.vmem [#allocation6], 16
    %v3234 = vld [vmem:[%s3233] ss:$2 sm:$0xf]
    %s3235 = scalar_lea.vmem %s3233, 1 [#allocation6]
    %v3236 = vld [vmem:[%s3235] ss:$2 sm:$0xf]
    %v3237 = vsub.f32 %v3077, %v3217
    %v3238 = vsub.f32 %v3079, %v3218
    %v3239 = vsub.f32 %v3159, %v3219
    %v3240 = vsub.f32 %v3161, %v3220
    %v3241 = vadd.f32 %v3229, 1e-05
    %v3242 = vadd.f32 %v3230, 1e-05
    %v3243 = vadd.f32 %v3231, 1e-05
    %v3244 = vadd.f32 %v3232, 1e-05
    %v3245 = vrsqrt.pop %v3241
    %v3246 = vrsqrt.pop %v3242
    %v3247 = vrsqrt.pop %v3243
    %v3248 = vrsqrt.pop %v3244
    %v3249 = vmul.f32 %v3237, %v3245
    %v3250 = vmul.f32 %v3238, %v3246
    %v3251 = vmul.f32 %v3239, %v3247
    %v3252 = vmul.f32 %v3240, %v3248
    %v3254 = vlaneseq
    %v3255 = vshrl.u32 %v3254, 7
    %v3256 = vsub.s32 0, %v3255
    %v3257 = vrot.slane %v3234, %v3256
    %v3258 = vlaneseq
    %v3259 = vshrl.u32 %v3258, 7
    %v3260 = vsub.s32 1, %v3259
    %v3261 = vrot.slane %v3234, %v3260
    %v3262 = vlaneseq
    %v3263 = vshrl.u32 %v3262, 7
    %v3264 = vsub.s32 2, %v3263
    %v3265 = vrot.slane %v3234, %v3264
    %v3266 = vlaneseq
    %v3267 = vshrl.u32 %v3266, 7
    %v3268 = vsub.s32 3, %v3267
    %v3269 = vrot.slane %v3234, %v3268
    %v3274 = vmul.f32 %v3249, %v3257
    %v3275 = vmul.f32 %v3250, %v3261
    %v3276 = vmul.f32 %v3251, %v3265
    %v3277 = vmul.f32 %v3252, %v3269
    %v3279 = vlaneseq
    %v3280 = vshrl.u32 %v3279, 7
    %v3281 = vsub.s32 0, %v3280
    %v3282 = vrot.slane %v3236, %v3281
    %v3283 = vlaneseq
    %v3284 = vshrl.u32 %v3283, 7
    %v3285 = vsub.s32 1, %v3284
    %v3286 = vrot.slane %v3236, %v3285
    %v3287 = vlaneseq
    %v3288 = vshrl.u32 %v3287, 7
    %v3289 = vsub.s32 2, %v3288
    %v3290 = vrot.slane %v3236, %v3289
    %v3291 = vlaneseq
    %v3292 = vshrl.u32 %v3291, 7
    %v3293 = vsub.s32 3, %v3292
    %v3294 = vrot.slane %v3236, %v3293
    %v3299 = vadd.f32 %v3274, %v3282
    %v3300 = vadd.f32 %v3275, %v3286
    %v3301 = vadd.f32 %v3276, %v3290
    %v3302 = vadd.f32 %v3277, %v3294
    %v3303 = vmax.f32 %v3299, 0.0
    %v3304 = vmax.f32 %v3300, 0.0
    %v3305 = vmax.f32 %v3301, 0.0
    %v3306 = vmax.f32 %v3302, 0.0
    %v3307 = vpack.c.bf16 %v3303, %v3303
    %v3308 = vpack.c.bf16 %v3304, %v3304
    %v3309 = vpack.c.bf16 %v3305, %v3305
    %v3310 = vpack.c.bf16 %v3306, %v3306
    %s3311 = scalar_lea.vmem [#allocation4], 3072
    %v3312 = vld [vmem:[%s3311] sm:$0xff]
    %v3313 = vld [vmem:[%s3311 + $0x8] sm:$0xff]
    %v3314 = vld [vmem:[%s3311 + $0x10] sm:$0xff]
    %v3315 = vld [vmem:[%s3311 + $0x18] sm:$0xff]
    %v3316 = vld [vmem:[%s3311 + $0x20] sm:$0xff]
    %v3317 = vld [vmem:[%s3311 + $0x28] sm:$0xff]
    %v3318 = vld [vmem:[%s3311 + $0x30] sm:$0xff]
    %v3319 = vld [vmem:[%s3311 + $0x38] sm:$0xff]
    %v3320 = vld [vmem:[%s3311 + $0x40] sm:$0xff]
    %v3321 = vld [vmem:[%s3311 + $0x48] sm:$0xff]
    %v3322 = vld [vmem:[%s3311 + $0x50] sm:$0xff]
    %v3323 = vld [vmem:[%s3311 + $0x58] sm:$0xff]
    %v3324 = vld [vmem:[%s3311 + $0x60] sm:$0xff]
    %v3325 = vld [vmem:[%s3311 + $0x68] sm:$0xff]
    %v3326 = vld [vmem:[%s3311 + $0x70] sm:$0xff]
    %v3327 = vld [vmem:[%s3311 + $0x78] sm:$0xff]
    %v3328 = vld [vmem:[%s3311 + $0x80] sm:$0xff]
    %v3329 = vld [vmem:[%s3311 + $0x88] sm:$0xff]
    %v3330 = vld [vmem:[%s3311 + $0x90] sm:$0xff]
    %v3331 = vld [vmem:[%s3311 + $0x98] sm:$0xff]
    %v3332 = vld [vmem:[%s3311 + $0xa0] sm:$0xff]
    %v3333 = vld [vmem:[%s3311 + $0xa8] sm:$0xff]
    %v3334 = vld [vmem:[%s3311 + $0xb0] sm:$0xff]
    %v3335 = vld [vmem:[%s3311 + $0xb8] sm:$0xff]
    %v3336 = vld [vmem:[%s3311 + $0xc0] sm:$0xff]
    %v3337 = vld [vmem:[%s3311 + $0xc8] sm:$0xff]
    %v3338 = vld [vmem:[%s3311 + $0xd0] sm:$0xff]
    %v3339 = vld [vmem:[%s3311 + $0xd8] sm:$0xff]
    %v3340 = vld [vmem:[%s3311 + $0xe0] sm:$0xff]
    %v3341 = vld [vmem:[%s3311 + $0xe8] sm:$0xff]
    %v3342 = vld [vmem:[%s3311 + $0xf0] sm:$0xff]
    %v3343 = vld [vmem:[%s3311 + $0xf8] sm:$0xff]
    %v3344 = vld [vmem:[%s3311 + $0x100] sm:$0xff]
    %v3345 = vld [vmem:[%s3311 + $0x108] sm:$0xff]
    %v3346 = vld [vmem:[%s3311 + $0x110] sm:$0xff]
    %v3347 = vld [vmem:[%s3311 + $0x118] sm:$0xff]
    %v3348 = vld [vmem:[%s3311 + $0x120] sm:$0xff]
    %v3349 = vld [vmem:[%s3311 + $0x128] sm:$0xff]
    %v3350 = vld [vmem:[%s3311 + $0x130] sm:$0xff]
    %v3351 = vld [vmem:[%s3311 + $0x138] sm:$0xff]
    %v3352 = vld [vmem:[%s3311 + $0x140] sm:$0xff]
    %v3353 = vld [vmem:[%s3311 + $0x148] sm:$0xff]
    %v3354 = vld [vmem:[%s3311 + $0x150] sm:$0xff]
    %v3355 = vld [vmem:[%s3311 + $0x158] sm:$0xff]
    %v3356 = vld [vmem:[%s3311 + $0x160] sm:$0xff]
    %v3357 = vld [vmem:[%s3311 + $0x168] sm:$0xff]
    %v3358 = vld [vmem:[%s3311 + $0x170] sm:$0xff]
    %v3359 = vld [vmem:[%s3311 + $0x178] sm:$0xff]
    %v3360 = vld [vmem:[%s3311 + $0x180] sm:$0xff]
    %v3361 = vld [vmem:[%s3311 + $0x188] sm:$0xff]
    %v3362 = vld [vmem:[%s3311 + $0x190] sm:$0xff]
    %v3363 = vld [vmem:[%s3311 + $0x198] sm:$0xff]
    %v3364 = vld [vmem:[%s3311 + $0x1a0] sm:$0xff]
    %v3365 = vld [vmem:[%s3311 + $0x1a8] sm:$0xff]
    %v3366 = vld [vmem:[%s3311 + $0x1b0] sm:$0xff]
    %v3367 = vld [vmem:[%s3311 + $0x1b8] sm:$0xff]
    %v3368 = vld [vmem:[%s3311 + $0x1c0] sm:$0xff]
    %v3369 = vld [vmem:[%s3311 + $0x1c8] sm:$0xff]
    %v3370 = vld [vmem:[%s3311 + $0x1d0] sm:$0xff]
    %v3371 = vld [vmem:[%s3311 + $0x1d8] sm:$0xff]
    %v3372 = vld [vmem:[%s3311 + $0x1e0] sm:$0xff]
    %v3373 = vld [vmem:[%s3311 + $0x1e8] sm:$0xff]
    %v3374 = vld [vmem:[%s3311 + $0x1f0] sm:$0xff]
    %v3375 = vld [vmem:[%s3311 + $0x1f8] sm:$0xff]
    %v3376 = vld [vmem:[%s3311 + $0x200] sm:$0xff]
    %v3377 = vld [vmem:[%s3311 + $0x208] sm:$0xff]
    %v3378 = vld [vmem:[%s3311 + $0x210] sm:$0xff]
    %v3379 = vld [vmem:[%s3311 + $0x218] sm:$0xff]
    %v3380 = vld [vmem:[%s3311 + $0x220] sm:$0xff]
    %v3381 = vld [vmem:[%s3311 + $0x228] sm:$0xff]
    %v3382 = vld [vmem:[%s3311 + $0x230] sm:$0xff]
    %v3383 = vld [vmem:[%s3311 + $0x238] sm:$0xff]
    %v3384 = vld [vmem:[%s3311 + $0x240] sm:$0xff]
    %v3385 = vld [vmem:[%s3311 + $0x248] sm:$0xff]
    %v3386 = vld [vmem:[%s3311 + $0x250] sm:$0xff]
    %v3387 = vld [vmem:[%s3311 + $0x258] sm:$0xff]
    %v3388 = vld [vmem:[%s3311 + $0x260] sm:$0xff]
    %v3389 = vld [vmem:[%s3311 + $0x268] sm:$0xff]
    %v3390 = vld [vmem:[%s3311 + $0x270] sm:$0xff]
    %v3391 = vld [vmem:[%s3311 + $0x278] sm:$0xff]
    %v3392 = vld [vmem:[%s3311 + $0x280] sm:$0xff]
    %v3393 = vld [vmem:[%s3311 + $0x288] sm:$0xff]
    %v3394 = vld [vmem:[%s3311 + $0x290] sm:$0xff]
    %v3395 = vld [vmem:[%s3311 + $0x298] sm:$0xff]
    %v3396 = vld [vmem:[%s3311 + $0x2a0] sm:$0xff]
    %v3397 = vld [vmem:[%s3311 + $0x2a8] sm:$0xff]
    %v3398 = vld [vmem:[%s3311 + $0x2b0] sm:$0xff]
    %v3399 = vld [vmem:[%s3311 + $0x2b8] sm:$0xff]
    %v3400 = vld [vmem:[%s3311 + $0x2c0] sm:$0xff]
    %v3401 = vld [vmem:[%s3311 + $0x2c8] sm:$0xff]
    %v3402 = vld [vmem:[%s3311 + $0x2d0] sm:$0xff]
    %v3403 = vld [vmem:[%s3311 + $0x2d8] sm:$0xff]
    %v3404 = vld [vmem:[%s3311 + $0x2e0] sm:$0xff]
    %v3405 = vld [vmem:[%s3311 + $0x2e8] sm:$0xff]
    %v3406 = vld [vmem:[%s3311 + $0x2f0] sm:$0xff]
    %v3407 = vld [vmem:[%s3311 + $0x2f8] sm:$0xff]
    %v3408 = vld [vmem:[%s3311 + $0x300] sm:$0xff]
    %v3409 = vld [vmem:[%s3311 + $0x308] sm:$0xff]
    %v3410 = vld [vmem:[%s3311 + $0x310] sm:$0xff]
    %v3411 = vld [vmem:[%s3311 + $0x318] sm:$0xff]
    %v3412 = vld [vmem:[%s3311 + $0x320] sm:$0xff]
    %v3413 = vld [vmem:[%s3311 + $0x328] sm:$0xff]
    %v3414 = vld [vmem:[%s3311 + $0x330] sm:$0xff]
    %v3415 = vld [vmem:[%s3311 + $0x338] sm:$0xff]
    %v3416 = vld [vmem:[%s3311 + $0x340] sm:$0xff]
    %v3417 = vld [vmem:[%s3311 + $0x348] sm:$0xff]
    %v3418 = vld [vmem:[%s3311 + $0x350] sm:$0xff]
    %v3419 = vld [vmem:[%s3311 + $0x358] sm:$0xff]
    %v3420 = vld [vmem:[%s3311 + $0x360] sm:$0xff]
    %v3421 = vld [vmem:[%s3311 + $0x368] sm:$0xff]
    %v3422 = vld [vmem:[%s3311 + $0x370] sm:$0xff]
    %v3423 = vld [vmem:[%s3311 + $0x378] sm:$0xff]
    %v3424 = vld [vmem:[%s3311 + $0x380] sm:$0xff]
    %v3425 = vld [vmem:[%s3311 + $0x388] sm:$0xff]
    %v3426 = vld [vmem:[%s3311 + $0x390] sm:$0xff]
    %v3427 = vld [vmem:[%s3311 + $0x398] sm:$0xff]
    %v3428 = vld [vmem:[%s3311 + $0x3a0] sm:$0xff]
    %v3429 = vld [vmem:[%s3311 + $0x3a8] sm:$0xff]
    %v3430 = vld [vmem:[%s3311 + $0x3b0] sm:$0xff]
    %v3431 = vld [vmem:[%s3311 + $0x3b8] sm:$0xff]
    %v3432 = vld [vmem:[%s3311 + $0x3c0] sm:$0xff]
    %v3433 = vld [vmem:[%s3311 + $0x3c8] sm:$0xff]
    %v3434 = vld [vmem:[%s3311 + $0x3d0] sm:$0xff]
    %v3435 = vld [vmem:[%s3311 + $0x3d8] sm:$0xff]
    %v3436 = vld [vmem:[%s3311 + $0x3e0] sm:$0xff]
    %v3437 = vld [vmem:[%s3311 + $0x3e8] sm:$0xff]
    %v3438 = vld [vmem:[%s3311 + $0x3f0] sm:$0xff]
    %v3439 = vld [vmem:[%s3311 + $0x3f8] sm:$0xff]
    %v3568 = vunpack.c.l.b16 %v3312
    %v3569 = vunpack.c.h.b16 %v3312
    %v3570 = vunpack.c.l.b16 %v3313
    %v3571 = vunpack.c.h.b16 %v3313
    %v3572 = vunpack.c.l.b16 %v3314
    %v3573 = vunpack.c.h.b16 %v3314
    %v3574 = vunpack.c.l.b16 %v3315
    %v3575 = vunpack.c.h.b16 %v3315
    %v3576 = vunpack.c.l.b16 %v3316
    %v3577 = vunpack.c.h.b16 %v3316
    %v3578 = vunpack.c.l.b16 %v3317
    %v3579 = vunpack.c.h.b16 %v3317
    %v3580 = vunpack.c.l.b16 %v3318
    %v3581 = vunpack.c.h.b16 %v3318
    %v3582 = vunpack.c.l.b16 %v3319
    %v3583 = vunpack.c.h.b16 %v3319
    %v3584 = vunpack.c.l.b16 %v3320
    %v3585 = vunpack.c.h.b16 %v3320
    %v3586 = vunpack.c.l.b16 %v3321
    %v3587 = vunpack.c.h.b16 %v3321
    %v3588 = vunpack.c.l.b16 %v3322
    %v3589 = vunpack.c.h.b16 %v3322
    %v3590 = vunpack.c.l.b16 %v3323
    %v3591 = vunpack.c.h.b16 %v3323
    %v3592 = vunpack.c.l.b16 %v3324
    %v3593 = vunpack.c.h.b16 %v3324
    %v3594 = vunpack.c.l.b16 %v3325
    %v3595 = vunpack.c.h.b16 %v3325
    %v3596 = vunpack.c.l.b16 %v3326
    %v3597 = vunpack.c.h.b16 %v3326
    %v3598 = vunpack.c.l.b16 %v3327
    %v3599 = vunpack.c.h.b16 %v3327
    %v3600 = vunpack.c.l.b16 %v3328
    %v3601 = vunpack.c.h.b16 %v3328
    %v3602 = vunpack.c.l.b16 %v3329
    %v3603 = vunpack.c.h.b16 %v3329
    %v3604 = vunpack.c.l.b16 %v3330
    %v3605 = vunpack.c.h.b16 %v3330
    %v3606 = vunpack.c.l.b16 %v3331
    %v3607 = vunpack.c.h.b16 %v3331
    %v3608 = vunpack.c.l.b16 %v3332
    %v3609 = vunpack.c.h.b16 %v3332
    %v3610 = vunpack.c.l.b16 %v3333
    %v3611 = vunpack.c.h.b16 %v3333
    %v3612 = vunpack.c.l.b16 %v3334
    %v3613 = vunpack.c.h.b16 %v3334
    %v3614 = vunpack.c.l.b16 %v3335
    %v3615 = vunpack.c.h.b16 %v3335
    %v3616 = vunpack.c.l.b16 %v3336
    %v3617 = vunpack.c.h.b16 %v3336
    %v3618 = vunpack.c.l.b16 %v3337
    %v3619 = vunpack.c.h.b16 %v3337
    %v3620 = vunpack.c.l.b16 %v3338
    %v3621 = vunpack.c.h.b16 %v3338
    %v3622 = vunpack.c.l.b16 %v3339
    %v3623 = vunpack.c.h.b16 %v3339
    %v3624 = vunpack.c.l.b16 %v3340
    %v3625 = vunpack.c.h.b16 %v3340
    %v3626 = vunpack.c.l.b16 %v3341
    %v3627 = vunpack.c.h.b16 %v3341
    %v3628 = vunpack.c.l.b16 %v3342
    %v3629 = vunpack.c.h.b16 %v3342
    %v3630 = vunpack.c.l.b16 %v3343
    %v3631 = vunpack.c.h.b16 %v3343
    %v3632 = vunpack.c.l.b16 %v3344
    %v3633 = vunpack.c.h.b16 %v3344
    %v3634 = vunpack.c.l.b16 %v3345
    %v3635 = vunpack.c.h.b16 %v3345
    %v3636 = vunpack.c.l.b16 %v3346
    %v3637 = vunpack.c.h.b16 %v3346
    %v3638 = vunpack.c.l.b16 %v3347
    %v3639 = vunpack.c.h.b16 %v3347
    %v3640 = vunpack.c.l.b16 %v3348
    %v3641 = vunpack.c.h.b16 %v3348
    %v3642 = vunpack.c.l.b16 %v3349
    %v3643 = vunpack.c.h.b16 %v3349
    %v3644 = vunpack.c.l.b16 %v3350
    %v3645 = vunpack.c.h.b16 %v3350
    %v3646 = vunpack.c.l.b16 %v3351
    %v3647 = vunpack.c.h.b16 %v3351
    %v3648 = vunpack.c.l.b16 %v3352
    %v3649 = vunpack.c.h.b16 %v3352
    %v3650 = vunpack.c.l.b16 %v3353
    %v3651 = vunpack.c.h.b16 %v3353
    %v3652 = vunpack.c.l.b16 %v3354
    %v3653 = vunpack.c.h.b16 %v3354
    %v3654 = vunpack.c.l.b16 %v3355
    %v3655 = vunpack.c.h.b16 %v3355
    %v3656 = vunpack.c.l.b16 %v3356
    %v3657 = vunpack.c.h.b16 %v3356
    %v3658 = vunpack.c.l.b16 %v3357
    %v3659 = vunpack.c.h.b16 %v3357
    %v3660 = vunpack.c.l.b16 %v3358
    %v3661 = vunpack.c.h.b16 %v3358
    %v3662 = vunpack.c.l.b16 %v3359
    %v3663 = vunpack.c.h.b16 %v3359
    %v3664 = vunpack.c.l.b16 %v3360
    %v3665 = vunpack.c.h.b16 %v3360
    %v3666 = vunpack.c.l.b16 %v3361
    %v3667 = vunpack.c.h.b16 %v3361
    %v3668 = vunpack.c.l.b16 %v3362
    %v3669 = vunpack.c.h.b16 %v3362
    %v3670 = vunpack.c.l.b16 %v3363
    %v3671 = vunpack.c.h.b16 %v3363
    %v3672 = vunpack.c.l.b16 %v3364
    %v3673 = vunpack.c.h.b16 %v3364
    %v3674 = vunpack.c.l.b16 %v3365
    %v3675 = vunpack.c.h.b16 %v3365
    %v3676 = vunpack.c.l.b16 %v3366
    %v3677 = vunpack.c.h.b16 %v3366
    %v3678 = vunpack.c.l.b16 %v3367
    %v3679 = vunpack.c.h.b16 %v3367
    %v3680 = vunpack.c.l.b16 %v3368
    %v3681 = vunpack.c.h.b16 %v3368
    %v3682 = vunpack.c.l.b16 %v3369
    %v3683 = vunpack.c.h.b16 %v3369
    %v3684 = vunpack.c.l.b16 %v3370
    %v3685 = vunpack.c.h.b16 %v3370
    %v3686 = vunpack.c.l.b16 %v3371
    %v3687 = vunpack.c.h.b16 %v3371
    %v3688 = vunpack.c.l.b16 %v3372
    %v3689 = vunpack.c.h.b16 %v3372
    %v3690 = vunpack.c.l.b16 %v3373
    %v3691 = vunpack.c.h.b16 %v3373
    %v3692 = vunpack.c.l.b16 %v3374
    %v3693 = vunpack.c.h.b16 %v3374
    %v3694 = vunpack.c.l.b16 %v3375
    %v3695 = vunpack.c.h.b16 %v3375
    %v3696 = vunpack.c.l.b16 %v3376
    %v3697 = vunpack.c.h.b16 %v3376
    %v3698 = vunpack.c.l.b16 %v3377
    %v3699 = vunpack.c.h.b16 %v3377
    %v3700 = vunpack.c.l.b16 %v3378
    %v3701 = vunpack.c.h.b16 %v3378
    %v3702 = vunpack.c.l.b16 %v3379
    %v3703 = vunpack.c.h.b16 %v3379
    %v3704 = vunpack.c.l.b16 %v3380
    %v3705 = vunpack.c.h.b16 %v3380
    %v3706 = vunpack.c.l.b16 %v3381
    %v3707 = vunpack.c.h.b16 %v3381
    %v3708 = vunpack.c.l.b16 %v3382
    %v3709 = vunpack.c.h.b16 %v3382
    %v3710 = vunpack.c.l.b16 %v3383
    %v3711 = vunpack.c.h.b16 %v3383
    %v3712 = vunpack.c.l.b16 %v3384
    %v3713 = vunpack.c.h.b16 %v3384
    %v3714 = vunpack.c.l.b16 %v3385
    %v3715 = vunpack.c.h.b16 %v3385
    %v3716 = vunpack.c.l.b16 %v3386
    %v3717 = vunpack.c.h.b16 %v3386
    %v3718 = vunpack.c.l.b16 %v3387
    %v3719 = vunpack.c.h.b16 %v3387
    %v3720 = vunpack.c.l.b16 %v3388
    %v3721 = vunpack.c.h.b16 %v3388
    %v3722 = vunpack.c.l.b16 %v3389
    %v3723 = vunpack.c.h.b16 %v3389
    %v3724 = vunpack.c.l.b16 %v3390
    %v3725 = vunpack.c.h.b16 %v3390
    %v3726 = vunpack.c.l.b16 %v3391
    %v3727 = vunpack.c.h.b16 %v3391
    %v3728 = vunpack.c.l.b16 %v3392
    %v3729 = vunpack.c.h.b16 %v3392
    %v3730 = vunpack.c.l.b16 %v3393
    %v3731 = vunpack.c.h.b16 %v3393
    %v3732 = vunpack.c.l.b16 %v3394
    %v3733 = vunpack.c.h.b16 %v3394
    %v3734 = vunpack.c.l.b16 %v3395
    %v3735 = vunpack.c.h.b16 %v3395
    %v3736 = vunpack.c.l.b16 %v3396
    %v3737 = vunpack.c.h.b16 %v3396
    %v3738 = vunpack.c.l.b16 %v3397
    %v3739 = vunpack.c.h.b16 %v3397
    %v3740 = vunpack.c.l.b16 %v3398
    %v3741 = vunpack.c.h.b16 %v3398
    %v3742 = vunpack.c.l.b16 %v3399
    %v3743 = vunpack.c.h.b16 %v3399
    %v3744 = vunpack.c.l.b16 %v3400
    %v3745 = vunpack.c.h.b16 %v3400
    %v3746 = vunpack.c.l.b16 %v3401
    %v3747 = vunpack.c.h.b16 %v3401
    %v3748 = vunpack.c.l.b16 %v3402
    %v3749 = vunpack.c.h.b16 %v3402
    %v3750 = vunpack.c.l.b16 %v3403
    %v3751 = vunpack.c.h.b16 %v3403
    %v3752 = vunpack.c.l.b16 %v3404
    %v3753 = vunpack.c.h.b16 %v3404
    %v3754 = vunpack.c.l.b16 %v3405
    %v3755 = vunpack.c.h.b16 %v3405
    %v3756 = vunpack.c.l.b16 %v3406
    %v3757 = vunpack.c.h.b16 %v3406
    %v3758 = vunpack.c.l.b16 %v3407
    %v3759 = vunpack.c.h.b16 %v3407
    %v3760 = vunpack.c.l.b16 %v3408
    %v3761 = vunpack.c.h.b16 %v3408
    %v3762 = vunpack.c.l.b16 %v3409
    %v3763 = vunpack.c.h.b16 %v3409
    %v3764 = vunpack.c.l.b16 %v3410
    %v3765 = vunpack.c.h.b16 %v3410
    %v3766 = vunpack.c.l.b16 %v3411
    %v3767 = vunpack.c.h.b16 %v3411
    %v3768 = vunpack.c.l.b16 %v3412
    %v3769 = vunpack.c.h.b16 %v3412
    %v3770 = vunpack.c.l.b16 %v3413
    %v3771 = vunpack.c.h.b16 %v3413
    %v3772 = vunpack.c.l.b16 %v3414
    %v3773 = vunpack.c.h.b16 %v3414
    %v3774 = vunpack.c.l.b16 %v3415
    %v3775 = vunpack.c.h.b16 %v3415
    %v3776 = vunpack.c.l.b16 %v3416
    %v3777 = vunpack.c.h.b16 %v3416
    %v3778 = vunpack.c.l.b16 %v3417
    %v3779 = vunpack.c.h.b16 %v3417
    %v3780 = vunpack.c.l.b16 %v3418
    %v3781 = vunpack.c.h.b16 %v3418
    %v3782 = vunpack.c.l.b16 %v3419
    %v3783 = vunpack.c.h.b16 %v3419
    %v3784 = vunpack.c.l.b16 %v3420
    %v3785 = vunpack.c.h.b16 %v3420
    %v3786 = vunpack.c.l.b16 %v3421
    %v3787 = vunpack.c.h.b16 %v3421
    %v3788 = vunpack.c.l.b16 %v3422
    %v3789 = vunpack.c.h.b16 %v3422
    %v3790 = vunpack.c.l.b16 %v3423
    %v3791 = vunpack.c.h.b16 %v3423
    %v3792 = vunpack.c.l.b16 %v3424
    %v3793 = vunpack.c.h.b16 %v3424
    %v3794 = vunpack.c.l.b16 %v3425
    %v3795 = vunpack.c.h.b16 %v3425
    %v3796 = vunpack.c.l.b16 %v3426
    %v3797 = vunpack.c.h.b16 %v3426
    %v3798 = vunpack.c.l.b16 %v3427
    %v3799 = vunpack.c.h.b16 %v3427
    %v3800 = vunpack.c.l.b16 %v3428
    %v3801 = vunpack.c.h.b16 %v3428
    %v3802 = vunpack.c.l.b16 %v3429
    %v3803 = vunpack.c.h.b16 %v3429
    %v3804 = vunpack.c.l.b16 %v3430
    %v3805 = vunpack.c.h.b16 %v3430
    %v3806 = vunpack.c.l.b16 %v3431
    %v3807 = vunpack.c.h.b16 %v3431
    %v3808 = vunpack.c.l.b16 %v3432
    %v3809 = vunpack.c.h.b16 %v3432
    %v3810 = vunpack.c.l.b16 %v3433
    %v3811 = vunpack.c.h.b16 %v3433
    %v3812 = vunpack.c.l.b16 %v3434
    %v3813 = vunpack.c.h.b16 %v3434
    %v3814 = vunpack.c.l.b16 %v3435
    %v3815 = vunpack.c.h.b16 %v3435
    %v3816 = vunpack.c.l.b16 %v3436
    %v3817 = vunpack.c.h.b16 %v3436
    %v3818 = vunpack.c.l.b16 %v3437
    %v3819 = vunpack.c.h.b16 %v3437
    %v3820 = vunpack.c.l.b16 %v3438
    %v3821 = vunpack.c.h.b16 %v3438
    %v3822 = vunpack.c.l.b16 %v3439
    %v3823 = vunpack.c.h.b16 %v3439
    %v3824 = vpack.c.b16 %v3572, %v3568
    %v3825 = vpack.c.b16 %v3573, %v3569
    %v3826 = vpack.c.b16 %v3574, %v3570
    %v3827 = vpack.c.b16 %v3575, %v3571
    %v3828 = vpack.c.b16 %v3580, %v3576
    %v3829 = vpack.c.b16 %v3581, %v3577
    %v3830 = vpack.c.b16 %v3582, %v3578
    %v3831 = vpack.c.b16 %v3583, %v3579
    %v3832 = vpack.c.b16 %v3588, %v3584
    %v3833 = vpack.c.b16 %v3589, %v3585
    %v3834 = vpack.c.b16 %v3590, %v3586
    %v3835 = vpack.c.b16 %v3591, %v3587
    %v3836 = vpack.c.b16 %v3596, %v3592
    %v3837 = vpack.c.b16 %v3597, %v3593
    %v3838 = vpack.c.b16 %v3598, %v3594
    %v3839 = vpack.c.b16 %v3599, %v3595
    %v3840 = vpack.c.b16 %v3604, %v3600
    %v3841 = vpack.c.b16 %v3605, %v3601
    %v3842 = vpack.c.b16 %v3606, %v3602
    %v3843 = vpack.c.b16 %v3607, %v3603
    %v3844 = vpack.c.b16 %v3612, %v3608
    %v3845 = vpack.c.b16 %v3613, %v3609
    %v3846 = vpack.c.b16 %v3614, %v3610
    %v3847 = vpack.c.b16 %v3615, %v3611
    %v3848 = vpack.c.b16 %v3620, %v3616
    %v3849 = vpack.c.b16 %v3621, %v3617
    %v3850 = vpack.c.b16 %v3622, %v3618
    %v3851 = vpack.c.b16 %v3623, %v3619
    %v3852 = vpack.c.b16 %v3628, %v3624
    %v3853 = vpack.c.b16 %v3629, %v3625
    %v3854 = vpack.c.b16 %v3630, %v3626
    %v3855 = vpack.c.b16 %v3631, %v3627
    %v3856 = vpack.c.b16 %v3636, %v3632
    %v3857 = vpack.c.b16 %v3637, %v3633
    %v3858 = vpack.c.b16 %v3638, %v3634
    %v3859 = vpack.c.b16 %v3639, %v3635
    %v3860 = vpack.c.b16 %v3644, %v3640
    %v3861 = vpack.c.b16 %v3645, %v3641
    %v3862 = vpack.c.b16 %v3646, %v3642
    %v3863 = vpack.c.b16 %v3647, %v3643
    %v3864 = vpack.c.b16 %v3652, %v3648
    %v3865 = vpack.c.b16 %v3653, %v3649
    %v3866 = vpack.c.b16 %v3654, %v3650
    %v3867 = vpack.c.b16 %v3655, %v3651
    %v3868 = vpack.c.b16 %v3660, %v3656
    %v3869 = vpack.c.b16 %v3661, %v3657
    %v3870 = vpack.c.b16 %v3662, %v3658
    %v3871 = vpack.c.b16 %v3663, %v3659
    %v3872 = vpack.c.b16 %v3668, %v3664
    %v3873 = vpack.c.b16 %v3669, %v3665
    %v3874 = vpack.c.b16 %v3670, %v3666
    %v3875 = vpack.c.b16 %v3671, %v3667
    %v3876 = vpack.c.b16 %v3676, %v3672
    %v3877 = vpack.c.b16 %v3677, %v3673
    %v3878 = vpack.c.b16 %v3678, %v3674
    %v3879 = vpack.c.b16 %v3679, %v3675
    %v3880 = vpack.c.b16 %v3684, %v3680
    %v3881 = vpack.c.b16 %v3685, %v3681
    %v3882 = vpack.c.b16 %v3686, %v3682
    %v3883 = vpack.c.b16 %v3687, %v3683
    %v3884 = vpack.c.b16 %v3692, %v3688
    %v3885 = vpack.c.b16 %v3693, %v3689
    %v3886 = vpack.c.b16 %v3694, %v3690
    %v3887 = vpack.c.b16 %v3695, %v3691
    %v3888 = vpack.c.b16 %v3700, %v3696
    %v3889 = vpack.c.b16 %v3701, %v3697
    %v3890 = vpack.c.b16 %v3702, %v3698
    %v3891 = vpack.c.b16 %v3703, %v3699
    %v3892 = vpack.c.b16 %v3708, %v3704
    %v3893 = vpack.c.b16 %v3709, %v3705
    %v3894 = vpack.c.b16 %v3710, %v3706
    %v3895 = vpack.c.b16 %v3711, %v3707
    %v3896 = vpack.c.b16 %v3716, %v3712
    %v3897 = vpack.c.b16 %v3717, %v3713
    %v3898 = vpack.c.b16 %v3718, %v3714
    %v3899 = vpack.c.b16 %v3719, %v3715
    %v3900 = vpack.c.b16 %v3724, %v3720
    %v3901 = vpack.c.b16 %v3725, %v3721
    %v3902 = vpack.c.b16 %v3726, %v3722
    %v3903 = vpack.c.b16 %v3727, %v3723
    %v3904 = vpack.c.b16 %v3732, %v3728
    %v3905 = vpack.c.b16 %v3733, %v3729
    %v3906 = vpack.c.b16 %v3734, %v3730
    %v3907 = vpack.c.b16 %v3735, %v3731
    %v3908 = vpack.c.b16 %v3740, %v3736
    %v3909 = vpack.c.b16 %v3741, %v3737
    %v3910 = vpack.c.b16 %v3742, %v3738
    %v3911 = vpack.c.b16 %v3743, %v3739
    %v3912 = vpack.c.b16 %v3748, %v3744
    %v3913 = vpack.c.b16 %v3749, %v3745
    %v3914 = vpack.c.b16 %v3750, %v3746
    %v3915 = vpack.c.b16 %v3751, %v3747
    %v3916 = vpack.c.b16 %v3756, %v3752
    %v3917 = vpack.c.b16 %v3757, %v3753
    %v3918 = vpack.c.b16 %v3758, %v3754
    %v3919 = vpack.c.b16 %v3759, %v3755
    %v3920 = vpack.c.b16 %v3764, %v3760
    %v3921 = vpack.c.b16 %v3765, %v3761
    %v3922 = vpack.c.b16 %v3766, %v3762
    %v3923 = vpack.c.b16 %v3767, %v3763
    %v3924 = vpack.c.b16 %v3772, %v3768
    %v3925 = vpack.c.b16 %v3773, %v3769
    %v3926 = vpack.c.b16 %v3774, %v3770
    %v3927 = vpack.c.b16 %v3775, %v3771
    %v3928 = vpack.c.b16 %v3780, %v3776
    %v3929 = vpack.c.b16 %v3781, %v3777
    %v3930 = vpack.c.b16 %v3782, %v3778
    %v3931 = vpack.c.b16 %v3783, %v3779
    %v3932 = vpack.c.b16 %v3788, %v3784
    %v3933 = vpack.c.b16 %v3789, %v3785
    %v3934 = vpack.c.b16 %v3790, %v3786
    %v3935 = vpack.c.b16 %v3791, %v3787
    %v3936 = vpack.c.b16 %v3796, %v3792
    %v3937 = vpack.c.b16 %v3797, %v3793
    %v3938 = vpack.c.b16 %v3798, %v3794
    %v3939 = vpack.c.b16 %v3799, %v3795
    %v3940 = vpack.c.b16 %v3804, %v3800
    %v3941 = vpack.c.b16 %v3805, %v3801
    %v3942 = vpack.c.b16 %v3806, %v3802
    %v3943 = vpack.c.b16 %v3807, %v3803
    %v3944 = vpack.c.b16 %v3812, %v3808
    %v3945 = vpack.c.b16 %v3813, %v3809
    %v3946 = vpack.c.b16 %v3814, %v3810
    %v3947 = vpack.c.b16 %v3815, %v3811
    %v3948 = vpack.c.b16 %v3820, %v3816
    %v3949 = vpack.c.b16 %v3821, %v3817
    %v3950 = vpack.c.b16 %v3822, %v3818
    %v3951 = vpack.c.b16 %v3823, %v3819
    %4080 = vmatprep.subr.bf16.mxu0 %v3853
    %4081 = vmatpush1.bf16.msra.mxu0 %v3852
    %4082 = vmatprep.subr.bf16.mxu0 %v3849
    %4083 = vmatpush1.bf16.msra.mxu0 %v3848
    %4084 = vmatprep.subr.bf16.mxu0 %v3845
    %4085 = vmatpush1.bf16.msra.mxu0 %v3844
    %4086 = vmatprep.subr.bf16.mxu0 %v3841
    %4087 = vmatpush1.bf16.msra.mxu0 %v3840
    %4088 = vmatprep.subr.bf16.mxu0 %v3837
    %4089 = vmatpush1.bf16.msra.mxu0 %v3836
    %4090 = vmatprep.subr.bf16.mxu0 %v3833
    %4091 = vmatpush1.bf16.msra.mxu0 %v3832
    %4092 = vmatprep.subr.bf16.mxu0 %v3829
    %4093 = vmatpush1.bf16.msra.mxu0 %v3828
    %4094 = vmatprep.subr.bf16.mxu0 %v3825
    %4095 = vmatpush1.bf16.msra.mxu0 %v3824
    %4096 = vmatprep.subr.bf16.mxu0 %v3885
    %4097 = vmatpush2.bf16.msra.mxu0 %v3884
    %4098 = vmatprep.subr.bf16.mxu0 %v3881
    %4099 = vmatpush2.bf16.msra.mxu0 %v3880
    %4100 = vmatprep.subr.bf16.mxu0 %v3877
    %4101 = vmatpush2.bf16.msra.mxu0 %v3876
    %4102 = vmatprep.subr.bf16.mxu0 %v3873
    %4103 = vmatpush2.bf16.msra.mxu0 %v3872
    %4104 = vmatprep.subr.bf16.mxu0 %v3869
    %4105 = vmatpush2.bf16.msra.mxu0 %v3868
    %4106 = vmatprep.subr.bf16.mxu0 %v3865
    %4107 = vmatpush2.bf16.msra.mxu0 %v3864
    %4108 = vmatprep.subr.bf16.mxu0 %v3861
    %4109 = vmatpush2.bf16.msra.mxu0 %v3860
    %4110 = vmatprep.subr.bf16.mxu0 %v3857
    %4111 = vmatpush2.bf16.msra.mxu0 %v3856
    %4112 = vmatprep.mubr.bf16.mxu0 %v3308
    %4113 = vmatmul.mubr.bf16.gmra.mxu0 %v3307
    %v4114 = vpop.f32.mrf.mxu0
    %v4115 = vadd.f32 0.0, %v4114
    %v4116 = vpop.f32.mrf.mxu0
    %v4117 = vadd.f32 0.0, %v4116
    %v4118 = vpop.f32.mrf.mxu0
    %v4119 = vpop.f32.mrf.mxu0
    %4120 = vdwg.mxu0
    %4121 = vmatprep.subr.bf16.mxu0 %v3917
    %4122 = vmatpush1.bf16.msra.mxu0 %v3916
    %4123 = vmatprep.subr.bf16.mxu0 %v3913
    %4124 = vmatpush1.bf16.msra.mxu0 %v3912
    %4125 = vmatprep.subr.bf16.mxu0 %v3909
    %4126 = vmatpush1.bf16.msra.mxu0 %v3908
    %4127 = vmatprep.subr.bf16.mxu0 %v3905
    %4128 = vmatpush1.bf16.msra.mxu0 %v3904
    %4129 = vmatprep.subr.bf16.mxu0 %v3901
    %4130 = vmatpush1.bf16.msra.mxu0 %v3900
    %4131 = vmatprep.subr.bf16.mxu0 %v3897
    %4132 = vmatpush1.bf16.msra.mxu0 %v3896
    %4133 = vmatprep.subr.bf16.mxu0 %v3893
    %4134 = vmatpush1.bf16.msra.mxu0 %v3892
    %4135 = vmatprep.subr.bf16.mxu0 %v3889
    %4136 = vmatpush1.bf16.msra.mxu0 %v3888
    %4137 = vmatprep.subr.bf16.mxu0 %v3949
    %4138 = vmatpush2.bf16.msra.mxu0 %v3948
    %4139 = vmatprep.subr.bf16.mxu0 %v3945
    %4140 = vmatpush2.bf16.msra.mxu0 %v3944
    %4141 = vmatprep.subr.bf16.mxu0 %v3941
    %4142 = vmatpush2.bf16.msra.mxu0 %v3940
    %4143 = vmatprep.subr.bf16.mxu0 %v3937
    %4144 = vmatpush2.bf16.msra.mxu0 %v3936
    %4145 = vmatprep.subr.bf16.mxu0 %v3933
    %4146 = vmatpush2.bf16.msra.mxu0 %v3932
    %4147 = vmatprep.subr.bf16.mxu0 %v3929
    %4148 = vmatpush2.bf16.msra.mxu0 %v3928
    %4149 = vmatprep.subr.bf16.mxu0 %v3925
    %4150 = vmatpush2.bf16.msra.mxu0 %v3924
    %4151 = vmatprep.subr.bf16.mxu0 %v3921
    %4152 = vmatpush2.bf16.msra.mxu0 %v3920
    %4153 = vmatprep.mubr.bf16.mxu0 %v3310
    %4154 = vmatmul.mubr.bf16.gmra.mxu0 %v3309
    %v4155 = vpop.f32.mrf.mxu0
    %v4156 = vadd.f32 %v4115, %v4155
    %v4157 = vpop.f32.mrf.mxu0
    %v4158 = vadd.f32 %v4117, %v4157
    %v4159 = vpop.f32.mrf.mxu0
    %v4160 = vpop.f32.mrf.mxu0
    %4161 = vdwg.mxu0
    %4162 = vmatprep.subr.bf16.mxu0 %v3855
    %4163 = vmatpush1.bf16.msra.mxu0 %v3854
    %4164 = vmatprep.subr.bf16.mxu0 %v3851
    %4165 = vmatpush1.bf16.msra.mxu0 %v3850
    %4166 = vmatprep.subr.bf16.mxu0 %v3847
    %4167 = vmatpush1.bf16.msra.mxu0 %v3846
    %4168 = vmatprep.subr.bf16.mxu0 %v3843
    %4169 = vmatpush1.bf16.msra.mxu0 %v3842
    %4170 = vmatprep.subr.bf16.mxu0 %v3839
    %4171 = vmatpush1.bf16.msra.mxu0 %v3838
    %4172 = vmatprep.subr.bf16.mxu0 %v3835
    %4173 = vmatpush1.bf16.msra.mxu0 %v3834
    %4174 = vmatprep.subr.bf16.mxu0 %v3831
    %4175 = vmatpush1.bf16.msra.mxu0 %v3830
    %4176 = vmatprep.subr.bf16.mxu0 %v3827
    %4177 = vmatpush1.bf16.msra.mxu0 %v3826
    %4178 = vmatprep.subr.bf16.mxu0 %v3887
    %4179 = vmatpush2.bf16.msra.mxu0 %v3886
    %4180 = vmatprep.subr.bf16.mxu0 %v3883
    %4181 = vmatpush2.bf16.msra.mxu0 %v3882
    %4182 = vmatprep.subr.bf16.mxu0 %v3879
    %4183 = vmatpush2.bf16.msra.mxu0 %v3878
    %4184 = vmatprep.subr.bf16.mxu0 %v3875
    %4185 = vmatpush2.bf16.msra.mxu0 %v3874
    %4186 = vmatprep.subr.bf16.mxu0 %v3871
    %4187 = vmatpush2.bf16.msra.mxu0 %v3870
    %4188 = vmatprep.subr.bf16.mxu0 %v3867
    %4189 = vmatpush2.bf16.msra.mxu0 %v3866
    %4190 = vmatprep.subr.bf16.mxu0 %v3863
    %4191 = vmatpush2.bf16.msra.mxu0 %v3862
    %4192 = vmatprep.subr.bf16.mxu0 %v3859
    %4193 = vmatpush2.bf16.msra.mxu0 %v3858
    %4194 = vmatprep.mubr.bf16.mxu0 %v3308
    %4195 = vmatmul.mubr.bf16.gmra.mxu0 %v3307
    %v4196 = vpop.f32.mrf.mxu0
    %v4197 = vadd.f32 0.0, %v4196
    %v4198 = vpop.f32.mrf.mxu0
    %v4199 = vadd.f32 0.0, %v4198
    %v4200 = vpop.f32.mrf.mxu0
    %v4201 = vpop.f32.mrf.mxu0
    %4202 = vdwg.mxu0
    %4203 = vmatprep.subr.bf16.mxu0 %v3919
    %4204 = vmatpush1.bf16.msra.mxu0 %v3918
    %4205 = vmatprep.subr.bf16.mxu0 %v3915
    %4206 = vmatpush1.bf16.msra.mxu0 %v3914
    %4207 = vmatprep.subr.bf16.mxu0 %v3911
    %4208 = vmatpush1.bf16.msra.mxu0 %v3910
    %4209 = vmatprep.subr.bf16.mxu0 %v3907
    %4210 = vmatpush1.bf16.msra.mxu0 %v3906
    %4211 = vmatprep.subr.bf16.mxu0 %v3903
    %4212 = vmatpush1.bf16.msra.mxu0 %v3902
    %4213 = vmatprep.subr.bf16.mxu0 %v3899
    %4214 = vmatpush1.bf16.msra.mxu0 %v3898
    %4215 = vmatprep.subr.bf16.mxu0 %v3895
    %4216 = vmatpush1.bf16.msra.mxu0 %v3894
    %4217 = vmatprep.subr.bf16.mxu0 %v3891
    %4218 = vmatpush1.bf16.msra.mxu0 %v3890
    %4219 = vmatprep.subr.bf16.mxu0 %v3951
    %4220 = vmatpush2.bf16.msra.mxu0 %v3950
    %4221 = vmatprep.subr.bf16.mxu0 %v3947
    %4222 = vmatpush2.bf16.msra.mxu0 %v3946
    %4223 = vmatprep.subr.bf16.mxu0 %v3943
    %4224 = vmatpush2.bf16.msra.mxu0 %v3942
    %4225 = vmatprep.subr.bf16.mxu0 %v3939
    %4226 = vmatpush2.bf16.msra.mxu0 %v3938
    %4227 = vmatprep.subr.bf16.mxu0 %v3935
    %4228 = vmatpush2.bf16.msra.mxu0 %v3934
    %4229 = vmatprep.subr.bf16.mxu0 %v3931
    %4230 = vmatpush2.bf16.msra.mxu0 %v3930
    %4231 = vmatprep.subr.bf16.mxu0 %v3927
    %4232 = vmatpush2.bf16.msra.mxu0 %v3926
    %4233 = vmatprep.subr.bf16.mxu0 %v3923
    %4234 = vmatpush2.bf16.msra.mxu0 %v3922
    %4235 = vmatprep.mubr.bf16.mxu0 %v3310
    %4236 = vmatmul.mubr.bf16.gmra.mxu0 %v3309
    %v4237 = vpop.f32.mrf.mxu0
    %v4238 = vadd.f32 %v4197, %v4237
    %v4239 = vpop.f32.mrf.mxu0
    %v4240 = vadd.f32 %v4199, %v4239
    %v4241 = vpop.f32.mrf.mxu0
    %v4242 = vpop.f32.mrf.mxu0
    %4243 = vdwg.mxu0
    %v4244 = vrot.slane %v4156, 4
    %v4245 = vadd.f32 %v4156, %v4244
    %v4246 = vrot.slane %v4245, 2
    %v4247 = vadd.f32 %v4245, %v4246
    %v4248 = vrot.slane %v4247, 1
    %v4249 = vadd.f32 %v4247, %v4248
    %v4250 = vrot.slane %v4158, 4
    %v4251 = vadd.f32 %v4158, %v4250
    %v4252 = vrot.slane %v4251, 2
    %v4253 = vadd.f32 %v4251, %v4252
    %v4254 = vrot.slane %v4253, 1
    %v4255 = vadd.f32 %v4253, %v4254
    %v4256 = vrot.slane %v4238, 4
    %v4257 = vadd.f32 %v4238, %v4256
    %v4258 = vrot.slane %v4257, 2
    %v4259 = vadd.f32 %v4257, %v4258
    %v4260 = vrot.slane %v4259, 1
    %v4261 = vadd.f32 %v4259, %v4260
    %v4262 = vrot.slane %v4240, 4
    %v4263 = vadd.f32 %v4240, %v4262
    %v4264 = vrot.slane %v4263, 2
    %v4265 = vadd.f32 %v4263, %v4264
    %v4266 = vrot.slane %v4265, 1
    %v4267 = vadd.f32 %v4265, %v4266
    %v4268 = vmul.f32 %v4156, %v4156
    %v4269 = vmul.f32 %v4158, %v4158
    %v4270 = vmul.f32 %v4238, %v4238
    %v4271 = vmul.f32 %v4240, %v4240
    %v4272 = vrot.slane %v4268, 4
    %v4273 = vadd.f32 %v4268, %v4272
    %v4274 = vrot.slane %v4273, 2
    %v4275 = vadd.f32 %v4273, %v4274
    %v4276 = vrot.slane %v4275, 1
    %v4277 = vadd.f32 %v4275, %v4276
    %v4278 = vrot.slane %v4269, 4
    %v4279 = vadd.f32 %v4269, %v4278
    %v4280 = vrot.slane %v4279, 2
    %v4281 = vadd.f32 %v4279, %v4280
    %v4282 = vrot.slane %v4281, 1
    %v4283 = vadd.f32 %v4281, %v4282
    %v4284 = vrot.slane %v4270, 4
    %v4285 = vadd.f32 %v4270, %v4284
    %v4286 = vrot.slane %v4285, 2
    %v4287 = vadd.f32 %v4285, %v4286
    %v4288 = vrot.slane %v4287, 1
    %v4289 = vadd.f32 %v4287, %v4288
    %v4290 = vrot.slane %v4271, 4
    %v4291 = vadd.f32 %v4271, %v4290
    %v4292 = vrot.slane %v4291, 2
    %v4293 = vadd.f32 %v4291, %v4292
    %v4294 = vrot.slane %v4293, 1
    %v4295 = vadd.f32 %v4293, %v4294
    %v4296 = vmul.f32 %v4249, 0.125
    %v4297 = vmul.f32 %v4255, 0.125
    %v4298 = vmul.f32 %v4261, 0.125
    %v4299 = vmul.f32 %v4267, 0.125
    %v4300 = vmul.f32 %v4277, 0.125
    %v4301 = vmul.f32 %v4283, 0.125
    %v4302 = vmul.f32 %v4289, 0.125
    %v4303 = vmul.f32 %v4295, 0.125
    %v4304 = vmul.f32 %v4296, %v4296
    %v4305 = vmul.f32 %v4297, %v4297
    %v4306 = vmul.f32 %v4298, %v4298
    %v4307 = vmul.f32 %v4299, %v4299
    %v4308 = vsub.f32 %v4300, %v4304
    %v4309 = vsub.f32 %v4301, %v4305
    %v4310 = vsub.f32 %v4302, %v4306
    %v4311 = vsub.f32 %v4303, %v4307
    %s4312 = scalar_lea.vmem [#allocation6], 24
    %v4313 = vld [vmem:[%s4312] ss:$2 sm:$0xf]
    %s4314 = scalar_lea.vmem %s4312, 1 [#allocation6]
    %v4315 = vld [vmem:[%s4314] ss:$2 sm:$0xf]
    %v4316 = vsub.f32 %v4156, %v4296
    %v4317 = vsub.f32 %v4158, %v4297
    %v4318 = vsub.f32 %v4238, %v4298
    %v4319 = vsub.f32 %v4240, %v4299
    %v4320 = vadd.f32 %v4308, 1e-05
    %v4321 = vadd.f32 %v4309, 1e-05
    %v4322 = vadd.f32 %v4310, 1e-05
    %v4323 = vadd.f32 %v4311, 1e-05
    %v4324 = vrsqrt.pop %v4320
    %v4325 = vrsqrt.pop %v4321
    %v4326 = vrsqrt.pop %v4322
    %v4327 = vrsqrt.pop %v4323
    %v4328 = vmul.f32 %v4316, %v4324
    %v4329 = vmul.f32 %v4317, %v4325
    %v4330 = vmul.f32 %v4318, %v4326
    %v4331 = vmul.f32 %v4319, %v4327
    %v4333 = vlaneseq
    %v4334 = vshrl.u32 %v4333, 7
    %v4335 = vsub.s32 0, %v4334
    %v4336 = vrot.slane %v4313, %v4335
    %v4337 = vlaneseq
    %v4338 = vshrl.u32 %v4337, 7
    %v4339 = vsub.s32 1, %v4338
    %v4340 = vrot.slane %v4313, %v4339
    %v4341 = vlaneseq
    %v4342 = vshrl.u32 %v4341, 7
    %v4343 = vsub.s32 2, %v4342
    %v4344 = vrot.slane %v4313, %v4343
    %v4345 = vlaneseq
    %v4346 = vshrl.u32 %v4345, 7
    %v4347 = vsub.s32 3, %v4346
    %v4348 = vrot.slane %v4313, %v4347
    %v4353 = vmul.f32 %v4328, %v4336
    %v4354 = vmul.f32 %v4329, %v4340
    %v4355 = vmul.f32 %v4330, %v4344
    %v4356 = vmul.f32 %v4331, %v4348
    %v4358 = vlaneseq
    %v4359 = vshrl.u32 %v4358, 7
    %v4360 = vsub.s32 0, %v4359
    %v4361 = vrot.slane %v4315, %v4360
    %v4362 = vlaneseq
    %v4363 = vshrl.u32 %v4362, 7
    %v4364 = vsub.s32 1, %v4363
    %v4365 = vrot.slane %v4315, %v4364
    %v4366 = vlaneseq
    %v4367 = vshrl.u32 %v4366, 7
    %v4368 = vsub.s32 2, %v4367
    %v4369 = vrot.slane %v4315, %v4368
    %v4370 = vlaneseq
    %v4371 = vshrl.u32 %v4370, 7
    %v4372 = vsub.s32 3, %v4371
    %v4373 = vrot.slane %v4315, %v4372
    %v4378 = vadd.f32 %v4353, %v4361
    %v4379 = vadd.f32 %v4354, %v4365
    %v4380 = vadd.f32 %v4355, %v4369
    %v4381 = vadd.f32 %v4356, %v4373
    %v4382 = vmax.f32 %v4378, 0.0
    %v4383 = vmax.f32 %v4379, 0.0
    %v4384 = vmax.f32 %v4380, 0.0
    %v4385 = vmax.f32 %v4381, 0.0
    %v4386 = vpack.c.bf16 %v4382, %v4382
    %v4387 = vpack.c.bf16 %v4383, %v4383
    %v4388 = vpack.c.bf16 %v4384, %v4384
    %v4389 = vpack.c.bf16 %v4385, %v4385
    %v4390 = vld [vmem:[#allocation7] sm:$0xff]
    %v4391 = vunpack.c.l.bf16 %v4386
    %v4392 = vunpack.c.l.bf16 %v4387
    %v4393 = vunpack.c.l.bf16 %v4388
    %v4394 = vunpack.c.l.bf16 %v4389
    %v4396 = vlaneseq
    %v4397 = vshrl.u32 %v4396, 7
    %v4398 = vsub.s32 0, %v4397
    %v4399 = vrot.slane %v4390, %v4398
    %v4400 = vlaneseq
    %v4401 = vshrl.u32 %v4400, 7
    %v4402 = vsub.s32 2, %v4401
    %v4403 = vrot.slane %v4390, %v4402
    %v4404 = vlaneseq
    %v4405 = vshrl.u32 %v4404, 7
    %v4406 = vsub.s32 4, %v4405
    %v4407 = vrot.slane %v4390, %v4406
    %v4408 = vlaneseq
    %v4409 = vshrl.u32 %v4408, 7
    %v4410 = vsub.s32 6, %v4409
    %v4411 = vrot.slane %v4390, %v4410
    %v4416 = vlaneseq
    %v4417 = vshrl.u32 %v4416, 7
    %v4418 = vsub.s32 0, %v4417
    %v4419 = vrot.slane %v4399, %v4418
    %v4420 = vlaneseq
    %v4421 = vshrl.u32 %v4420, 7
    %v4422 = vsub.s32 0, %v4421
    %v4423 = vrot.slane %v4403, %v4422
    %v4424 = vlaneseq
    %v4425 = vshrl.u32 %v4424, 7
    %v4426 = vsub.s32 0, %v4425
    %v4427 = vrot.slane %v4407, %v4426
    %v4428 = vlaneseq
    %v4429 = vshrl.u32 %v4428, 7
    %v4430 = vsub.s32 0, %v4429
    %v4431 = vrot.slane %v4411, %v4430
    %v4432 = vmul.f32 %v4391, %v4419
    %v4433 = vmul.f32 %v4392, %v4423
    %v4434 = vmul.f32 %v4393, %v4427
    %v4435 = vmul.f32 %v4394, %v4431
    %v4436 = vadd.f32 %v4432, %v4433
    %v4437 = vadd.f32 %v4436, %v4434
    %v4438 = vadd.f32 %v4437, %v4435
    %4439 = vadd.xlane.f32.xlu0 %v4438
    %v4440 = vpop.xlane.xlu0 %4439
    %v4441 = vlaneseq
    %v4442 = vshrl.u32 %v4441, 7
    %v4443 = vsub.s32 1, %v4442
    %v4444 = vrot.slane %v4390, %v4443
    %v4445 = vadd.f32 %v4440, %v4444
    %vm4446 = vcmask 7168
    %4447 = vst.msk [vmem:[%s4] sm:$0xff] %vm4446, %v4445
    // Predicated region
    $region34: #{tpu_custom_call.1} parent=1 // pred_check
      _
    $region35: #{tpu_custom_call.1} parent=1 // pred_check_branch
      %4449 = sbr.rel (0) target = $region37
    $region36: #{tpu_custom_call.1} parent=1 // pred_region
      _
    $region37: #{tpu_custom_call.1} parent=1 // pred_fallthru
      _
    // Predicated region
    $region38: #{tpu_custom_call.1} parent=1 // pred_check
      _
    $region39: #{tpu_custom_call.1} parent=1 // pred_check_branch
      %4451 = sbr.rel (0) target = $region41
    $region40: #{tpu_custom_call.1} parent=1 // pred_region
      _
    $region41: #{tpu_custom_call.1} parent=1 // pred_fallthru
      _
    %4452 = vsyncpa [#allocation3], 1
    %4453 = vsyncpa [#allocation5], 1
    %4454 = vsyncpa [#allocation8], 1

</llo_original>
